<compile_context>
chip_gen: v5e
topology: v5e:2x2
jax: 0.10.0
libtpu: 0.0.40
codegen_flags: <defaults>
</compile_context>

<pallas_src>
import functools

import jax
import jax.numpy as jnp
from jax.experimental import pallas as pl
from jax.experimental.pallas import tpu as pltpu


# ---------------------------------------------------------------------------
# Fused kernel: one grid step == B samples, everything stays in VMEM.
# ---------------------------------------------------------------------------
def _vgg_fused_kernel(x_ref, w1m_ref, b1_ref, sel1_ref, w2m_ref, b2_ref,
                      sel2_ref, w1r_ref, b3_ref, w4_ref, b4_ref, w5_ref,
                      b5_ref, out_ref,
                      xim1_ref, a1_ref, xp2_ref, xim2_ref, a2_ref, p2_ref,
                      pflat_ref, *, B, CinP, H, W):
    f32 = jnp.float32
    bf16 = jnp.bfloat16

    C1 = w1m_ref.shape[0]             # conv1 out channels (8)
    C2 = w2m_ref.shape[0]             # conv2 out channels (16)
    Hp1, Wp1 = H + 2, W + 2           # padded conv1 grid (30, 30)
    R1, M1 = Hp1 * Wp1, Wp1 + 1       # flattened rows (900), flat margin (31)
    Ho1, Wo1 = H // 2, W // 2         # after pool1 (14, 14)
    Hp2, Wp2 = Ho1 + 2, Wo1 + 2       # padded conv2 grid (16, 16)
    R2, M2 = Hp2 * Wp2, Wp2 + 1       # 256, 17
    P = (Ho1 // 2) * (Wo1 // 2)       # 49 pooled positions
    RV1 = sel1_ref.shape[0]
    RV2 = sel2_ref.shape[0]

    # Conv2-input margins must be finite (the pool-2 max scans border lanes);
    # they are tiny (C1 x 17) so rewrite them every step -- safe under megacore
    # grid partitioning (no reliance on program_id==0 having run on this core).
    xp2_ref[:, pl.ds(0, M2)] = jnp.zeros((C1, M2), bf16)
    xp2_ref[:, pl.ds(M2 + R2, M2)] = jnp.zeros((C1, M2), bf16)

    for b in range(B):
        # ---- conv1: build (9*CinP, R1) shifted-input matrix, one bf16 matmul ----
        for t in range(9):
            kh, kw = divmod(t, 3)
            d = (kh - 1) * Wp1 + (kw - 1)
            xim1_ref[pl.ds(t * CinP, CinP), :] = x_ref[b, :, pl.ds(M1 + d, R1)]
        a1 = jnp.dot(w1m_ref[...], xim1_ref[...],
                     preferred_element_type=f32)                  # (C1, R1) f32
        a1 = jnp.maximum(a1 + b1_ref[...], 0.0).astype(bf16)
        a1_ref[...] = a1

        # ---- pool1: 4 lane-shifted maxima + selection-as-matmul.
        #      The SEL1 matmul also writes the zero padding for conv2's input. ----
        v1 = jnp.maximum(
            jnp.maximum(a1_ref[:, pl.ds(0, RV1)], a1_ref[:, pl.ds(1, RV1)]),
            jnp.maximum(a1_ref[:, pl.ds(Wp1, RV1)],
                        a1_ref[:, pl.ds(Wp1 + 1, RV1)]))          # (C1, RV1) bf16
        p1 = jnp.dot(v1, sel1_ref[...], preferred_element_type=f32)  # (C1, R2)
        xp2_ref[:, pl.ds(M2, R2)] = p1.astype(bf16)

        # ---- conv2: same single-matmul scheme ----
        for t in range(9):
            kh, kw = divmod(t, 3)
            d = (kh - 1) * Wp2 + (kw - 1)
            xim2_ref[pl.ds(t * C1, C1), :] = xp2_ref[:, pl.ds(M2 + d, R2)]
        a2 = jnp.dot(w2m_ref[...], xim2_ref[...],
                     preferred_element_type=f32)                  # (C2, R2) f32
        a2 = jnp.maximum(a2 + b2_ref[...], 0.0).astype(bf16)
        a2_ref[...] = a2

        # ---- pool2 (AdaptiveAvgPool2d((7,7)) is the identity for 14x14 -> 7x7) ----
        v2 = jnp.maximum(
            jnp.maximum(a2_ref[:, pl.ds(0, RV2)], a2_ref[:, pl.ds(1, RV2)]),
            jnp.maximum(a2_ref[:, pl.ds(Wp2, RV2)],
                        a2_ref[:, pl.ds(Wp2 + 1, RV2)]))          # (C2, RV2) bf16
        p2_ref[...] = jnp.dot(v2, sel2_ref[...],
                              preferred_element_type=f32)         # (C2, 49) f32

        # ---- flatten in PyTorch (c, h, w) order into one lane-dense row ----
        for c in range(C2):
            pflat_ref[pl.ds(b, 1), pl.ds(c * P, P)] = p2_ref[pl.ds(c, 1), :]

    # ---- classifier: 3 batched lane-dense bf16 matmuls (fc1 K = 784) ----
    h = pflat_ref[...].astype(bf16)                               # (B, 784)
    h = jnp.maximum(jnp.dot(h, w1r_ref[...], preferred_element_type=f32)
                    + b3_ref[...], 0.0).astype(bf16)              # (B, 64)
    h = jnp.maximum(jnp.dot(h, w4_ref[...], preferred_element_type=f32)
                    + b4_ref[...], 0.0).astype(bf16)              # (B, 64)
    logits = jnp.dot(h, w5_ref[...], preferred_element_type=f32) + b5_ref[...]
    out_ref[0] = logits.astype(out_ref.dtype)                     # (B, 128)


# ---------------------------------------------------------------------------
# One-time parameter preparation (bf16, pre-packed / pre-permuted weights,
# constant pooling-selection matrices).
# ---------------------------------------------------------------------------
def _prepare_params(p, H=28, W=28, nout_pad=128):
    f32, bf16 = jnp.float32, jnp.bfloat16
    c1w, c2w = p["conv1_w"], p["conv2_w"]           # (Cout, Cin, 3, 3)
    C1, Cin = int(c1w.shape[0]), int(c1w.shape[1])
    C2 = int(c2w.shape[0])
    CinP = Cin if Cin % 2 == 0 else Cin + 1         # even -> aligned bf16 stores

    # conv taps packed as W[cout, t*Cin + cin], t = kh*3 + kw
    w1m = jnp.transpose(c1w.astype(f32), (0, 2, 3, 1)).reshape(C1, 9, Cin)
    w1m = jnp.pad(w1m, ((0, 0), (0, 0), (0, CinP - Cin))) \
             .reshape(C1, 9 * CinP).astype(bf16)
    w2m = jnp.transpose(c2w.astype(f32), (0, 2, 3, 1)) \
             .reshape(C2, 9 * C1).astype(bf16)
    b1 = p["conv1_b"].reshape(C1, 1).astype(f32)
    b2 = p["conv2_b"].reshape(C2, 1).astype(f32)

    Wp1 = W + 2
    Ho1, Wo1 = H // 2, W // 2
    Hp2, Wp2 = Ho1 + 2, Wo1 + 2
    Ho2, Wo2 = Ho1 // 2, Wo1 // 2
    RV1 = (2 * (Ho1 - 1) + 1) * Wp1 + (2 * (Wo1 - 1) + 1) + 1     # 838
    RV2 = (2 * (Ho2 - 1) + 1) * Wp2 + (2 * (Wo2 - 1) + 1) + 1     # 222

    # pool1 selection: anchor r -> zero-padded conv2-input column q
    hh, ww = jnp.meshgrid(jnp.arange(Ho1), jnp.arange(Wo1), indexing="ij")
    r1 = ((2 * hh + 1) * Wp1 + (2 * ww + 1)).reshape(-1)
    q1 = ((hh + 1) * Wp2 + (ww + 1)).reshape(-1)
    sel1 = jnp.zeros((RV1, Hp2 * Wp2), f32).at[r1, q1].set(1.0).astype(bf16)

    # pool2 selection: anchor r -> pooled position k = ho*7 + wo
    hh2, ww2 = jnp.meshgrid(jnp.arange(Ho2), jnp.arange(Wo2), indexing="ij")
    r2 = ((2 * hh2 + 1) * Wp2 + (2 * ww2 + 1)).reshape(-1)
    q2 = (hh2 * Wo2 + ww2).reshape(-1)
    sel2 = jnp.zeros((RV2, Ho2 * Wo2), f32).at[r2, q2].set(1.0).astype(bf16)

    # classifier (flatten order c*49 + h*7 + w matches the in-kernel gather)
    w1r = p["fc1_w"].T.astype(bf16)                 # (784, 64)
    b3 = p["fc1_b"].reshape(1, -1).astype(f32)
    w4 = p["fc2_w"].T.astype(bf16)                  # (64, 64)
    b4 = p["fc2_b"].reshape(1, -1).astype(f32)
    ncls = int(p["fc3_w"].shape[0])
    w5 = jnp.zeros((int(p["fc3_w"].shape[1]), nout_pad), f32)
    w5 = w5.at[:, :ncls].set(p["fc3_w"].T.astype(f32)).astype(bf16)
    b5 = jnp.zeros((1, nout_pad), f32).at[0, :ncls].set(p["fc3_b"].astype(f32))

    return dict(w1m=w1m, b1=b1, sel1=sel1, w2m=w2m, b2=b2, sel2=sel2,
                w1r=w1r, b3=b3, w4=w4, b4=b4, w5=w5, b5=b5,
                cinp=CinP, ncls=ncls, nout=nout_pad)


def _pick_samples_per_step(n):
    # Batch samples per grid step while keeping >= 2 grid steps (v7x megacore).
    for b in (8, 4, 2):
        if n % b == 0 and n // b >= 2:
            return b
    return 1


def vgg_forward(prepped, x_nchw):
    N, Cin, H, W = x_nchw.shape
    # TODO(synk): general AdaptiveAvgPool2d((7,7)) (non-identity windows) is not
    # implemented; 28x28 -> 14x14 -> 7x7 after the two 2x2 max-pools makes it a no-op.
    assert H == 28 and W == 28, "this synthetic config requires 28x28 inputs"
    CinP, nout, ncls = prepped["cinp"], prepped["nout"], prepped["ncls"]

    Hp1, Wp1 = H + 2, W + 2
    R1, M1 = Hp1 * Wp1, Wp1 + 1
    Ho1, Wo1 = H // 2, W // 2
    Hp2, Wp2 = Ho1 + 2, Wo1 + 2
    R2, M2 = Hp2 * Wp2, Wp2 + 1
    Ho2, Wo2 = Ho1 // 2, Wo1 // 2
    C1 = prepped["w1m"].shape[0]
    C2 = prepped["w2m"].shape[0]

    B = _pick_samples_per_step(N)
    assert N % B == 0

    # bf16 input prep: pad channels to CinP, zero-pad spatially, flatten rows,
    # add the flat margins used by the shifted tap slices.
    x = x_nchw.astype(jnp.bfloat16)
    if CinP != Cin:
        x = jnp.pad(x, ((0, 0), (0, CinP - Cin), (0, 0), (0, 0)))
    xp = jnp.pad(x, ((0, 0), (0, 0), (1, 1), (1, 1)))
    xflat = jnp.pad(xp.reshape(N, CinP, R1), ((0, 0), (0, 0), (M1, M1)))

    kernel = functools.partial(_vgg_fused_kernel, B=B, CinP=CinP, H=H, W=W)

    def full2d(shape):
        return pl.BlockSpec(shape, lambda i: (0, 0))

    out = pl.pallas_call(
        kernel,
        out_shape=jax.ShapeDtypeStruct((N // B, B, nout), jnp.bfloat16),
        grid=(N // B,),
        in_specs=[
            pl.BlockSpec((B, CinP, R1 + 2 * M1), lambda i: (i, 0, 0)),
            full2d(prepped["w1m"].shape),
            full2d(prepped["b1"].shape),
            full2d(prepped["sel1"].shape),
            full2d(prepped["w2m"].shape),
            full2d(prepped["b2"].shape),
            full2d(prepped["sel2"].shape),
            full2d(prepped["w1r"].shape),
            full2d(prepped["b3"].shape),
            full2d(prepped["w4"].shape),
            full2d(prepped["b4"].shape),
            full2d(prepped["w5"].shape),
            full2d(prepped["b5"].shape),
        ],
        out_specs=pl.BlockSpec((1, B, nout), lambda i: (i, 0, 0)),
        scratch_shapes=[
            pltpu.VMEM((9 * CinP, R1), jnp.bfloat16),      # conv1 shifted-input matrix
            pltpu.VMEM((C1, R1), jnp.bfloat16),            # conv1 activations
            pltpu.VMEM((C1, R2 + 2 * M2), jnp.bfloat16),   # padded conv2 input
            pltpu.VMEM((9 * C1, R2), jnp.bfloat16),        # conv2 shifted-input matrix
            pltpu.VMEM((C2, R2), jnp.bfloat16),            # conv2 activations
            pltpu.VMEM((C2, Ho2 * Wo2), jnp.float32),      # pooled (C2, 49)
            pltpu.VMEM((B, C2 * Ho2 * Wo2), jnp.float32),  # flattened fc1 input
        ],
        compiler_params=pltpu.CompilerParams(
            dimension_semantics=("parallel",)),
    )(xflat, prepped["w1m"], prepped["b1"], prepped["sel1"], prepped["w2m"],
      prepped["b2"], prepped["sel2"], prepped["w1r"], prepped["b3"],
      prepped["w4"], prepped["b4"], prepped["w5"], prepped["b5"])
    return out.reshape(N, nout)[:, :ncls]


class TtVGGPallas:
    """Mirrors TtVGG.forward: features -> avgpool(7,7) -> flatten -> classifier."""

    def __init__(self, params):
        self._prepped = _prepare_params(params)
        prepped = self._prepped
        self._fwd = jax.jit(lambda x: vgg_forward(prepped, x))

    def __call__(self, x_nchw):
        return self._fwd(x_nchw)


# ---------------------------------------------------------------------------
# Pure-JAX reference (same math, no Pallas) for a correctness spot check.
# ---------------------------------------------------------------------------
def _ref_mm(x, w, b, relu):
    acc = jnp.dot(x.astype(jnp.float32), w.astype(jnp.float32)) + b.astype(jnp.float32)
    if relu:
        acc = jnp.maximum(acc, 0.0)
    return acc.astype(x.dtype)


def reference_forward(p, x_nchw):
    x = jnp.transpose(x_nchw, (0, 2, 3, 1))

    def conv(x, w, b):
        N, H, W, C = x.shape
        Cout = w.shape[0]
        xp = jnp.pad(x, ((0, 0), (1, 1), (1, 1), (0, 0)))
        patches = jnp.concatenate(
            [xp[:, kh:kh + H, kw:kw + W, :] for kh in range(3) for kw in range(3)],
            axis=-1).reshape(N * H * W, 9 * C)
        wmat = jnp.transpose(w, (2, 3, 1, 0)).reshape(9 * C, Cout)
        return _ref_mm(patches, wmat, b.reshape(1, Cout), True).reshape(N, H, W, Cout)

    def mp(x):
        N, H, W, C = x.shape
        return x.reshape(N, H // 2, 2, W // 2, 2, C).max(axis=(2, 4))

    x = mp(conv(x, p["conv1_w"], p["conv1_b"]))
    x = mp(conv(x, p["conv2_w"], p["conv2_b"]))
    N, H, W, C = x.shape
    x = x.reshape(N, 7, H // 7, 7, W // 7, C).astype(jnp.float32) \
         .mean(axis=(2, 4)).astype(x.dtype)
    flat = jnp.transpose(x, (0, 3, 1, 2)).reshape(N, C * 49)
    flat = _ref_mm(flat, p["fc1_w"].T, p["fc1_b"].reshape(1, -1), True)
    flat = _ref_mm(flat, p["fc2_w"].T, p["fc2_b"].reshape(1, -1), True)
    flat = _ref_mm(flat, p["fc3_w"].T, p["fc3_b"].reshape(1, -1), False)
    return flat


# ---------------------------------------------------------------------------
def make_params(dtype=jnp.bfloat16):
    key = jax.random.PRNGKey(0)
    ks = jax.random.split(key, 10)

    def rnd(k, shape, scale):
        return (scale * jax.random.normal(k, shape, dtype=jnp.float32)).astype(dtype)

    return {
        # PyTorch Conv2d weight layout: (Cout, Cin, kH, kW)
        "conv1_w": rnd(ks[0], (8, 3, 3, 3), 0.2),
        "conv1_b": rnd(ks[1], (8,), 0.1),
        "conv2_w": rnd(ks[2], (16, 8, 3, 3), 0.1),
        "conv2_b": rnd(ks[3], (16,), 0.1),
        # PyTorch Linear weight layout: (out_features, in_features)
        "fc1_w": rnd(ks[4], (64, 16 * 7 * 7), 0.05),
        "fc1_b": rnd(ks[5], (64,), 0.05),
        "fc2_w": rnd(ks[6], (64, 64), 0.1),
        "fc2_b": rnd(ks[7], (64,), 0.05),
        "fc3_w": rnd(ks[8], (10, 64), 0.1),
        "fc3_b": rnd(ks[9], (10,), 0.05),
    }


if __name__ == "__main__":
    params = make_params()
    model = TtVGGPallas(params)

    # input: NCHW, small VGG-ish image (2, 3, 28, 28) -> 7x7 spatial after two pools
    x = jax.random.normal(jax.random.PRNGKey(0), (2, 3, 28, 28),
                          dtype=jnp.float32).astype(jnp.bfloat16)

    out = jax.block_until_ready(model(x))
    assert out.shape == (2, 10), out.shape

    ref = jax.block_until_ready(reference_forward(params, x))
    assert jnp.allclose(out.astype(jnp.float32), ref.astype(jnp.float32),
                        atol=2e-2, rtol=2e-2), "mismatch vs reference"

    print("KERNEL_OK")
</pallas_src>

<mosaic_0001>
module attributes {stable_mosaic.version = 11 : i64} {
  func.func @_vgg_fused_kernel(%arg0: i32, %arg1: memref<1x4x962xbf16, #tpu.memory_space<vmem>>, %arg2: memref<8x36xbf16, #tpu.memory_space<vmem>>, %arg3: memref<8x1xf32, #tpu.memory_space<vmem>>, %arg4: memref<838x256xbf16, #tpu.memory_space<vmem>>, %arg5: memref<16x72xbf16, #tpu.memory_space<vmem>>, %arg6: memref<16x1xf32, #tpu.memory_space<vmem>>, %arg7: memref<222x49xbf16, #tpu.memory_space<vmem>>, %arg8: memref<784x64xbf16, #tpu.memory_space<vmem>>, %arg9: memref<1x64xf32, #tpu.memory_space<vmem>>, %arg10: memref<64x64xbf16, #tpu.memory_space<vmem>>, %arg11: memref<1x64xf32, #tpu.memory_space<vmem>>, %arg12: memref<64x128xbf16, #tpu.memory_space<vmem>>, %arg13: memref<1x128xf32, #tpu.memory_space<vmem>>, %arg14: memref<1x1x128xbf16, #tpu.memory_space<vmem>>, %arg15: memref<36x900xbf16, #tpu.memory_space<vmem>>, %arg16: memref<8x900xbf16, #tpu.memory_space<vmem>>, %arg17: memref<8x290xbf16, #tpu.memory_space<vmem>>, %arg18: memref<72x256xbf16, #tpu.memory_space<vmem>>, %arg19: memref<16x256xbf16, #tpu.memory_space<vmem>>, %arg20: memref<16x49xf32, #tpu.memory_space<vmem>>, %arg21: memref<1x784xf32, #tpu.memory_space<vmem>>) attributes {dimension_semantics = [#tpu.dimension_semantics<parallel>], iteration_bounds = array<i64: 2>, scalar_prefetch = 0 : i64, scratch_operands = 7 : i64, tpu.core_type = #tpu.core_type<tc>, window_params = [{transform_indices = @transform_0, window_bounds = array<i64: 1, 4, 962>}, {pipeline_mode = #tpu.pipeline_mode<synchronous>, transform_indices = @transform_1, window_bounds = array<i64: 8, 36>}, {pipeline_mode = #tpu.pipeline_mode<synchronous>, transform_indices = @transform_2, window_bounds = array<i64: 8, 1>}, {pipeline_mode = #tpu.pipeline_mode<synchronous>, transform_indices = @transform_3, window_bounds = array<i64: 838, 256>}, {pipeline_mode = #tpu.pipeline_mode<synchronous>, transform_indices = @transform_4, window_bounds = array<i64: 16, 72>}, {pipeline_mode = #tpu.pipeline_mode<synchronous>, transform_indices = @transform_5, window_bounds = array<i64: 16, 1>}, {pipeline_mode = #tpu.pipeline_mode<synchronous>, transform_indices = @transform_6, window_bounds = array<i64: 222, 49>}, {pipeline_mode = #tpu.pipeline_mode<synchronous>, transform_indices = @transform_7, window_bounds = array<i64: 784, 64>}, {pipeline_mode = #tpu.pipeline_mode<synchronous>, transform_indices = @transform_8, window_bounds = array<i64: 1, 64>}, {pipeline_mode = #tpu.pipeline_mode<synchronous>, transform_indices = @transform_9, window_bounds = array<i64: 64, 64>}, {pipeline_mode = #tpu.pipeline_mode<synchronous>, transform_indices = @transform_10, window_bounds = array<i64: 1, 64>}, {pipeline_mode = #tpu.pipeline_mode<synchronous>, transform_indices = @transform_11, window_bounds = array<i64: 64, 128>}, {pipeline_mode = #tpu.pipeline_mode<synchronous>, transform_indices = @transform_12, window_bounds = array<i64: 1, 128>}, {transform_indices = @transform_13, window_bounds = array<i64: 1, 1, 128>}]} {
    %cst = arith.constant 0.000000e+00 : bf16
    %0 = vector.broadcast %cst : bf16 to vector<8x17xbf16>
    %c0 = arith.constant 0 : index
    %c0_0 = arith.constant 0 : index
    %1 = vector.load %arg17[%c0, %c0_0] : memref<8x290xbf16, #tpu.memory_space<vmem>>, vector<8x17xbf16>
    tpu.vector_store %arg17[%c0, %c0_0], %0 {strides = array<i32>} : memref<8x290xbf16, #tpu.memory_space<vmem>>, vector<8x17xbf16>,
    %cst_1 = arith.constant 0.000000e+00 : bf16
    %2 = vector.broadcast %cst_1 : bf16 to vector<8x17xbf16>
    %c0_2 = arith.constant 0 : index
    %c273 = arith.constant 273 : index
    %3 = vector.load %arg17[%c0_2, %c273] : memref<8x290xbf16, #tpu.memory_space<vmem>>, vector<8x17xbf16>
    tpu.vector_store %arg17[%c0_2, %c273], %2 {strides = array<i32>} : memref<8x290xbf16, #tpu.memory_space<vmem>>, vector<8x17xbf16>,
    %c0_3 = arith.constant 0 : index
    %c0_4 = arith.constant 0 : index
    %c0_5 = arith.constant 0 : index
    %4 = vector.load %arg1[%c0_3, %c0_4, %c0_5] : memref<1x4x962xbf16, #tpu.memory_space<vmem>>, vector<1x4x900xbf16>
    %5 = vector.shape_cast %4 : vector<1x4x900xbf16> to vector<4x900xbf16>
    %c0_6 = arith.constant 0 : index
    %c0_7 = arith.constant 0 : index
    %6 = vector.load %arg15[%c0_6, %c0_7] : memref<36x900xbf16, #tpu.memory_space<vmem>>, vector<4x900xbf16>
    tpu.vector_store %arg15[%c0_6, %c0_7], %5 {strides = array<i32>} : memref<36x900xbf16, #tpu.memory_space<vmem>>, vector<4x900xbf16>,
    %c0_8 = arith.constant 0 : index
    %c0_9 = arith.constant 0 : index
    %c1 = arith.constant 1 : index
    %7 = vector.load %arg1[%c0_8, %c0_9, %c1] : memref<1x4x962xbf16, #tpu.memory_space<vmem>>, vector<1x4x900xbf16>
    %8 = vector.shape_cast %7 : vector<1x4x900xbf16> to vector<4x900xbf16>
    %c4 = arith.constant 4 : index
    %c0_10 = arith.constant 0 : index
    %9 = vector.load %arg15[%c4, %c0_10] : memref<36x900xbf16, #tpu.memory_space<vmem>>, vector<4x900xbf16>
    tpu.vector_store %arg15[%c4, %c0_10], %8 {strides = array<i32>} : memref<36x900xbf16, #tpu.memory_space<vmem>>, vector<4x900xbf16>,
    %c0_11 = arith.constant 0 : index
    %c0_12 = arith.constant 0 : index
    %c2 = arith.constant 2 : index
    %10 = vector.load %arg1[%c0_11, %c0_12, %c2] : memref<1x4x962xbf16, #tpu.memory_space<vmem>>, vector<1x4x900xbf16>
    %11 = vector.shape_cast %10 : vector<1x4x900xbf16> to vector<4x900xbf16>
    %c8 = arith.constant 8 : index
    %c0_13 = arith.constant 0 : index
    %12 = vector.load %arg15[%c8, %c0_13] : memref<36x900xbf16, #tpu.memory_space<vmem>>, vector<4x900xbf16>
    tpu.vector_store %arg15[%c8, %c0_13], %11 {strides = array<i32>} : memref<36x900xbf16, #tpu.memory_space<vmem>>, vector<4x900xbf16>,
    %c0_14 = arith.constant 0 : index
    %c0_15 = arith.constant 0 : index
    %c30 = arith.constant 30 : index
    %13 = vector.load %arg1[%c0_14, %c0_15, %c30] : memref<1x4x962xbf16, #tpu.memory_space<vmem>>, vector<1x4x900xbf16>
    %14 = vector.shape_cast %13 : vector<1x4x900xbf16> to vector<4x900xbf16>
    %c12 = arith.constant 12 : index
    %c0_16 = arith.constant 0 : index
    %15 = vector.load %arg15[%c12, %c0_16] : memref<36x900xbf16, #tpu.memory_space<vmem>>, vector<4x900xbf16>
    tpu.vector_store %arg15[%c12, %c0_16], %14 {strides = array<i32>} : memref<36x900xbf16, #tpu.memory_space<vmem>>, vector<4x900xbf16>,
    %c0_17 = arith.constant 0 : index
    %c0_18 = arith.constant 0 : index
    %c31 = arith.constant 31 : index
    %16 = vector.load %arg1[%c0_17, %c0_18, %c31] : memref<1x4x962xbf16, #tpu.memory_space<vmem>>, vector<1x4x900xbf16>
    %17 = vector.shape_cast %16 : vector<1x4x900xbf16> to vector<4x900xbf16>
    %c16 = arith.constant 16 : index
    %c0_19 = arith.constant 0 : index
    %18 = vector.load %arg15[%c16, %c0_19] : memref<36x900xbf16, #tpu.memory_space<vmem>>, vector<4x900xbf16>
    tpu.vector_store %arg15[%c16, %c0_19], %17 {strides = array<i32>} : memref<36x900xbf16, #tpu.memory_space<vmem>>, vector<4x900xbf16>,
    %c0_20 = arith.constant 0 : index
    %c0_21 = arith.constant 0 : index
    %c32 = arith.constant 32 : index
    %19 = vector.load %arg1[%c0_20, %c0_21, %c32] : memref<1x4x962xbf16, #tpu.memory_space<vmem>>, vector<1x4x900xbf16>
    %20 = vector.shape_cast %19 : vector<1x4x900xbf16> to vector<4x900xbf16>
    %c20 = arith.constant 20 : index
    %c0_22 = arith.constant 0 : index
    %21 = vector.load %arg15[%c20, %c0_22] : memref<36x900xbf16, #tpu.memory_space<vmem>>, vector<4x900xbf16>
    tpu.vector_store %arg15[%c20, %c0_22], %20 {strides = array<i32>} : memref<36x900xbf16, #tpu.memory_space<vmem>>, vector<4x900xbf16>,
    %c0_23 = arith.constant 0 : index
    %c0_24 = arith.constant 0 : index
    %c60 = arith.constant 60 : index
    %22 = vector.load %arg1[%c0_23, %c0_24, %c60] : memref<1x4x962xbf16, #tpu.memory_space<vmem>>, vector<1x4x900xbf16>
    %23 = vector.shape_cast %22 : vector<1x4x900xbf16> to vector<4x900xbf16>
    %c24 = arith.constant 24 : index
    %c0_25 = arith.constant 0 : index
    %24 = vector.load %arg15[%c24, %c0_25] : memref<36x900xbf16, #tpu.memory_space<vmem>>, vector<4x900xbf16>
    tpu.vector_store %arg15[%c24, %c0_25], %23 {strides = array<i32>} : memref<36x900xbf16, #tpu.memory_space<vmem>>, vector<4x900xbf16>,
    %c0_26 = arith.constant 0 : index
    %c0_27 = arith.constant 0 : index
    %c61 = arith.constant 61 : index
    %25 = vector.load %arg1[%c0_26, %c0_27, %c61] : memref<1x4x962xbf16, #tpu.memory_space<vmem>>, vector<1x4x900xbf16>
    %26 = vector.shape_cast %25 : vector<1x4x900xbf16> to vector<4x900xbf16>
    %c28 = arith.constant 28 : index
    %c0_28 = arith.constant 0 : index
    %27 = vector.load %arg15[%c28, %c0_28] : memref<36x900xbf16, #tpu.memory_space<vmem>>, vector<4x900xbf16>
    tpu.vector_store %arg15[%c28, %c0_28], %26 {strides = array<i32>} : memref<36x900xbf16, #tpu.memory_space<vmem>>, vector<4x900xbf16>,
    %c0_29 = arith.constant 0 : index
    %c0_30 = arith.constant 0 : index
    %c62 = arith.constant 62 : index
    %28 = vector.load %arg1[%c0_29, %c0_30, %c62] : memref<1x4x962xbf16, #tpu.memory_space<vmem>>, vector<1x4x900xbf16>
    %29 = vector.shape_cast %28 : vector<1x4x900xbf16> to vector<4x900xbf16>
    %c32_31 = arith.constant 32 : index
    %c0_32 = arith.constant 0 : index
    %30 = vector.load %arg15[%c32_31, %c0_32] : memref<36x900xbf16, #tpu.memory_space<vmem>>, vector<4x900xbf16>
    tpu.vector_store %arg15[%c32_31, %c0_32], %29 {strides = array<i32>} : memref<36x900xbf16, #tpu.memory_space<vmem>>, vector<4x900xbf16>,
    %c0_33 = arith.constant 0 : index
    %c0_34 = arith.constant 0 : index
    %31 = vector.load %arg2[%c0_33, %c0_34] : memref<8x36xbf16, #tpu.memory_space<vmem>>, vector<8x36xbf16>
    %c0_35 = arith.constant 0 : index
    %c0_36 = arith.constant 0 : index
    %32 = vector.load %arg15[%c0_35, %c0_36] : memref<36x900xbf16, #tpu.memory_space<vmem>>, vector<36x900xbf16>
    %cst_37 = arith.constant dense<0.000000e+00> : vector<8x900xf32>
    %33 = tpu.matmul %31, %32, %cst_37 {dimension_numbers = #tpu.dot_dimension_numbers<[1], [0], [0], [1], [0, 0, 1, 1], [], []>} : vector<8x36xbf16>, vector<36x900xbf16>, vector<8x900xf32> -> vector<8x900xf32>
    %c0_38 = arith.constant 0 : index
    %c0_39 = arith.constant 0 : index
    %34 = vector.load %arg3[%c0_38, %c0_39] : memref<8x1xf32, #tpu.memory_space<vmem>>, vector<8x1xf32>
    %35 = vector.broadcast %34 : vector<8x1xf32> to vector<8x900xf32>
    %36 = arith.addf %33, %35 : vector<8x900xf32>
    %cst_40 = arith.constant 0.000000e+00 : f32
    %37 = vector.broadcast %cst_40 : f32 to vector<8x900xf32>
    %38 = arith.maximumf %36, %37 : vector<8x900xf32>
    %39 = arith.truncf %38 : vector<8x900xf32> to vector<8x900xbf16>
    %c0_41 = arith.constant 0 : index
    %c0_42 = arith.constant 0 : index
    %40 = vector.load %arg16[%c0_41, %c0_42] : memref<8x900xbf16, #tpu.memory_space<vmem>>, vector<8x900xbf16>
    tpu.vector_store %arg16[%c0_41, %c0_42], %39 {strides = array<i32>} : memref<8x900xbf16, #tpu.memory_space<vmem>>, vector<8x900xbf16>,
    %c0_43 = arith.constant 0 : index
    %c0_44 = arith.constant 0 : index
    %41 = vector.load %arg16[%c0_43, %c0_44] : memref<8x900xbf16, #tpu.memory_space<vmem>>, vector<8x838xbf16>
    %c0_45 = arith.constant 0 : index
    %c1_46 = arith.constant 1 : index
    %42 = vector.load %arg16[%c0_45, %c1_46] : memref<8x900xbf16, #tpu.memory_space<vmem>>, vector<8x838xbf16>
    %43 = arith.maximumf %41, %42 : vector<8x838xbf16>
    %c0_47 = arith.constant 0 : index
    %c30_48 = arith.constant 30 : index
    %44 = vector.load %arg16[%c0_47, %c30_48] : memref<8x900xbf16, #tpu.memory_space<vmem>>, vector<8x838xbf16>
    %c0_49 = arith.constant 0 : index
    %c31_50 = arith.constant 31 : index
    %45 = vector.load %arg16[%c0_49, %c31_50] : memref<8x900xbf16, #tpu.memory_space<vmem>>, vector<8x838xbf16>
    %46 = arith.maximumf %44, %45 : vector<8x838xbf16>
    %47 = arith.maximumf %43, %46 : vector<8x838xbf16>
    %c0_51 = arith.constant 0 : index
    %c0_52 = arith.constant 0 : index
    %48 = vector.load %arg4[%c0_51, %c0_52] : memref<838x256xbf16, #tpu.memory_space<vmem>>, vector<838x256xbf16>
    %cst_53 = arith.constant dense<0.000000e+00> : vector<8x256xf32>
    %49 = tpu.matmul %47, %48, %cst_53 {dimension_numbers = #tpu.dot_dimension_numbers<[1], [0], [0], [1], [0, 0, 1, 1], [], []>} : vector<8x838xbf16>, vector<838x256xbf16>, vector<8x256xf32> -> vector<8x256xf32>
    %50 = arith.truncf %49 : vector<8x256xf32> to vector<8x256xbf16>
    %c0_54 = arith.constant 0 : index
    %c17 = arith.constant 17 : index
    %51 = vector.load %arg17[%c0_54, %c17] : memref<8x290xbf16, #tpu.memory_space<vmem>>, vector<8x256xbf16>
    tpu.vector_store %arg17[%c0_54, %c17], %50 {strides = array<i32>} : memref<8x290xbf16, #tpu.memory_space<vmem>>, vector<8x256xbf16>,
    %c0_55 = arith.constant 0 : index
    %c0_56 = arith.constant 0 : index
    %52 = vector.load %arg17[%c0_55, %c0_56] : memref<8x290xbf16, #tpu.memory_space<vmem>>, vector<8x256xbf16>
    %c0_57 = arith.constant 0 : index
    %c0_58 = arith.constant 0 : index
    %53 = vector.load %arg18[%c0_57, %c0_58] : memref<72x256xbf16, #tpu.memory_space<vmem>>, vector<8x256xbf16>
    tpu.vector_store %arg18[%c0_57, %c0_58], %52 {strides = array<i32>} : memref<72x256xbf16, #tpu.memory_space<vmem>>, vector<8x256xbf16>,
    %c0_59 = arith.constant 0 : index
    %c1_60 = arith.constant 1 : index
    %54 = vector.load %arg17[%c0_59, %c1_60] : memref<8x290xbf16, #tpu.memory_space<vmem>>, vector<8x256xbf16>
    %c8_61 = arith.constant 8 : index
    %c0_62 = arith.constant 0 : index
    %55 = vector.load %arg18[%c8_61, %c0_62] : memref<72x256xbf16, #tpu.memory_space<vmem>>, vector<8x256xbf16>
    tpu.vector_store %arg18[%c8_61, %c0_62], %54 {strides = array<i32>} : memref<72x256xbf16, #tpu.memory_space<vmem>>, vector<8x256xbf16>,
    %c0_63 = arith.constant 0 : index
    %c2_64 = arith.constant 2 : index
    %56 = vector.load %arg17[%c0_63, %c2_64] : memref<8x290xbf16, #tpu.memory_space<vmem>>, vector<8x256xbf16>
    %c16_65 = arith.constant 16 : index
    %c0_66 = arith.constant 0 : index
    %57 = vector.load %arg18[%c16_65, %c0_66] : memref<72x256xbf16, #tpu.memory_space<vmem>>, vector<8x256xbf16>
    tpu.vector_store %arg18[%c16_65, %c0_66], %56 {strides = array<i32>} : memref<72x256xbf16, #tpu.memory_space<vmem>>, vector<8x256xbf16>,
    %c0_67 = arith.constant 0 : index
    %c16_68 = arith.constant 16 : index
    %58 = vector.load %arg17[%c0_67, %c16_68] : memref<8x290xbf16, #tpu.memory_space<vmem>>, vector<8x256xbf16>
    %c24_69 = arith.constant 24 : index
    %c0_70 = arith.constant 0 : index
    %59 = vector.load %arg18[%c24_69, %c0_70] : memref<72x256xbf16, #tpu.memory_space<vmem>>, vector<8x256xbf16>
    tpu.vector_store %arg18[%c24_69, %c0_70], %58 {strides = array<i32>} : memref<72x256xbf16, #tpu.memory_space<vmem>>, vector<8x256xbf16>,
    %c0_71 = arith.constant 0 : index
    %c17_72 = arith.constant 17 : index
    %60 = vector.load %arg17[%c0_71, %c17_72] : memref<8x290xbf16, #tpu.memory_space<vmem>>, vector<8x256xbf16>
    %c32_73 = arith.constant 32 : index
    %c0_74 = arith.constant 0 : index
    %61 = vector.load %arg18[%c32_73, %c0_74] : memref<72x256xbf16, #tpu.memory_space<vmem>>, vector<8x256xbf16>
    tpu.vector_store %arg18[%c32_73, %c0_74], %60 {strides = array<i32>} : memref<72x256xbf16, #tpu.memory_space<vmem>>, vector<8x256xbf16>,
    %c0_75 = arith.constant 0 : index
    %c18 = arith.constant 18 : index
    %62 = vector.load %arg17[%c0_75, %c18] : memref<8x290xbf16, #tpu.memory_space<vmem>>, vector<8x256xbf16>
    %c40 = arith.constant 40 : index
    %c0_76 = arith.constant 0 : index
    %63 = vector.load %arg18[%c40, %c0_76] : memref<72x256xbf16, #tpu.memory_space<vmem>>, vector<8x256xbf16>
    tpu.vector_store %arg18[%c40, %c0_76], %62 {strides = array<i32>} : memref<72x256xbf16, #tpu.memory_space<vmem>>, vector<8x256xbf16>,
    %c0_77 = arith.constant 0 : index
    %c32_78 = arith.constant 32 : index
    %64 = vector.load %arg17[%c0_77, %c32_78] : memref<8x290xbf16, #tpu.memory_space<vmem>>, vector<8x256xbf16>
    %c48 = arith.constant 48 : index
    %c0_79 = arith.constant 0 : index
    %65 = vector.load %arg18[%c48, %c0_79] : memref<72x256xbf16, #tpu.memory_space<vmem>>, vector<8x256xbf16>
    tpu.vector_store %arg18[%c48, %c0_79], %64 {strides = array<i32>} : memref<72x256xbf16, #tpu.memory_space<vmem>>, vector<8x256xbf16>,
    %c0_80 = arith.constant 0 : index
    %c33 = arith.constant 33 : index
    %66 = vector.load %arg17[%c0_80, %c33] : memref<8x290xbf16, #tpu.memory_space<vmem>>, vector<8x256xbf16>
    %c56 = arith.constant 56 : index
    %c0_81 = arith.constant 0 : index
    %67 = vector.load %arg18[%c56, %c0_81] : memref<72x256xbf16, #tpu.memory_space<vmem>>, vector<8x256xbf16>
    tpu.vector_store %arg18[%c56, %c0_81], %66 {strides = array<i32>} : memref<72x256xbf16, #tpu.memory_space<vmem>>, vector<8x256xbf16>,
    %c0_82 = arith.constant 0 : index
    %c34 = arith.constant 34 : index
    %68 = vector.load %arg17[%c0_82, %c34] : memref<8x290xbf16, #tpu.memory_space<vmem>>, vector<8x256xbf16>
    %c64 = arith.constant 64 : index
    %c0_83 = arith.constant 0 : index
    %69 = vector.load %arg18[%c64, %c0_83] : memref<72x256xbf16, #tpu.memory_space<vmem>>, vector<8x256xbf16>
    tpu.vector_store %arg18[%c64, %c0_83], %68 {strides = array<i32>} : memref<72x256xbf16, #tpu.memory_space<vmem>>, vector<8x256xbf16>,
    %c0_84 = arith.constant 0 : index
    %c0_85 = arith.constant 0 : index
    %70 = vector.load %arg5[%c0_84, %c0_85] : memref<16x72xbf16, #tpu.memory_space<vmem>>, vector<16x72xbf16>
    %c0_86 = arith.constant 0 : index
    %c0_87 = arith.constant 0 : index
    %71 = vector.load %arg18[%c0_86, %c0_87] : memref<72x256xbf16, #tpu.memory_space<vmem>>, vector<72x256xbf16>
    %cst_88 = arith.constant dense<0.000000e+00> : vector<16x256xf32>
    %72 = tpu.matmul %70, %71, %cst_88 {dimension_numbers = #tpu.dot_dimension_numbers<[1], [0], [0], [1], [0, 0, 1, 1], [], []>} : vector<16x72xbf16>, vector<72x256xbf16>, vector<16x256xf32> -> vector<16x256xf32>
    %c0_89 = arith.constant 0 : index
    %c0_90 = arith.constant 0 : index
    %73 = vector.load %arg6[%c0_89, %c0_90] : memref<16x1xf32, #tpu.memory_space<vmem>>, vector<16x1xf32>
    %74 = vector.broadcast %73 : vector<16x1xf32> to vector<16x256xf32>
    %75 = arith.addf %72, %74 : vector<16x256xf32>
    %cst_91 = arith.constant 0.000000e+00 : f32
    %76 = vector.broadcast %cst_91 : f32 to vector<16x256xf32>
    %77 = arith.maximumf %75, %76 : vector<16x256xf32>
    %78 = arith.truncf %77 : vector<16x256xf32> to vector<16x256xbf16>
    %c0_92 = arith.constant 0 : index
    %c0_93 = arith.constant 0 : index
    %79 = vector.load %arg19[%c0_92, %c0_93] : memref<16x256xbf16, #tpu.memory_space<vmem>>, vector<16x256xbf16>
    tpu.vector_store %arg19[%c0_92, %c0_93], %78 {strides = array<i32>} : memref<16x256xbf16, #tpu.memory_space<vmem>>, vector<16x256xbf16>,
    %c0_94 = arith.constant 0 : index
    %c0_95 = arith.constant 0 : index
    %80 = vector.load %arg19[%c0_94, %c0_95] : memref<16x256xbf16, #tpu.memory_space<vmem>>, vector<16x222xbf16>
    %c0_96 = arith.constant 0 : index
    %c1_97 = arith.constant 1 : index
    %81 = vector.load %arg19[%c0_96, %c1_97] : memref<16x256xbf16, #tpu.memory_space<vmem>>, vector<16x222xbf16>
    %82 = arith.maximumf %80, %81 : vector<16x222xbf16>
    %c0_98 = arith.constant 0 : index
    %c16_99 = arith.constant 16 : index
    %83 = vector.load %arg19[%c0_98, %c16_99] : memref<16x256xbf16, #tpu.memory_space<vmem>>, vector<16x222xbf16>
    %c0_100 = arith.constant 0 : index
    %c17_101 = arith.constant 17 : index
    %84 = vector.load %arg19[%c0_100, %c17_101] : memref<16x256xbf16, #tpu.memory_space<vmem>>, vector<16x222xbf16>
    %85 = arith.maximumf %83, %84 : vector<16x222xbf16>
    %86 = arith.maximumf %82, %85 : vector<16x222xbf16>
    %c0_102 = arith.constant 0 : index
    %c0_103 = arith.constant 0 : index
    %87 = vector.load %arg7[%c0_102, %c0_103] : memref<222x49xbf16, #tpu.memory_space<vmem>>, vector<222x49xbf16>
    %cst_104 = arith.constant dense<0.000000e+00> : vector<16x49xf32>
    %88 = tpu.matmul %86, %87, %cst_104 {dimension_numbers = #tpu.dot_dimension_numbers<[1], [0], [0], [1], [0, 0, 1, 1], [], []>} : vector<16x222xbf16>, vector<222x49xbf16>, vector<16x49xf32> -> vector<16x49xf32>
    %c0_105 = arith.constant 0 : index
    %c0_106 = arith.constant 0 : index
    %89 = vector.load %arg20[%c0_105, %c0_106] : memref<16x49xf32, #tpu.memory_space<vmem>>, vector<16x49xf32>
    tpu.vector_store %arg20[%c0_105, %c0_106], %88 {strides = array<i32>} : memref<16x49xf32, #tpu.memory_space<vmem>>, vector<16x49xf32>,
    %c0_107 = arith.constant 0 : index
    %c0_108 = arith.constant 0 : index
    %90 = vector.load %arg20[%c0_107, %c0_108] : memref<16x49xf32, #tpu.memory_space<vmem>>, vector<1x49xf32>
    %c0_109 = arith.constant 0 : index
    %c0_110 = arith.constant 0 : index
    %91 = vector.load %arg21[%c0_109, %c0_110] : memref<1x784xf32, #tpu.memory_space<vmem>>, vector<1x49xf32>
    tpu.vector_store %arg21[%c0_109, %c0_110], %90 {strides = array<i32>} : memref<1x784xf32, #tpu.memory_space<vmem>>, vector<1x49xf32>,
    %c1_111 = arith.constant 1 : index
    %c0_112 = arith.constant 0 : index
    %92 = vector.load %arg20[%c1_111, %c0_112] : memref<16x49xf32, #tpu.memory_space<vmem>>, vector<1x49xf32>
    %c0_113 = arith.constant 0 : index
    %c49 = arith.constant 49 : index
    %93 = vector.load %arg21[%c0_113, %c49] : memref<1x784xf32, #tpu.memory_space<vmem>>, vector<1x49xf32>
    tpu.vector_store %arg21[%c0_113, %c49], %92 {strides = array<i32>} : memref<1x784xf32, #tpu.memory_space<vmem>>, vector<1x49xf32>,
    %c2_114 = arith.constant 2 : index
    %c0_115 = arith.constant 0 : index
    %94 = vector.load %arg20[%c2_114, %c0_115] : memref<16x49xf32, #tpu.memory_space<vmem>>, vector<1x49xf32>
    %c0_116 = arith.constant 0 : index
    %c98 = arith.constant 98 : index
    %95 = vector.load %arg21[%c0_116, %c98] : memref<1x784xf32, #tpu.memory_space<vmem>>, vector<1x49xf32>
    tpu.vector_store %arg21[%c0_116, %c98], %94 {strides = array<i32>} : memref<1x784xf32, #tpu.memory_space<vmem>>, vector<1x49xf32>,
    %c3 = arith.constant 3 : index
    %c0_117 = arith.constant 0 : index
    %96 = vector.load %arg20[%c3, %c0_117] : memref<16x49xf32, #tpu.memory_space<vmem>>, vector<1x49xf32>
    %c0_118 = arith.constant 0 : index
    %c147 = arith.constant 147 : index
    %97 = vector.load %arg21[%c0_118, %c147] : memref<1x784xf32, #tpu.memory_space<vmem>>, vector<1x49xf32>
    tpu.vector_store %arg21[%c0_118, %c147], %96 {strides = array<i32>} : memref<1x784xf32, #tpu.memory_space<vmem>>, vector<1x49xf32>,
    %c4_119 = arith.constant 4 : index
    %c0_120 = arith.constant 0 : index
    %98 = vector.load %arg20[%c4_119, %c0_120] : memref<16x49xf32, #tpu.memory_space<vmem>>, vector<1x49xf32>
    %c0_121 = arith.constant 0 : index
    %c196 = arith.constant 196 : index
    %99 = vector.load %arg21[%c0_121, %c196] : memref<1x784xf32, #tpu.memory_space<vmem>>, vector<1x49xf32>
    tpu.vector_store %arg21[%c0_121, %c196], %98 {strides = array<i32>} : memref<1x784xf32, #tpu.memory_space<vmem>>, vector<1x49xf32>,
    %c5 = arith.constant 5 : index
    %c0_122 = arith.constant 0 : index
    %100 = vector.load %arg20[%c5, %c0_122] : memref<16x49xf32, #tpu.memory_space<vmem>>, vector<1x49xf32>
    %c0_123 = arith.constant 0 : index
    %c245 = arith.constant 245 : index
    %101 = vector.load %arg21[%c0_123, %c245] : memref<1x784xf32, #tpu.memory_space<vmem>>, vector<1x49xf32>
    tpu.vector_store %arg21[%c0_123, %c245], %100 {strides = array<i32>} : memref<1x784xf32, #tpu.memory_space<vmem>>, vector<1x49xf32>,
    %c6 = arith.constant 6 : index
    %c0_124 = arith.constant 0 : index
    %102 = vector.load %arg20[%c6, %c0_124] : memref<16x49xf32, #tpu.memory_space<vmem>>, vector<1x49xf32>
    %c0_125 = arith.constant 0 : index
    %c294 = arith.constant 294 : index
    %103 = vector.load %arg21[%c0_125, %c294] : memref<1x784xf32, #tpu.memory_space<vmem>>, vector<1x49xf32>
    tpu.vector_store %arg21[%c0_125, %c294], %102 {strides = array<i32>} : memref<1x784xf32, #tpu.memory_space<vmem>>, vector<1x49xf32>,
    %c7 = arith.constant 7 : index
    %c0_126 = arith.constant 0 : index
    %104 = vector.load %arg20[%c7, %c0_126] : memref<16x49xf32, #tpu.memory_space<vmem>>, vector<1x49xf32>
    %c0_127 = arith.constant 0 : index
    %c343 = arith.constant 343 : index
    %105 = vector.load %arg21[%c0_127, %c343] : memref<1x784xf32, #tpu.memory_space<vmem>>, vector<1x49xf32>
    tpu.vector_store %arg21[%c0_127, %c343], %104 {strides = array<i32>} : memref<1x784xf32, #tpu.memory_space<vmem>>, vector<1x49xf32>,
    %c8_128 = arith.constant 8 : index
    %c0_129 = arith.constant 0 : index
    %106 = vector.load %arg20[%c8_128, %c0_129] : memref<16x49xf32, #tpu.memory_space<vmem>>, vector<1x49xf32>
    %c0_130 = arith.constant 0 : index
    %c392 = arith.constant 392 : index
    %107 = vector.load %arg21[%c0_130, %c392] : memref<1x784xf32, #tpu.memory_space<vmem>>, vector<1x49xf32>
    tpu.vector_store %arg21[%c0_130, %c392], %106 {strides = array<i32>} : memref<1x784xf32, #tpu.memory_space<vmem>>, vector<1x49xf32>,
    %c9 = arith.constant 9 : index
    %c0_131 = arith.constant 0 : index
    %108 = vector.load %arg20[%c9, %c0_131] : memref<16x49xf32, #tpu.memory_space<vmem>>, vector<1x49xf32>
    %c0_132 = arith.constant 0 : index
    %c441 = arith.constant 441 : index
    %109 = vector.load %arg21[%c0_132, %c441] : memref<1x784xf32, #tpu.memory_space<vmem>>, vector<1x49xf32>
    tpu.vector_store %arg21[%c0_132, %c441], %108 {strides = array<i32>} : memref<1x784xf32, #tpu.memory_space<vmem>>, vector<1x49xf32>,
    %c10 = arith.constant 10 : index
    %c0_133 = arith.constant 0 : index
    %110 = vector.load %arg20[%c10, %c0_133] : memref<16x49xf32, #tpu.memory_space<vmem>>, vector<1x49xf32>
    %c0_134 = arith.constant 0 : index
    %c490 = arith.constant 490 : index
    %111 = vector.load %arg21[%c0_134, %c490] : memref<1x784xf32, #tpu.memory_space<vmem>>, vector<1x49xf32>
    tpu.vector_store %arg21[%c0_134, %c490], %110 {strides = array<i32>} : memref<1x784xf32, #tpu.memory_space<vmem>>, vector<1x49xf32>,
    %c11 = arith.constant 11 : index
    %c0_135 = arith.constant 0 : index
    %112 = vector.load %arg20[%c11, %c0_135] : memref<16x49xf32, #tpu.memory_space<vmem>>, vector<1x49xf32>
    %c0_136 = arith.constant 0 : index
    %c539 = arith.constant 539 : index
    %113 = vector.load %arg21[%c0_136, %c539] : memref<1x784xf32, #tpu.memory_space<vmem>>, vector<1x49xf32>
    tpu.vector_store %arg21[%c0_136, %c539], %112 {strides = array<i32>} : memref<1x784xf32, #tpu.memory_space<vmem>>, vector<1x49xf32>,
    %c12_137 = arith.constant 12 : index
    %c0_138 = arith.constant 0 : index
    %114 = vector.load %arg20[%c12_137, %c0_138] : memref<16x49xf32, #tpu.memory_space<vmem>>, vector<1x49xf32>
    %c0_139 = arith.constant 0 : index
    %c588 = arith.constant 588 : index
    %115 = vector.load %arg21[%c0_139, %c588] : memref<1x784xf32, #tpu.memory_space<vmem>>, vector<1x49xf32>
    tpu.vector_store %arg21[%c0_139, %c588], %114 {strides = array<i32>} : memref<1x784xf32, #tpu.memory_space<vmem>>, vector<1x49xf32>,
    %c13 = arith.constant 13 : index
    %c0_140 = arith.constant 0 : index
    %116 = vector.load %arg20[%c13, %c0_140] : memref<16x49xf32, #tpu.memory_space<vmem>>, vector<1x49xf32>
    %c0_141 = arith.constant 0 : index
    %c637 = arith.constant 637 : index
    %117 = vector.load %arg21[%c0_141, %c637] : memref<1x784xf32, #tpu.memory_space<vmem>>, vector<1x49xf32>
    tpu.vector_store %arg21[%c0_141, %c637], %116 {strides = array<i32>} : memref<1x784xf32, #tpu.memory_space<vmem>>, vector<1x49xf32>,
    %c14 = arith.constant 14 : index
    %c0_142 = arith.constant 0 : index
    %118 = vector.load %arg20[%c14, %c0_142] : memref<16x49xf32, #tpu.memory_space<vmem>>, vector<1x49xf32>
    %c0_143 = arith.constant 0 : index
    %c686 = arith.constant 686 : index
    %119 = vector.load %arg21[%c0_143, %c686] : memref<1x784xf32, #tpu.memory_space<vmem>>, vector<1x49xf32>
    tpu.vector_store %arg21[%c0_143, %c686], %118 {strides = array<i32>} : memref<1x784xf32, #tpu.memory_space<vmem>>, vector<1x49xf32>,
    %c15 = arith.constant 15 : index
    %c0_144 = arith.constant 0 : index
    %120 = vector.load %arg20[%c15, %c0_144] : memref<16x49xf32, #tpu.memory_space<vmem>>, vector<1x49xf32>
    %c0_145 = arith.constant 0 : index
    %c735 = arith.constant 735 : index
    %121 = vector.load %arg21[%c0_145, %c735] : memref<1x784xf32, #tpu.memory_space<vmem>>, vector<1x49xf32>
    tpu.vector_store %arg21[%c0_145, %c735], %120 {strides = array<i32>} : memref<1x784xf32, #tpu.memory_space<vmem>>, vector<1x49xf32>,
    %c0_146 = arith.constant 0 : index
    %c0_147 = arith.constant 0 : index
    %122 = vector.load %arg21[%c0_146, %c0_147] : memref<1x784xf32, #tpu.memory_space<vmem>>, vector<1x784xf32>
    %123 = arith.truncf %122 : vector<1x784xf32> to vector<1x784xbf16>
    %c0_148 = arith.constant 0 : index
    %c0_149 = arith.constant 0 : index
    %124 = vector.load %arg8[%c0_148, %c0_149] : memref<784x64xbf16, #tpu.memory_space<vmem>>, vector<784x64xbf16>
    %cst_150 = arith.constant dense<0.000000e+00> : vector<1x64xf32>
    %125 = tpu.matmul %123, %124, %cst_150 {dimension_numbers = #tpu.dot_dimension_numbers<[1], [0], [0], [1], [0, 0, 1, 1], [], []>} : vector<1x784xbf16>, vector<784x64xbf16>, vector<1x64xf32> -> vector<1x64xf32>
    %c0_151 = arith.constant 0 : index
    %c0_152 = arith.constant 0 : index
    %126 = vector.load %arg9[%c0_151, %c0_152] : memref<1x64xf32, #tpu.memory_space<vmem>>, vector<1x64xf32>
    %127 = arith.addf %125, %126 : vector<1x64xf32>
    %cst_153 = arith.constant 0.000000e+00 : f32
    %128 = vector.broadcast %cst_153 : f32 to vector<1x64xf32>
    %129 = arith.maximumf %127, %128 : vector<1x64xf32>
    %130 = arith.truncf %129 : vector<1x64xf32> to vector<1x64xbf16>
    %c0_154 = arith.constant 0 : index
    %c0_155 = arith.constant 0 : index
    %131 = vector.load %arg10[%c0_154, %c0_155] : memref<64x64xbf16, #tpu.memory_space<vmem>>, vector<64x64xbf16>
    %cst_156 = arith.constant dense<0.000000e+00> : vector<1x64xf32>
    %132 = tpu.matmul %130, %131, %cst_156 {dimension_numbers = #tpu.dot_dimension_numbers<[1], [0], [0], [1], [0, 0, 1, 1], [], []>} : vector<1x64xbf16>, vector<64x64xbf16>, vector<1x64xf32> -> vector<1x64xf32>
    %c0_157 = arith.constant 0 : index
    %c0_158 = arith.constant 0 : index
    %133 = vector.load %arg11[%c0_157, %c0_158] : memref<1x64xf32, #tpu.memory_space<vmem>>, vector<1x64xf32>
    %134 = arith.addf %132, %133 : vector<1x64xf32>
    %cst_159 = arith.constant 0.000000e+00 : f32
    %135 = vector.broadcast %cst_159 : f32 to vector<1x64xf32>
    %136 = arith.maximumf %134, %135 : vector<1x64xf32>
    %137 = arith.truncf %136 : vector<1x64xf32> to vector<1x64xbf16>
    %c0_160 = arith.constant 0 : index
    %c0_161 = arith.constant 0 : index
    %138 = vector.load %arg12[%c0_160, %c0_161] : memref<64x128xbf16, #tpu.memory_space<vmem>>, vector<64x128xbf16>
    %cst_162 = arith.constant dense<0.000000e+00> : vector<1x128xf32>
    %139 = tpu.matmul %137, %138, %cst_162 {dimension_numbers = #tpu.dot_dimension_numbers<[1], [0], [0], [1], [0, 0, 1, 1], [], []>} : vector<1x64xbf16>, vector<64x128xbf16>, vector<1x128xf32> -> vector<1x128xf32>
    %c0_163 = arith.constant 0 : index
    %c0_164 = arith.constant 0 : index
    %140 = vector.load %arg13[%c0_163, %c0_164] : memref<1x128xf32, #tpu.memory_space<vmem>>, vector<1x128xf32>
    %141 = arith.addf %139, %140 : vector<1x128xf32>
    %142 = arith.truncf %141 : vector<1x128xf32> to vector<1x128xbf16>
    %c0_165 = arith.constant 0 : index
    %c0_166 = arith.constant 0 : index
    %c0_167 = arith.constant 0 : index
    %143 = vector.load %arg14[%c0_165, %c0_166, %c0_167] : memref<1x1x128xbf16, #tpu.memory_space<vmem>>, vector<1x1x128xbf16>
    %144 = vector.shape_cast %143 : vector<1x1x128xbf16> to vector<1x128xbf16>
    %145 = vector.shape_cast %142 : vector<1x128xbf16> to vector<1x1x128xbf16>
    tpu.vector_store %arg14[%c0_165, %c0_166, %c0_167], %145 {strides = array<i32>} : memref<1x1x128xbf16, #tpu.memory_space<vmem>>, vector<1x1x128xbf16>,
    return
  }
  func.func @transform_0(%arg0: i32) -> (i32, i32, i32) {
    %c0_i32 = arith.constant 0 : i32
    %c0_i32_0 = arith.constant 0 : i32
    %c0_i32_1 = arith.constant 0 : i32
    return %arg0, %c0_i32, %c0_i32_0 : i32, i32, i32
  }
  func.func @transform_1(%arg0: i32) -> (i32, i32) {
    %c0_i32 = arith.constant 0 : i32
    %c0_i32_0 = arith.constant 0 : i32
    %c0_i32_1 = arith.constant 0 : i32
    return %c0_i32, %c0_i32_0 : i32, i32
  }
  func.func @transform_2(%arg0: i32) -> (i32, i32) {
    %c0_i32 = arith.constant 0 : i32
    %c0_i32_0 = arith.constant 0 : i32
    %c0_i32_1 = arith.constant 0 : i32
    return %c0_i32, %c0_i32_0 : i32, i32
  }
  func.func @transform_3(%arg0: i32) -> (i32, i32) {
    %c0_i32 = arith.constant 0 : i32
    %c0_i32_0 = arith.constant 0 : i32
    %c0_i32_1 = arith.constant 0 : i32
    return %c0_i32, %c0_i32_0 : i32, i32
  }
  func.func @transform_4(%arg0: i32) -> (i32, i32) {
    %c0_i32 = arith.constant 0 : i32
    %c0_i32_0 = arith.constant 0 : i32
    %c0_i32_1 = arith.constant 0 : i32
    return %c0_i32, %c0_i32_0 : i32, i32
  }
  func.func @transform_5(%arg0: i32) -> (i32, i32) {
    %c0_i32 = arith.constant 0 : i32
    %c0_i32_0 = arith.constant 0 : i32
    %c0_i32_1 = arith.constant 0 : i32
    return %c0_i32, %c0_i32_0 : i32, i32
  }
  func.func @transform_6(%arg0: i32) -> (i32, i32) {
    %c0_i32 = arith.constant 0 : i32
    %c0_i32_0 = arith.constant 0 : i32
    %c0_i32_1 = arith.constant 0 : i32
    return %c0_i32, %c0_i32_0 : i32, i32
  }
  func.func @transform_7(%arg0: i32) -> (i32, i32) {
    %c0_i32 = arith.constant 0 : i32
    %c0_i32_0 = arith.constant 0 : i32
    %c0_i32_1 = arith.constant 0 : i32
    return %c0_i32, %c0_i32_0 : i32, i32
  }
  func.func @transform_8(%arg0: i32) -> (i32, i32) {
    %c0_i32 = arith.constant 0 : i32
    %c0_i32_0 = arith.constant 0 : i32
    %c0_i32_1 = arith.constant 0 : i32
    return %c0_i32, %c0_i32_0 : i32, i32
  }
  func.func @transform_9(%arg0: i32) -> (i32, i32) {
    %c0_i32 = arith.constant 0 : i32
    %c0_i32_0 = arith.constant 0 : i32
    %c0_i32_1 = arith.constant 0 : i32
    return %c0_i32, %c0_i32_0 : i32, i32
  }
  func.func @transform_10(%arg0: i32) -> (i32, i32) {
    %c0_i32 = arith.constant 0 : i32
    %c0_i32_0 = arith.constant 0 : i32
    %c0_i32_1 = arith.constant 0 : i32
    return %c0_i32, %c0_i32_0 : i32, i32
  }
  func.func @transform_11(%arg0: i32) -> (i32, i32) {
    %c0_i32 = arith.constant 0 : i32
    %c0_i32_0 = arith.constant 0 : i32
    %c0_i32_1 = arith.constant 0 : i32
    return %c0_i32, %c0_i32_0 : i32, i32
  }
  func.func @transform_12(%arg0: i32) -> (i32, i32) {
    %c0_i32 = arith.constant 0 : i32
    %c0_i32_0 = arith.constant 0 : i32
    %c0_i32_1 = arith.constant 0 : i32
    return %c0_i32, %c0_i32_0 : i32, i32
  }
  func.func @transform_13(%arg0: i32) -> (i32, i32, i32) {
    %c0_i32 = arith.constant 0 : i32
    %c0_i32_0 = arith.constant 0 : i32
    %c0_i32_1 = arith.constant 0 : i32
    return %arg0, %c0_i32, %c0_i32_0 : i32, i32, i32
  }
}

</mosaic_0001>

<llo_original>
// kernel: _lambda_.1
$region0: #{_lambda_.1}
  #allocation0 [shape = 'u32[]', space=smem, size = 0x4, offset = 0x4, fixed_abs, tag = 'smem constant byte address 0x4 - core index']
  #allocation1 [shape = 'u32[72,128]{1,0:T(1,128)}', space=vmem, size = 0x9000, scoped, tag = 'internal scratch']
  #allocation2 [shape = 'bf16[36,900]{1,0:T(8,128)(2,1)}', space=vmem, size = 0x14000, scoped, tag = 'scratch operand']
  #allocation3 [shape = 'bf16[8,900]{1,0:T(8,128)(2,1)}', space=vmem, size = 0x4000, scoped, tag = 'scratch operand']
  #allocation4 [shape = 'bf16[8,290]{1,0:T(8,128)(2,1)}', space=vmem, size = 0x1800, scoped, tag = 'scratch operand']
  #allocation5 [shape = 'bf16[72,256]{1,0:T(8,128)(2,1)}', space=vmem, size = 0x9000, scoped, tag = 'scratch operand']
  #allocation6 [shape = 'bf16[16,256]{1,0:T(8,128)(2,1)}', space=vmem, size = 0x2000, scoped, tag = 'scratch operand']
  #allocation7 [shape = 'f32[16,49]{1,0:T(8,128)}', space=vmem, size = 0x2000, scoped, tag = 'scratch operand']
  #allocation8 [shape = 'f32[1,784]{1,0:T(1,128)}', space=vmem, size = 0xe00, scoped, tag = 'scratch operand']
  %s0 = inlined_call_operand.vmem [shape: bf16[2,4,962], index: 0, kind: input, shape index: {}]
  %s1 = inlined_call_operand.vmem [shape: bf16[8,36], index: 1, kind: input, shape index: {}]
  %s2 = inlined_call_operand.vmem [shape: f32[8,1], index: 2, kind: input, shape index: {}]
  %s3 = inlined_call_operand.hbm [shape: bf16[838,256], index: 3, kind: input, shape index: {}]
  %s4 = inlined_call_operand.vmem [shape: bf16[16,72], index: 4, kind: input, shape index: {}]
  %s5 = inlined_call_operand.vmem [shape: f32[16,1], index: 5, kind: input, shape index: {}]
  %s6 = inlined_call_operand.vmem [shape: bf16[222,49], index: 6, kind: input, shape index: {}]
  %s7 = inlined_call_operand.vmem [shape: bf16[784,64], index: 7, kind: input, shape index: {}]
  %s8 = inlined_call_operand.vmem [shape: f32[1,64], index: 8, kind: input, shape index: {}]
  %s9 = inlined_call_operand.vmem [shape: bf16[64,64], index: 9, kind: input, shape index: {}]
  %s10 = inlined_call_operand.vmem [shape: f32[1,64], index: 10, kind: input, shape index: {}]
  %s11 = inlined_call_operand.vmem [shape: bf16[64,128], index: 11, kind: input, shape index: {}]
  %s12 = inlined_call_operand.vmem [shape: f32[1,128], index: 12, kind: input, shape index: {}]
  %s13 = inlined_call_operand.vmem [shape: bf16[2,1,128], index: 13, kind: output, shape index: {}]
  %s14 = sld [smem:[#allocation0]]
  $region89: #{_lambda_.1} parent=0
    _
  %s16 = ssub.s32 1, %s14
  %s17 = scalar_select 0, %s16, %s14
  $region1: #{_lambda_.1} parent=0
    #allocation9 [shape = 'u8[430080]{0}', space=vmem, size = 0x69000, scoped, tag = 'input window, operand 3, single buffered']
    #allocation10 [shape = 's32[2]{0}', space=sflag, size = 0x8, scoped, tag = 'scoped memory for _lambda_.1']
    %18 = vsyncpa [#allocation10], 0
    loop: start=0, step=1, limit=4
    $region2: #{_lambda_.1} parent=1 // loop_pre_header
      _
    $region3: #{_lambda_.1} parent=1 // loop_header
      %s20 = sphi 0, %s24
      %p21 = scmp.ge.s32.totalorder %s20, 4
      %s30 = sphi 0, %s32
      %s33 = sphi 0, %s30
      %s34 = sphi 0, %s33
      %s50 = sphi 0, %s34
      %s54 = sphi 0, %s54
      %s56 = sphi 0, %s54
      %s57 = sphi 0, %s56
      %s71 = sphi 0, %s57
      %s75 = sphi 0, %s75
      %s77 = sphi 0, %s75
      %s78 = sphi 0, %s77
      %s92 = sphi 0, %s78
      %s96 = sphi 0, %s96
      %s98 = sphi 0, %s96
      %s99 = sphi 0, %s98
      %s113 = sphi 0, %s99
      %s117 = sphi 0, %s117
      %s119 = sphi 0, %s117
      %s120 = sphi 0, %s119
      %s134 = sphi 0, %s120
      %s138 = sphi 0, %s138
      %s140 = sphi 0, %s138
      %s141 = sphi 0, %s140
      %s155 = sphi 0, %s141
      %s159 = sphi 0, %s159
      %s161 = sphi 0, %s159
      %s162 = sphi 0, %s161
      %s176 = sphi 0, %s162
      %s180 = sphi 0, %s180
      %s182 = sphi 0, %s180
      %s183 = sphi 0, %s182
      %s197 = sphi 0, %s183
      %s201 = sphi 0, %s201
      %s203 = sphi 0, %s201
      %s204 = sphi 0, %s203
      %s218 = sphi 0, %s204
      %s222 = sphi 0, %s222
      %s224 = sphi 0, %s222
      %s225 = sphi 0, %s224
      %s239 = sphi 0, %s225
      %s243 = sphi 0, %s243
      %s245 = sphi 0, %s243
      %s246 = sphi 0, %s245
      %s260 = sphi 0, %s246
      %s264 = sphi 0, %s264
      %s266 = sphi 0, %s264
      %s267 = sphi 0, %s266
      %s281 = sphi 0, %s267
      %s285 = sphi 0, %s285
      %s287 = sphi 0, %s285
      %s288 = sphi 0, %s287
      %s302 = sphi 0, %s288
      %s308 = sphi 0, %s310
      %s311 = sphi 0, %s308
      %s312 = sphi 0, %s311
      %s328 = sphi 0, %s312
    $region4: #{_lambda_.1} parent=1 // loop_header_branch
      %23 = sbr.rel (%p21) target = $region8
    $region5: #{_lambda_.1} parent=1 // loop_body
      %s25 = ssub.s32 %s20, 1
      %s26 = ssub.s32 %s20, 2
      %s27 = sadd.s32 %s20, 1
      %s28 = ssub.s32 %s20, %s27
      %p29 = scmp.eq.s32.totalorder %s28, 0
      %s31 = sadd.s32 %s30, 1
      %s32 = scalar_select %p29, %s30, %s31
      %p35 = pneg %p29
      %p36 = scmp.eq.s32.totalorder %s20, 1
      %p37 = por %p35, %p36
      %p38 = scmp.ne.s32.totalorder %s30, %s33
      %p39 = scmp.eq.s32.totalorder %s20, 0
      %p40 = por %p38, %p39
      %p41 = scmp.ne.s32.totalorder %s30, %s33
      %p42 = scmp.eq.s32.totalorder %s25, 1
      %p43 = por %p41, %p42
      %p44 = scmp.ne.s32.totalorder %s33, %s34
      %p45 = scmp.eq.s32.totalorder %s25, 0
      %p46 = por %p44, %p45
      %p47 = scmp.ne.s32.totalorder %s33, %s34
      %p48 = scmp.eq.s32.totalorder %s26, 1
      %p49 = por %p47, %p48
      %p51 = scmp.ne.s32.totalorder %s34, %s50
      %p52 = scmp.eq.s32.totalorder %s26, 0
      %p53 = por %p51, %p52
      %s55 = sadd.s32 %s54, 1
      %p58 = scmp.eq.s32.totalorder %s20, 1
      %p59 = scmp.ne.s32.totalorder %s54, %s56
      %p60 = scmp.eq.s32.totalorder %s20, 0
      %p61 = por %p59, %p60
      %p62 = scmp.ne.s32.totalorder %s54, %s56
      %p63 = scmp.eq.s32.totalorder %s25, 1
      %p64 = por %p62, %p63
      %p65 = scmp.ne.s32.totalorder %s56, %s57
      %p66 = scmp.eq.s32.totalorder %s25, 0
      %p67 = por %p65, %p66
      %p68 = scmp.ne.s32.totalorder %s56, %s57
      %p69 = scmp.eq.s32.totalorder %s26, 1
      %p70 = por %p68, %p69
      %p72 = scmp.ne.s32.totalorder %s57, %s71
      %p73 = scmp.eq.s32.totalorder %s26, 0
      %p74 = por %p72, %p73
      %s76 = sadd.s32 %s75, 1
      %p79 = scmp.eq.s32.totalorder %s20, 1
      %p80 = scmp.ne.s32.totalorder %s75, %s77
      %p81 = scmp.eq.s32.totalorder %s20, 0
      %p82 = por %p80, %p81
      %p83 = scmp.ne.s32.totalorder %s75, %s77
      %p84 = scmp.eq.s32.totalorder %s25, 1
      %p85 = por %p83, %p84
      %p86 = scmp.ne.s32.totalorder %s77, %s78
      %p87 = scmp.eq.s32.totalorder %s25, 0
      %p88 = por %p86, %p87
      %p89 = scmp.ne.s32.totalorder %s77, %s78
      %p90 = scmp.eq.s32.totalorder %s26, 1
      %p91 = por %p89, %p90
      %p93 = scmp.ne.s32.totalorder %s78, %s92
      %p94 = scmp.eq.s32.totalorder %s26, 0
      %p95 = por %p93, %p94
      %s97 = sadd.s32 %s96, 1
      %p100 = scmp.eq.s32.totalorder %s20, 1
      %p101 = scmp.ne.s32.totalorder %s96, %s98
      %p102 = scmp.eq.s32.totalorder %s20, 0
      %p103 = por %p101, %p102
      %p104 = scmp.ne.s32.totalorder %s96, %s98
      %p105 = scmp.eq.s32.totalorder %s25, 1
      %p106 = por %p104, %p105
      %p107 = scmp.ne.s32.totalorder %s98, %s99
      %p108 = scmp.eq.s32.totalorder %s25, 0
      %p109 = por %p107, %p108
      %p110 = scmp.ne.s32.totalorder %s98, %s99
      %p111 = scmp.eq.s32.totalorder %s26, 1
      %p112 = por %p110, %p111
      %p114 = scmp.ne.s32.totalorder %s99, %s113
      %p115 = scmp.eq.s32.totalorder %s26, 0
      %p116 = por %p114, %p115
      %s118 = sadd.s32 %s117, 1
      %p121 = scmp.eq.s32.totalorder %s20, 1
      %p122 = scmp.ne.s32.totalorder %s117, %s119
      %p123 = scmp.eq.s32.totalorder %s20, 0
      %p124 = por %p122, %p123
      %p125 = scmp.ne.s32.totalorder %s117, %s119
      %p126 = scmp.eq.s32.totalorder %s25, 1
      %p127 = por %p125, %p126
      %p128 = scmp.ne.s32.totalorder %s119, %s120
      %p129 = scmp.eq.s32.totalorder %s25, 0
      %p130 = por %p128, %p129
      %p131 = scmp.ne.s32.totalorder %s119, %s120
      %p132 = scmp.eq.s32.totalorder %s26, 1
      %p133 = por %p131, %p132
      %p135 = scmp.ne.s32.totalorder %s120, %s134
      %p136 = scmp.eq.s32.totalorder %s26, 0
      %p137 = por %p135, %p136
      %s139 = sadd.s32 %s138, 1
      %p142 = scmp.eq.s32.totalorder %s20, 1
      %p143 = scmp.ne.s32.totalorder %s138, %s140
      %p144 = scmp.eq.s32.totalorder %s20, 0
      %p145 = por %p143, %p144
      %p146 = scmp.ne.s32.totalorder %s138, %s140
      %p147 = scmp.eq.s32.totalorder %s25, 1
      %p148 = por %p146, %p147
      %p149 = scmp.ne.s32.totalorder %s140, %s141
      %p150 = scmp.eq.s32.totalorder %s25, 0
      %p151 = por %p149, %p150
      %p152 = scmp.ne.s32.totalorder %s140, %s141
      %p153 = scmp.eq.s32.totalorder %s26, 1
      %p154 = por %p152, %p153
      %p156 = scmp.ne.s32.totalorder %s141, %s155
      %p157 = scmp.eq.s32.totalorder %s26, 0
      %p158 = por %p156, %p157
      %s160 = sadd.s32 %s159, 1
      %p163 = scmp.eq.s32.totalorder %s20, 1
      %p164 = scmp.ne.s32.totalorder %s159, %s161
      %p165 = scmp.eq.s32.totalorder %s20, 0
      %p166 = por %p164, %p165
      %p167 = scmp.ne.s32.totalorder %s159, %s161
      %p168 = scmp.eq.s32.totalorder %s25, 1
      %p169 = por %p167, %p168
      %p170 = scmp.ne.s32.totalorder %s161, %s162
      %p171 = scmp.eq.s32.totalorder %s25, 0
      %p172 = por %p170, %p171
      %p173 = scmp.ne.s32.totalorder %s161, %s162
      %p174 = scmp.eq.s32.totalorder %s26, 1
      %p175 = por %p173, %p174
      %p177 = scmp.ne.s32.totalorder %s162, %s176
      %p178 = scmp.eq.s32.totalorder %s26, 0
      %p179 = por %p177, %p178
      %s181 = sadd.s32 %s180, 1
      %p184 = scmp.eq.s32.totalorder %s20, 1
      %p185 = scmp.ne.s32.totalorder %s180, %s182
      %p186 = scmp.eq.s32.totalorder %s20, 0
      %p187 = por %p185, %p186
      %p188 = scmp.ne.s32.totalorder %s180, %s182
      %p189 = scmp.eq.s32.totalorder %s25, 1
      %p190 = por %p188, %p189
      %p191 = scmp.ne.s32.totalorder %s182, %s183
      %p192 = scmp.eq.s32.totalorder %s25, 0
      %p193 = por %p191, %p192
      %p194 = scmp.ne.s32.totalorder %s182, %s183
      %p195 = scmp.eq.s32.totalorder %s26, 1
      %p196 = por %p194, %p195
      %p198 = scmp.ne.s32.totalorder %s183, %s197
      %p199 = scmp.eq.s32.totalorder %s26, 0
      %p200 = por %p198, %p199
      %s202 = sadd.s32 %s201, 1
      %p205 = scmp.eq.s32.totalorder %s20, 1
      %p206 = scmp.ne.s32.totalorder %s201, %s203
      %p207 = scmp.eq.s32.totalorder %s20, 0
      %p208 = por %p206, %p207
      %p209 = scmp.ne.s32.totalorder %s201, %s203
      %p210 = scmp.eq.s32.totalorder %s25, 1
      %p211 = por %p209, %p210
      %p212 = scmp.ne.s32.totalorder %s203, %s204
      %p213 = scmp.eq.s32.totalorder %s25, 0
      %p214 = por %p212, %p213
      %p215 = scmp.ne.s32.totalorder %s203, %s204
      %p216 = scmp.eq.s32.totalorder %s26, 1
      %p217 = por %p215, %p216
      %p219 = scmp.ne.s32.totalorder %s204, %s218
      %p220 = scmp.eq.s32.totalorder %s26, 0
      %p221 = por %p219, %p220
      %s223 = sadd.s32 %s222, 1
      %p226 = scmp.eq.s32.totalorder %s20, 1
      %p227 = scmp.ne.s32.totalorder %s222, %s224
      %p228 = scmp.eq.s32.totalorder %s20, 0
      %p229 = por %p227, %p228
      %p230 = scmp.ne.s32.totalorder %s222, %s224
      %p231 = scmp.eq.s32.totalorder %s25, 1
      %p232 = por %p230, %p231
      %p233 = scmp.ne.s32.totalorder %s224, %s225
      %p234 = scmp.eq.s32.totalorder %s25, 0
      %p235 = por %p233, %p234
      %p236 = scmp.ne.s32.totalorder %s224, %s225
      %p237 = scmp.eq.s32.totalorder %s26, 1
      %p238 = por %p236, %p237
      %p240 = scmp.ne.s32.totalorder %s225, %s239
      %p241 = scmp.eq.s32.totalorder %s26, 0
      %p242 = por %p240, %p241
      %s244 = sadd.s32 %s243, 1
      %p247 = scmp.eq.s32.totalorder %s20, 1
      %p248 = scmp.ne.s32.totalorder %s243, %s245
      %p249 = scmp.eq.s32.totalorder %s20, 0
      %p250 = por %p248, %p249
      %p251 = scmp.ne.s32.totalorder %s243, %s245
      %p252 = scmp.eq.s32.totalorder %s25, 1
      %p253 = por %p251, %p252
      %p254 = scmp.ne.s32.totalorder %s245, %s246
      %p255 = scmp.eq.s32.totalorder %s25, 0
      %p256 = por %p254, %p255
      %p257 = scmp.ne.s32.totalorder %s245, %s246
      %p258 = scmp.eq.s32.totalorder %s26, 1
      %p259 = por %p257, %p258
      %p261 = scmp.ne.s32.totalorder %s246, %s260
      %p262 = scmp.eq.s32.totalorder %s26, 0
      %p263 = por %p261, %p262
      %s265 = sadd.s32 %s264, 1
      %p268 = scmp.eq.s32.totalorder %s20, 1
      %p269 = scmp.ne.s32.totalorder %s264, %s266
      %p270 = scmp.eq.s32.totalorder %s20, 0
      %p271 = por %p269, %p270
      %p272 = scmp.ne.s32.totalorder %s264, %s266
      %p273 = scmp.eq.s32.totalorder %s25, 1
      %p274 = por %p272, %p273
      %p275 = scmp.ne.s32.totalorder %s266, %s267
      %p276 = scmp.eq.s32.totalorder %s25, 0
      %p277 = por %p275, %p276
      %p278 = scmp.ne.s32.totalorder %s266, %s267
      %p279 = scmp.eq.s32.totalorder %s26, 1
      %p280 = por %p278, %p279
      %p282 = scmp.ne.s32.totalorder %s267, %s281
      %p283 = scmp.eq.s32.totalorder %s26, 0
      %p284 = por %p282, %p283
      %s286 = sadd.s32 %s285, 1
      %p289 = scmp.eq.s32.totalorder %s20, 1
      %p290 = scmp.ne.s32.totalorder %s285, %s287
      %p291 = scmp.eq.s32.totalorder %s20, 0
      %p292 = por %p290, %p291
      %p293 = scmp.ne.s32.totalorder %s285, %s287
      %p294 = scmp.eq.s32.totalorder %s25, 1
      %p295 = por %p293, %p294
      %p296 = scmp.ne.s32.totalorder %s287, %s288
      %p297 = scmp.eq.s32.totalorder %s25, 0
      %p298 = por %p296, %p297
      %p299 = scmp.ne.s32.totalorder %s287, %s288
      %p300 = scmp.eq.s32.totalorder %s26, 1
      %p301 = por %p299, %p300
      %p303 = scmp.ne.s32.totalorder %s288, %s302
      %p304 = scmp.eq.s32.totalorder %s26, 0
      %p305 = por %p303, %p304
      %s306 = ssub.s32 %s20, %s27
      %p307 = scmp.eq.s32.totalorder %s306, 0
      %s309 = sadd.s32 %s308, 1
      %s310 = scalar_select %p307, %s308, %s309
      %p313 = pneg %p307
      %p314 = scmp.eq.s32.totalorder %s20, 1
      %p315 = por %p313, %p314
      %p316 = scmp.ne.s32.totalorder %s308, %s311
      %p317 = scmp.eq.s32.totalorder %s20, 0
      %p318 = por %p316, %p317
      %p319 = scmp.ne.s32.totalorder %s308, %s311
      %p320 = scmp.eq.s32.totalorder %s25, 1
      %p321 = por %p319, %p320
      %p322 = scmp.ne.s32.totalorder %s311, %s312
      %p323 = scmp.eq.s32.totalorder %s25, 0
      %p324 = por %p322, %p323
      %p325 = scmp.ne.s32.totalorder %s311, %s312
      %p326 = scmp.eq.s32.totalorder %s26, 1
      %p327 = por %p325, %p326
      %p329 = scmp.ne.s32.totalorder %s312, %s328
      %p330 = scmp.eq.s32.totalorder %s26, 0
      %p331 = por %p329, %p330
      %p332 = scmp.le.s32.totalorder 1, %s20
      %p333 = scmp.lt.s32.totalorder %s20, 3
      %p334 = pnand %p332, %p333
      %p335 = pneg %p334
      // Predicated region
      $region9: #{_lambda_.1} parent=5 // pred_check
        _
      $region10: #{_lambda_.1} parent=5 // pred_check_branch
        %337 = sbr.rel (%p334) target = $region12
      $region11: #{_lambda_.1} parent=5 // pred_region
        %s338 = ssub.s32 %s20, 1
        // Predicated region
        $region13: #{_lambda_.1} parent=11 // pred_check
          %p339 = pneg %p67
        $region14: #{_lambda_.1} parent=11 // pred_check_branch
          %341 = sbr.rel (%p339) target = $region16
        $region15: #{_lambda_.1} parent=11 // pred_region
          _
        $region16: #{_lambda_.1} parent=11 // pred_fallthru
          _
        // Predicated region
        $region17: #{_lambda_.1} parent=11 // pred_check
          %p342 = pneg %p88
        $region18: #{_lambda_.1} parent=11 // pred_check_branch
          %344 = sbr.rel (%p342) target = $region20
        $region19: #{_lambda_.1} parent=11 // pred_region
          _
        $region20: #{_lambda_.1} parent=11 // pred_fallthru
          _
        // Predicated region
        $region21: #{_lambda_.1} parent=11 // pred_check
          %p345 = pneg %p109
        $region22: #{_lambda_.1} parent=11 // pred_check_branch
          %347 = sbr.rel (%p345) target = $region24
        $region23: #{_lambda_.1} parent=11 // pred_region
          %349 = vsyncadd [#allocation10], 0
          %s350 = sshll.u32 %s3, 4
          %s351 = int_to_ptr.hbm [resolvable:$true] %s350
          %s352 = sshll.u32 [#allocation9], 4
          %s353 = int_to_ptr.vmem [resolvable:$true] %s352
          %358 = dma.hbm_to_vmem [thread:$0]  %s351, 13440, %s353, [#allocation10], 128, 128, 8
        $region24: #{_lambda_.1} parent=11 // pred_fallthru
          _
        // Predicated region
        $region25: #{_lambda_.1} parent=11 // pred_check
          %p359 = pneg %p130
        $region26: #{_lambda_.1} parent=11 // pred_check_branch
          %361 = sbr.rel (%p359) target = $region28
        $region27: #{_lambda_.1} parent=11 // pred_region
          _
        $region28: #{_lambda_.1} parent=11 // pred_fallthru
          _
        // Predicated region
        $region29: #{_lambda_.1} parent=11 // pred_check
          %p362 = pneg %p151
        $region30: #{_lambda_.1} parent=11 // pred_check_branch
          %364 = sbr.rel (%p362) target = $region32
        $region31: #{_lambda_.1} parent=11 // pred_region
          _
        $region32: #{_lambda_.1} parent=11 // pred_fallthru
          _
        // Predicated region
        $region33: #{_lambda_.1} parent=11 // pred_check
          %p365 = pneg %p172
        $region34: #{_lambda_.1} parent=11 // pred_check_branch
          %367 = sbr.rel (%p365) target = $region36
        $region35: #{_lambda_.1} parent=11 // pred_region
          _
        $region36: #{_lambda_.1} parent=11 // pred_fallthru
          _
        // Predicated region
        $region37: #{_lambda_.1} parent=11 // pred_check
          %p368 = pneg %p193
        $region38: #{_lambda_.1} parent=11 // pred_check_branch
          %370 = sbr.rel (%p368) target = $region40
        $region39: #{_lambda_.1} parent=11 // pred_region
          _
        $region40: #{_lambda_.1} parent=11 // pred_fallthru
          _
        // Predicated region
        $region41: #{_lambda_.1} parent=11 // pred_check
          %p371 = pneg %p214
        $region42: #{_lambda_.1} parent=11 // pred_check_branch
          %373 = sbr.rel (%p371) target = $region44
        $region43: #{_lambda_.1} parent=11 // pred_region
          _
        $region44: #{_lambda_.1} parent=11 // pred_fallthru
          _
        // Predicated region
        $region45: #{_lambda_.1} parent=11 // pred_check
          %p374 = pneg %p235
        $region46: #{_lambda_.1} parent=11 // pred_check_branch
          %376 = sbr.rel (%p374) target = $region48
        $region47: #{_lambda_.1} parent=11 // pred_region
          _
        $region48: #{_lambda_.1} parent=11 // pred_fallthru
          _
        // Predicated region
        $region49: #{_lambda_.1} parent=11 // pred_check
          %p377 = pneg %p256
        $region50: #{_lambda_.1} parent=11 // pred_check_branch
          %379 = sbr.rel (%p377) target = $region52
        $region51: #{_lambda_.1} parent=11 // pred_region
          _
        $region52: #{_lambda_.1} parent=11 // pred_fallthru
          _
        // Predicated region
        $region53: #{_lambda_.1} parent=11 // pred_check
          %p380 = pneg %p277
        $region54: #{_lambda_.1} parent=11 // pred_check_branch
          %382 = sbr.rel (%p380) target = $region56
        $region55: #{_lambda_.1} parent=11 // pred_region
          _
        $region56: #{_lambda_.1} parent=11 // pred_fallthru
          _
        // Predicated region
        $region57: #{_lambda_.1} parent=11 // pred_check
          %p383 = pneg %p298
        $region58: #{_lambda_.1} parent=11 // pred_check_branch
          %385 = sbr.rel (%p383) target = $region60
        $region59: #{_lambda_.1} parent=11 // pred_region
          _
        $region60: #{_lambda_.1} parent=11 // pred_fallthru
          _
      $region12: #{_lambda_.1} parent=5 // pred_fallthru
        _
      %p386 = scmp.lt.s32.totalorder %s20, 2
      // Predicated region
      $region61: #{_lambda_.1} parent=5 // pred_check
        %p387 = pneg %p386
      $region62: #{_lambda_.1} parent=5 // pred_check_branch
        %389 = sbr.rel (%p387) target = $region64
      $region63: #{_lambda_.1} parent=5 // pred_region
        // Predicated region
        $region65: #{_lambda_.1} parent=63 // pred_check
          %p390 = pneg %p40
        $region66: #{_lambda_.1} parent=63 // pred_check_branch
          %392 = sbr.rel (%p390) target = $region68
        $region67: #{_lambda_.1} parent=63 // pred_region
          %p393 = scmp.lt.s32.totalorder %s20, 1
          %s394 = scalar_select %p393, %s20, 1
          %s395 = smul.addr %s394, 8
          %s396 = smul.addr %s395, 2
          %s397 = scalar_lea.vmem %s0, %s396
        $region68: #{_lambda_.1} parent=63 // pred_fallthru
          _
      $region64: #{_lambda_.1} parent=5 // pred_fallthru
        _
      %p398 = scmp.le.s32.totalorder 1, %s20
      %p399 = scmp.lt.s32.totalorder %s20, 3
      %p400 = pnand %p398, %p399
      %p401 = pneg %p400
      // Predicated region
      $region69: #{_lambda_.1} parent=5 // pred_check
        _
      $region70: #{_lambda_.1} parent=5 // pred_check_branch
        %403 = sbr.rel (%p400) target = $region72
      $region71: #{_lambda_.1} parent=5 // pred_region
        %s404 = ssub.s32 %s20, 1
        // Predicated region
        $region73: #{_lambda_.1} parent=71 // pred_check
          %p405 = pneg %p109
        $region74: #{_lambda_.1} parent=71 // pred_check_branch
          %407 = sbr.rel (%p405) target = $region76
        $region75: #{_lambda_.1} parent=71 // pred_region
          %409 = dma.done [#allocation10], 13440
        $region76: #{_lambda_.1} parent=71 // pred_fallthru
          _
        %p410 = scmp.lt.s32.totalorder %s25, 1
        %s411 = scalar_select %p410, %s25, 1
        %s412 = smul.addr %s411, 8
        %s413 = smul.addr %s412, 2
        %s414 = scalar_lea.vmem %s0, %s413
        %p415 = pneg %p46
        %p416 = pneg %p43
        %p417 = pneg %p67
        %p418 = pneg %p64
        %p419 = pneg %p88
        %p420 = pneg %p85
        %p421 = pneg %p109
        %p422 = pneg %p106
        %p423 = pneg %p130
        %p424 = pneg %p127
        %p425 = pneg %p151
        %p426 = pneg %p148
        %p427 = pneg %p172
        %p428 = pneg %p169
        %p429 = pneg %p193
        %p430 = pneg %p190
        %p431 = pneg %p214
        %p432 = pneg %p211
        %p433 = pneg %p235
        %p434 = pneg %p232
        %p435 = pneg %p256
        %p436 = pneg %p253
        %p437 = pneg %p277
        %p438 = pneg %p274
        %p439 = pneg %p298
        %p440 = pneg %p295
        %p441 = pneg %p324
        %p442 = pneg %p321
        %p443 = scmp.lt.s32.totalorder %s25, 1
        %s444 = scalar_select %p443, %s25, 1
        %s445 = scalar_lea.vmem %s13, %s444
        %p446 = scmp.lt.s32.totalorder %s25, 1
        %s447 = scalar_select %p446, %s25, 1
        %s448 = smul.addr %s447, 8
        %s449 = smul.addr %s448, 2
        %s450 = scalar_lea.vmem %s0, %s449
        %p451 = scmp.lt.s32.totalorder %s25, 1
        %s452 = scalar_select %p451, %s25, 1
        %s453 = scalar_lea.vmem %s13, %s452
        %vm455 = vcmask 134144
        %456 = vst.msk [vmem:[#allocation4] sm:$0xf] %vm455, 0
        %vm457 = vcmask 273544
        %458 = vst.msk [vmem:[#allocation4 + $0x8] sm:$0xf] %vm457, 0
        %v459 = vld [vmem:[%s450] sm:$0xff]
        %v460 = vld [vmem:[%s450 + $0x8] sm:$0xff]
        %462 = vst [vmem:[#allocation1] ss:$2 sm:$0xff] %v459
        %s464 = scalar_lea.vmem [#allocation1], 16
        %465 = vst [vmem:[%s464] ss:$2 sm:$0xff] %v460
        %v466 = vld.sshfl [vmem:[#allocation1] sm:$0xff pattern:$0x75643120]
        %v467 = vld.sshfl [vmem:[#allocation1 + $0x8] sm:$0xff pattern:$0x75643120]
        %v468 = vld.sshfl [vmem:[#allocation1 + $0x10] sm:$0xff pattern:$0x75643120]
        %v469 = vld.sshfl [vmem:[#allocation1 + $0x18] sm:$0xff pattern:$0x75643120]
        %474 = vst [vmem:[#allocation2] sm:$0x33] %v466
        %475 = vst [vmem:[#allocation2 + $0x8] sm:$0x33] %v467
        %476 = vst [vmem:[#allocation2 + $0x10] sm:$0x33] %v468
        %vm477 = vcmask 1041408
        %vm478 = vcmask 29700
        %vm479 = vmor %vm478, %vm477
        %480 = vst.msk [vmem:[#allocation2 + $0x18] sm:$0x33] %vm479, %v469
        %v481 = vld [vmem:[%s450] sm:$0xff]
        %v482 = vld [vmem:[%s450 + $0x8] sm:$0xff]
        %s484 = scalar_lea.vmem [#allocation1], 1
        %485 = vst [vmem:[%s484] ss:$2 sm:$0xff] %v481
        %s487 = scalar_lea.vmem [#allocation1], 17
        %488 = vst [vmem:[%s487] ss:$2 sm:$0xff] %v482
        %v489 = vld.sshfl [vmem:[#allocation1] sm:$0xff pattern:$0x75643120]
        %v491 = vld.sshfl [vmem:[#allocation1 + $0x8] sm:$0xff pattern:$0x75643120]
        %v493 = vld.sshfl [vmem:[#allocation1 + $0x10] sm:$0xff pattern:$0x75643120]
        %v495 = vld.sshfl [vmem:[#allocation1 + $0x18] sm:$0xff pattern:$0x75643120]
        %497 = vrot.lane.b32.xlu0 %v489, 127
        %v498 = vpop.permute.xlu0 %497
        %499 = vrot.lane.b32.xlu0 %v491, 127
        %v500 = vpop.permute.xlu0 %499
        %501 = vrot.lane.b32.xlu0 %v493, 127
        %v502 = vpop.permute.xlu0 %501
        %503 = vrot.lane.b32.xlu0 %v495, 127
        %v504 = vpop.permute.xlu0 %503
        %v505 = vrot.slane %v498, 4
        %v506 = vrot.slane %v500, 4
        %v507 = vrot.slane %v502, 4
        %v508 = vrot.slane %v504, 4
        %vm509 = vcmask 1043456
        %v510 = vsel %vm509, %v505, %v506
        %vm511 = vcmask 1039360
        %v512 = vsel %vm511, %v498, %v510
        %v513 = vsel %vm509, %v506, %v507
        %v514 = vsel %vm511, %v500, %v513
        %v515 = vsel %vm509, %v507, %v508
        %v516 = vsel %vm511, %v502, %v515
        %v517 = vsel %vm511, %v504, %v508
        %522 = vst [vmem:[#allocation2] sm:$0xcc] %v512
        %523 = vst [vmem:[#allocation2 + $0x8] sm:$0xcc] %v514
        %524 = vst [vmem:[#allocation2 + $0x10] sm:$0xcc] %v516
        %vm525 = vcmask 1043458
        %vm526 = vcmask 31750
        %vm527 = vmor %vm526, %vm525
        %528 = vst.msk [vmem:[#allocation2 + $0x18] sm:$0xcc] %vm527, %v517
        %v529 = vld [vmem:[%s450] sm:$0xff]
        %v530 = vld [vmem:[%s450 + $0x8] sm:$0xff]
        %532 = vst [vmem:[#allocation1] ss:$2 sm:$0xff] %v529
        %s534 = scalar_lea.vmem [#allocation1], 16
        %535 = vst [vmem:[%s534] ss:$2 sm:$0xff] %v530
        %v536 = vld.sshfl [vmem:[#allocation1] sm:$0xff pattern:$0x75643120]
        %v538 = vld.sshfl [vmem:[#allocation1 + $0x8] sm:$0xff pattern:$0x75643120]
        %v540 = vld.sshfl [vmem:[#allocation1 + $0x10] sm:$0xff pattern:$0x75643120]
        %v542 = vld.sshfl [vmem:[#allocation1 + $0x18] sm:$0xff pattern:$0x75643120]
        %544 = vrot.lane.b32.xlu0 %v536, 126
        %v545 = vpop.permute.xlu0 %544
        %546 = vrot.lane.b32.xlu0 %v538, 126
        %v547 = vpop.permute.xlu0 %546
        %548 = vrot.lane.b32.xlu0 %v540, 126
        %v549 = vpop.permute.xlu0 %548
        %550 = vrot.lane.b32.xlu0 %v542, 126
        %v551 = vpop.permute.xlu0 %550
        %v552 = vrot.slane %v545, 4
        %v553 = vrot.slane %v547, 4
        %v554 = vrot.slane %v549, 4
        %v555 = vrot.slane %v551, 4
        %v556 = vsel %vm509, %v552, %v553
        %vm557 = vcmask 1031168
        %v558 = vsel %vm557, %v545, %v556
        %v559 = vsel %vm509, %v553, %v554
        %v560 = vsel %vm557, %v547, %v559
        %v561 = vsel %vm509, %v554, %v555
        %v562 = vsel %vm557, %v549, %v561
        %v563 = vsel %vm557, %v551, %v555
        %568 = vst [vmem:[#allocation2 + $0x20] sm:$0x33] %v558
        %569 = vst [vmem:[#allocation2 + $0x28] sm:$0x33] %v560
        %570 = vst [vmem:[#allocation2 + $0x30] sm:$0x33] %v562
        %571 = vst.msk [vmem:[#allocation2 + $0x38] sm:$0x33] %vm479, %v563
        %v572 = vld [vmem:[%s450] sm:$0xff]
        %v573 = vld [vmem:[%s450 + $0x8] sm:$0xff]
        %s575 = scalar_lea.vmem [#allocation1], 1
        %576 = vst [vmem:[%s575] ss:$2 sm:$0xff] %v572
        %s578 = scalar_lea.vmem [#allocation1], 17
        %579 = vst [vmem:[%s578] ss:$2 sm:$0xff] %v573
        %v580 = vld.sshfl [vmem:[#allocation1] sm:$0xff pattern:$0x75643120]
        %v582 = vld.sshfl [vmem:[#allocation1 + $0x8] sm:$0xff pattern:$0x75643120]
        %v584 = vld.sshfl [vmem:[#allocation1 + $0x10] sm:$0xff pattern:$0x75643120]
        %v586 = vld.sshfl [vmem:[#allocation1 + $0x18] sm:$0xff pattern:$0x75643120]
        %588 = vrot.lane.b32.xlu0 %v580, 98
        %v589 = vpop.permute.xlu0 %588
        %590 = vrot.lane.b32.xlu0 %v582, 98
        %v591 = vpop.permute.xlu0 %590
        %592 = vrot.lane.b32.xlu0 %v584, 98
        %v593 = vpop.permute.xlu0 %592
        %594 = vrot.lane.b32.xlu0 %v586, 98
        %v595 = vpop.permute.xlu0 %594
        %v596 = vrot.slane %v589, 4
        %v597 = vrot.slane %v591, 4
        %v598 = vrot.slane %v593, 4
        %v599 = vrot.slane %v595, 4
        %v600 = vsel %vm509, %v596, %v597
        %vm601 = vcmask 801792
        %v602 = vsel %vm601, %v589, %v600
        %v603 = vsel %vm509, %v597, %v598
        %v604 = vsel %vm601, %v591, %v603
        %v605 = vsel %vm509, %v598, %v599
        %v606 = vsel %vm601, %v593, %v605
        %v607 = vsel %vm601, %v595, %v599
        %612 = vst [vmem:[#allocation2 + $0x20] sm:$0xcc] %v602
        %613 = vst [vmem:[#allocation2 + $0x28] sm:$0xcc] %v604
        %614 = vst [vmem:[#allocation2 + $0x30] sm:$0xcc] %v606
        %615 = vst.msk [vmem:[#allocation2 + $0x38] sm:$0xcc] %vm527, %v607
        %v616 = vld [vmem:[%s450] sm:$0xff]
        %v617 = vld [vmem:[%s450 + $0x8] sm:$0xff]
        %619 = vst [vmem:[#allocation1] ss:$2 sm:$0xff] %v616
        %s621 = scalar_lea.vmem [#allocation1], 16
        %622 = vst [vmem:[%s621] ss:$2 sm:$0xff] %v617
        %v623 = vld.sshfl [vmem:[#allocation1] sm:$0xff pattern:$0x75643120]
        %v625 = vld.sshfl [vmem:[#allocation1 + $0x8] sm:$0xff pattern:$0x75643120]
        %v627 = vld.sshfl [vmem:[#allocation1 + $0x10] sm:$0xff pattern:$0x75643120]
        %v629 = vld.sshfl [vmem:[#allocation1 + $0x18] sm:$0xff pattern:$0x75643120]
        %631 = vrot.lane.b32.xlu0 %v623, 97
        %v632 = vpop.permute.xlu0 %631
        %633 = vrot.lane.b32.xlu0 %v625, 97
        %v634 = vpop.permute.xlu0 %633
        %635 = vrot.lane.b32.xlu0 %v627, 97
        %v636 = vpop.permute.xlu0 %635
        %637 = vrot.lane.b32.xlu0 %v629, 97
        %v638 = vpop.permute.xlu0 %637
        %v639 = vrot.slane %v632, 4
        %v640 = vrot.slane %v634, 4
        %v641 = vrot.slane %v636, 4
        %v642 = vrot.slane %v638, 4
        %v643 = vsel %vm509, %v639, %v640
        %vm644 = vcmask 793600
        %v645 = vsel %vm644, %v632, %v643
        %v646 = vsel %vm509, %v640, %v641
        %v647 = vsel %vm644, %v634, %v646
        %v648 = vsel %vm509, %v641, %v642
        %v649 = vsel %vm644, %v636, %v648
        %v650 = vsel %vm644, %v638, %v642
        %655 = vst [vmem:[#allocation2 + $0x40] sm:$0x33] %v645
        %656 = vst [vmem:[#allocation2 + $0x48] sm:$0x33] %v647
        %657 = vst [vmem:[#allocation2 + $0x50] sm:$0x33] %v649
        %658 = vst.msk [vmem:[#allocation2 + $0x58] sm:$0x33] %vm479, %v650
        %v659 = vld [vmem:[%s450] sm:$0xff]
        %v660 = vld [vmem:[%s450 + $0x8] sm:$0xff]
        %s662 = scalar_lea.vmem [#allocation1], 1
        %663 = vst [vmem:[%s662] ss:$2 sm:$0xff] %v659
        %s665 = scalar_lea.vmem [#allocation1], 17
        %666 = vst [vmem:[%s665] ss:$2 sm:$0xff] %v660
        %v667 = vld.sshfl [vmem:[#allocation1] sm:$0xff pattern:$0x75643120]
        %v669 = vld.sshfl [vmem:[#allocation1 + $0x8] sm:$0xff pattern:$0x75643120]
        %v671 = vld.sshfl [vmem:[#allocation1 + $0x10] sm:$0xff pattern:$0x75643120]
        %v673 = vld.sshfl [vmem:[#allocation1 + $0x18] sm:$0xff pattern:$0x75643120]
        %675 = vrot.lane.b32.xlu0 %v667, 96
        %v676 = vpop.permute.xlu0 %675
        %677 = vrot.lane.b32.xlu0 %v669, 96
        %v678 = vpop.permute.xlu0 %677
        %679 = vrot.lane.b32.xlu0 %v671, 96
        %v680 = vpop.permute.xlu0 %679
        %681 = vrot.lane.b32.xlu0 %v673, 96
        %v682 = vpop.permute.xlu0 %681
        %v683 = vrot.slane %v676, 4
        %v684 = vrot.slane %v678, 4
        %v685 = vrot.slane %v680, 4
        %v686 = vrot.slane %v682, 4
        %v687 = vsel %vm509, %v683, %v684
        %vm688 = vcmask 785408
        %v689 = vsel %vm688, %v676, %v687
        %v690 = vsel %vm509, %v684, %v685
        %v691 = vsel %vm688, %v678, %v690
        %v692 = vsel %vm509, %v685, %v686
        %v693 = vsel %vm688, %v680, %v692
        %v694 = vsel %vm688, %v682, %v686
        %699 = vst [vmem:[#allocation2 + $0x40] sm:$0xcc] %v689
        %700 = vst [vmem:[#allocation2 + $0x48] sm:$0xcc] %v691
        %701 = vst [vmem:[#allocation2 + $0x50] sm:$0xcc] %v693
        %702 = vst.msk [vmem:[#allocation2 + $0x58] sm:$0xcc] %vm527, %v694
        %v703 = vld [vmem:[%s450] sm:$0xff]
        %v704 = vld [vmem:[%s450 + $0x8] sm:$0xff]
        %706 = vst [vmem:[#allocation1] ss:$2 sm:$0xff] %v703
        %s708 = scalar_lea.vmem [#allocation1], 16
        %709 = vst [vmem:[%s708] ss:$2 sm:$0xff] %v704
        %v710 = vld.sshfl [vmem:[#allocation1] sm:$0xff pattern:$0x75643120]
        %v712 = vld.sshfl [vmem:[#allocation1 + $0x8] sm:$0xff pattern:$0x75643120]
        %v714 = vld.sshfl [vmem:[#allocation1 + $0x10] sm:$0xff pattern:$0x75643120]
        %v716 = vld.sshfl [vmem:[#allocation1 + $0x18] sm:$0xff pattern:$0x75643120]
        %718 = vrot.lane.b32.xlu0 %v710, 68
        %v719 = vpop.permute.xlu0 %718
        %720 = vrot.lane.b32.xlu0 %v712, 68
        %v721 = vpop.permute.xlu0 %720
        %722 = vrot.lane.b32.xlu0 %v714, 68
        %v723 = vpop.permute.xlu0 %722
        %724 = vrot.lane.b32.xlu0 %v716, 68
        %v725 = vpop.permute.xlu0 %724
        %v726 = vrot.slane %v719, 4
        %v727 = vrot.slane %v721, 4
        %v728 = vrot.slane %v723, 4
        %v729 = vrot.slane %v725, 4
        %v730 = vsel %vm509, %v726, %v727
        %vm731 = vcmask 556032
        %v732 = vsel %vm731, %v719, %v730
        %v733 = vsel %vm509, %v727, %v728
        %v734 = vsel %vm731, %v721, %v733
        %v735 = vsel %vm509, %v728, %v729
        %v736 = vsel %vm731, %v723, %v735
        %v737 = vsel %vm731, %v725, %v729
        %742 = vst [vmem:[#allocation2 + $0x60] sm:$0x33] %v732
        %743 = vst [vmem:[#allocation2 + $0x68] sm:$0x33] %v734
        %744 = vst [vmem:[#allocation2 + $0x70] sm:$0x33] %v736
        %745 = vst.msk [vmem:[#allocation2 + $0x78] sm:$0x33] %vm479, %v737
        %v746 = vld [vmem:[%s450] sm:$0xff]
        %v747 = vld [vmem:[%s450 + $0x8] sm:$0xff]
        %s749 = scalar_lea.vmem [#allocation1], 1
        %750 = vst [vmem:[%s749] ss:$2 sm:$0xff] %v746
        %s752 = scalar_lea.vmem [#allocation1], 17
        %753 = vst [vmem:[%s752] ss:$2 sm:$0xff] %v747
        %v754 = vld.sshfl [vmem:[#allocation1] sm:$0xff pattern:$0x75643120]
        %v756 = vld.sshfl [vmem:[#allocation1 + $0x8] sm:$0xff pattern:$0x75643120]
        %v758 = vld.sshfl [vmem:[#allocation1 + $0x10] sm:$0xff pattern:$0x75643120]
        %v760 = vld.sshfl [vmem:[#allocation1 + $0x18] sm:$0xff pattern:$0x75643120]
        %762 = vrot.lane.b32.xlu0 %v754, 67
        %v763 = vpop.permute.xlu0 %762
        %764 = vrot.lane.b32.xlu0 %v756, 67
        %v765 = vpop.permute.xlu0 %764
        %766 = vrot.lane.b32.xlu0 %v758, 67
        %v767 = vpop.permute.xlu0 %766
        %768 = vrot.lane.b32.xlu0 %v760, 67
        %v769 = vpop.permute.xlu0 %768
        %v770 = vrot.slane %v763, 4
        %v771 = vrot.slane %v765, 4
        %v772 = vrot.slane %v767, 4
        %v773 = vrot.slane %v769, 4
        %v774 = vsel %vm509, %v770, %v771
        %vm775 = vcmask 547840
        %v776 = vsel %vm775, %v763, %v774
        %v777 = vsel %vm509, %v771, %v772
        %v778 = vsel %vm775, %v765, %v777
        %v779 = vsel %vm509, %v772, %v773
        %v780 = vsel %vm775, %v767, %v779
        %v781 = vsel %vm775, %v769, %v773
        %786 = vst [vmem:[#allocation2 + $0x60] sm:$0xcc] %v776
        %787 = vst [vmem:[#allocation2 + $0x68] sm:$0xcc] %v778
        %788 = vst [vmem:[#allocation2 + $0x70] sm:$0xcc] %v780
        %789 = vst.msk [vmem:[#allocation2 + $0x78] sm:$0xcc] %vm527, %v781
        %v790 = vld [vmem:[%s450] sm:$0xff]
        %v791 = vld [vmem:[%s450 + $0x8] sm:$0xff]
        %793 = vst [vmem:[#allocation1] ss:$2 sm:$0xff] %v790
        %s795 = scalar_lea.vmem [#allocation1], 16
        %796 = vst [vmem:[%s795] ss:$2 sm:$0xff] %v791
        %v797 = vld.sshfl [vmem:[#allocation1] sm:$0xff pattern:$0x75643120]
        %v799 = vld.sshfl [vmem:[#allocation1 + $0x8] sm:$0xff pattern:$0x75643120]
        %v801 = vld.sshfl [vmem:[#allocation1 + $0x10] sm:$0xff pattern:$0x75643120]
        %v803 = vld.sshfl [vmem:[#allocation1 + $0x18] sm:$0xff pattern:$0x75643120]
        %805 = vrot.lane.b32.xlu0 %v797, 66
        %v806 = vpop.permute.xlu0 %805
        %807 = vrot.lane.b32.xlu0 %v799, 66
        %v808 = vpop.permute.xlu0 %807
        %809 = vrot.lane.b32.xlu0 %v801, 66
        %v810 = vpop.permute.xlu0 %809
        %811 = vrot.lane.b32.xlu0 %v803, 66
        %v812 = vpop.permute.xlu0 %811
        %v813 = vrot.slane %v806, 4
        %v814 = vrot.slane %v808, 4
        %v815 = vrot.slane %v810, 4
        %v816 = vrot.slane %v812, 4
        %v817 = vsel %vm509, %v813, %v814
        %vm818 = vcmask 539648
        %v819 = vsel %vm818, %v806, %v817
        %v820 = vsel %vm509, %v814, %v815
        %v821 = vsel %vm818, %v808, %v820
        %v822 = vsel %vm509, %v815, %v816
        %v823 = vsel %vm818, %v810, %v822
        %v824 = vsel %vm818, %v812, %v816
        %829 = vst [vmem:[#allocation2 + $0x80] sm:$0x33] %v819
        %830 = vst [vmem:[#allocation2 + $0x88] sm:$0x33] %v821
        %831 = vst [vmem:[#allocation2 + $0x90] sm:$0x33] %v823
        %832 = vst.msk [vmem:[#allocation2 + $0x98] sm:$0x33] %vm479, %v824
        %v833 = vld [vmem:[%s1] sm:$0xf]
        %v834 = vld [vmem:[#allocation2] sm:$0xff]
        %v835 = vld [vmem:[#allocation2 + $0x8] sm:$0xff]
        %v836 = vld [vmem:[#allocation2 + $0x10] sm:$0xff]
        %v837 = vld [vmem:[#allocation2 + $0x18] sm:$0xff]
        %v838 = vld [vmem:[#allocation2 + $0x20] sm:$0xff]
        %v839 = vld [vmem:[#allocation2 + $0x28] sm:$0xff]
        %v840 = vld [vmem:[#allocation2 + $0x30] sm:$0xff]
        %v841 = vld [vmem:[#allocation2 + $0x38] sm:$0xff]
        %v842 = vld [vmem:[#allocation2 + $0x40] sm:$0xff]
        %v843 = vld [vmem:[#allocation2 + $0x48] sm:$0xff]
        %v844 = vld [vmem:[#allocation2 + $0x50] sm:$0xff]
        %v845 = vld [vmem:[#allocation2 + $0x58] sm:$0xff]
        %v846 = vld [vmem:[#allocation2 + $0x60] sm:$0xff]
        %v847 = vld [vmem:[#allocation2 + $0x68] sm:$0xff]
        %v848 = vld [vmem:[#allocation2 + $0x70] sm:$0xff]
        %v849 = vld [vmem:[#allocation2 + $0x78] sm:$0xff]
        %v850 = vld [vmem:[#allocation2 + $0x80] sm:$0x33]
        %v851 = vld [vmem:[#allocation2 + $0x88] sm:$0x33]
        %v852 = vld [vmem:[#allocation2 + $0x90] sm:$0x33]
        %v853 = vld [vmem:[#allocation2 + $0x98] sm:$0x33]
        %v854 = vld [vmem:[%s2] sm:$0xff]
        %856 = vset.pattern.permute.xlu0 0
        %857 = vperm.xlu0 %856, %v854
        %v858 = vpop.permute.xlu0 %857
        %v880 = vunpack.c.l.b16 %v834
        %v881 = vunpack.c.h.b16 %v834
        %v882 = vunpack.c.l.b16 %v835
        %v883 = vunpack.c.h.b16 %v835
        %v884 = vunpack.c.l.b16 %v836
        %v885 = vunpack.c.h.b16 %v836
        %v886 = vunpack.c.l.b16 %v837
        %v887 = vunpack.c.h.b16 %v837
        %v888 = vunpack.c.l.b16 %v838
        %v889 = vunpack.c.h.b16 %v838
        %v890 = vunpack.c.l.b16 %v839
        %v891 = vunpack.c.h.b16 %v839
        %v892 = vunpack.c.l.b16 %v840
        %v893 = vunpack.c.h.b16 %v840
        %v894 = vunpack.c.l.b16 %v841
        %v895 = vunpack.c.h.b16 %v841
        %v896 = vunpack.c.l.b16 %v842
        %v897 = vunpack.c.h.b16 %v842
        %v898 = vunpack.c.l.b16 %v843
        %v899 = vunpack.c.h.b16 %v843
        %v900 = vunpack.c.l.b16 %v844
        %v901 = vunpack.c.h.b16 %v844
        %v902 = vunpack.c.l.b16 %v845
        %v903 = vunpack.c.h.b16 %v845
        %v904 = vunpack.c.l.b16 %v846
        %v905 = vunpack.c.h.b16 %v846
        %v906 = vunpack.c.l.b16 %v847
        %v907 = vunpack.c.h.b16 %v847
        %v908 = vunpack.c.l.b16 %v848
        %v909 = vunpack.c.h.b16 %v848
        %v910 = vunpack.c.l.b16 %v849
        %v911 = vunpack.c.h.b16 %v849
        %v912 = vunpack.c.l.b16 %v850
        %v913 = vunpack.c.h.b16 %v850
        %v914 = vunpack.c.l.b16 %v851
        %v915 = vunpack.c.h.b16 %v851
        %v916 = vunpack.c.l.b16 %v852
        %v917 = vunpack.c.h.b16 %v852
        %v918 = vunpack.c.l.b16 %v853
        %v919 = vunpack.c.h.b16 %v853
        %v920 = vpack.c.b16 %v888, %v880
        %v921 = vpack.c.b16 %v889, %v881
        %v922 = vpack.c.b16 %v890, %v882
        %v923 = vpack.c.b16 %v891, %v883
        %v924 = vpack.c.b16 %v892, %v884
        %v925 = vpack.c.b16 %v893, %v885
        %v926 = vpack.c.b16 %v894, %v886
        %v927 = vpack.c.b16 %v895, %v887
        %v928 = vpack.c.b16 %v904, %v896
        %v929 = vpack.c.b16 %v905, %v897
        %v930 = vpack.c.b16 %v906, %v898
        %v931 = vpack.c.b16 %v907, %v899
        %v932 = vpack.c.b16 %v908, %v900
        %v933 = vpack.c.b16 %v909, %v901
        %v934 = vpack.c.b16 %v910, %v902
        %v935 = vpack.c.b16 %v911, %v903
        %v936 = vpack.c.b16 %v912, %v912
        %v937 = vpack.c.b16 %v913, %v913
        %v938 = vpack.c.b16 %v914, %v914
        %v939 = vpack.c.b16 %v915, %v915
        %v940 = vpack.c.b16 %v916, %v916
        %v941 = vpack.c.b16 %v917, %v917
        %v942 = vpack.c.b16 %v918, %v918
        %v943 = vpack.c.b16 %v919, %v919
        %vm960 = vcmask 293888
        %v962 = vsel %vm960, %v833, 0
        %v965 = vsel %vm477, %v936, 0
        %v968 = vsel %vm477, %v937, 0
        %v971 = vsel %vm477, %v938, 0
        %v974 = vsel %vm477, %v939, 0
        %v977 = vsel %vm477, %v940, 0
        %v980 = vsel %vm477, %v941, 0
        %v983 = vsel %vm477, %v942, 0
        %v986 = vsel %vm477, %v943, 0
        %988 = vmatpush.bf16.msra.mxu0 0
        %989 = vmatpush.bf16.msra.mxu0 0
        %990 = vmatpush.bf16.msra.mxu0 0
        %991 = vmatpush.bf16.msra.mxu0 0
        %992 = vmatpush.bf16.msra.mxu0 0
        %993 = vmatpush.bf16.msra.mxu0 %v965
        %994 = vmatpush.bf16.msra.mxu0 %v928
        %995 = vmatpush.bf16.msra.mxu0 %v920
        %996 = vmatmul.bf16.gmra.mxu0 %v962
        %v997 = vpop.f32.mrf.mxu0
        %v998 = vadd.f32 %v858, %v997
        %v999 = vpop.f32.mrf.mxu0
        %1000 = vdwg.mxu0
        %1001 = vmatpush.bf16.msra.mxu0 0
        %1002 = vmatpush.bf16.msra.mxu0 0
        %1003 = vmatpush.bf16.msra.mxu0 0
        %1004 = vmatpush.bf16.msra.mxu0 0
        %1005 = vmatpush.bf16.msra.mxu0 0
        %1006 = vmatpush.bf16.msra.mxu0 %v968
        %1007 = vmatpush.bf16.msra.mxu0 %v929
        %1008 = vmatpush.bf16.msra.mxu0 %v921
        %1009 = vmatmul.bf16.gmra.mxu0 %v962
        %v1010 = vpop.f32.mrf.mxu0
        %v1011 = vadd.f32 %v858, %v1010
        %v1012 = vpop.f32.mrf.mxu0
        %1013 = vdwg.mxu0
        %1014 = vmatpush.bf16.msra.mxu0 0
        %1015 = vmatpush.bf16.msra.mxu0 0
        %1016 = vmatpush.bf16.msra.mxu0 0
        %1017 = vmatpush.bf16.msra.mxu0 0
        %1018 = vmatpush.bf16.msra.mxu0 0
        %1019 = vmatpush.bf16.msra.mxu0 %v971
        %1020 = vmatpush.bf16.msra.mxu0 %v930
        %1021 = vmatpush.bf16.msra.mxu0 %v922
        %1022 = vmatmul.bf16.gmra.mxu0 %v962
        %v1023 = vpop.f32.mrf.mxu0
        %v1024 = vadd.f32 %v858, %v1023
        %v1025 = vpop.f32.mrf.mxu0
        %1026 = vdwg.mxu0
        %1027 = vmatpush.bf16.msra.mxu0 0
        %1028 = vmatpush.bf16.msra.mxu0 0
        %1029 = vmatpush.bf16.msra.mxu0 0
        %1030 = vmatpush.bf16.msra.mxu0 0
        %1031 = vmatpush.bf16.msra.mxu0 0
        %1032 = vmatpush.bf16.msra.mxu0 %v974
        %1033 = vmatpush.bf16.msra.mxu0 %v931
        %1034 = vmatpush.bf16.msra.mxu0 %v923
        %1035 = vmatmul.bf16.gmra.mxu0 %v962
        %v1036 = vpop.f32.mrf.mxu0
        %v1037 = vadd.f32 %v858, %v1036
        %v1038 = vpop.f32.mrf.mxu0
        %1039 = vdwg.mxu0
        %1040 = vmatpush.bf16.msra.mxu0 0
        %1041 = vmatpush.bf16.msra.mxu0 0
        %1042 = vmatpush.bf16.msra.mxu0 0
        %1043 = vmatpush.bf16.msra.mxu0 0
        %1044 = vmatpush.bf16.msra.mxu0 0
        %1045 = vmatpush.bf16.msra.mxu0 %v977
        %1046 = vmatpush.bf16.msra.mxu0 %v932
        %1047 = vmatpush.bf16.msra.mxu0 %v924
        %1048 = vmatmul.bf16.gmra.mxu0 %v962
        %v1049 = vpop.f32.mrf.mxu0
        %v1050 = vadd.f32 %v858, %v1049
        %v1051 = vpop.f32.mrf.mxu0
        %1052 = vdwg.mxu0
        %1053 = vmatpush.bf16.msra.mxu0 0
        %1054 = vmatpush.bf16.msra.mxu0 0
        %1055 = vmatpush.bf16.msra.mxu0 0
        %1056 = vmatpush.bf16.msra.mxu0 0
        %1057 = vmatpush.bf16.msra.mxu0 0
        %1058 = vmatpush.bf16.msra.mxu0 %v980
        %1059 = vmatpush.bf16.msra.mxu0 %v933
        %1060 = vmatpush.bf16.msra.mxu0 %v925
        %1061 = vmatmul.bf16.gmra.mxu0 %v962
        %v1062 = vpop.f32.mrf.mxu0
        %v1063 = vadd.f32 %v858, %v1062
        %v1064 = vpop.f32.mrf.mxu0
        %1065 = vdwg.mxu0
        %1066 = vmatpush.bf16.msra.mxu0 0
        %1067 = vmatpush.bf16.msra.mxu0 0
        %1068 = vmatpush.bf16.msra.mxu0 0
        %1069 = vmatpush.bf16.msra.mxu0 0
        %1070 = vmatpush.bf16.msra.mxu0 0
        %1071 = vmatpush.bf16.msra.mxu0 %v983
        %1072 = vmatpush.bf16.msra.mxu0 %v934
        %1073 = vmatpush.bf16.msra.mxu0 %v926
        %1074 = vmatmul.bf16.gmra.mxu0 %v962
        %v1075 = vpop.f32.mrf.mxu0
        %v1076 = vadd.f32 %v858, %v1075
        %v1077 = vpop.f32.mrf.mxu0
        %1078 = vdwg.mxu0
        %1079 = vmatpush.bf16.msra.mxu0 0
        %1080 = vmatpush.bf16.msra.mxu0 0
        %1081 = vmatpush.bf16.msra.mxu0 0
        %1082 = vmatpush.bf16.msra.mxu0 0
        %1083 = vmatpush.bf16.msra.mxu0 0
        %1084 = vmatpush.bf16.msra.mxu0 %v986
        %1085 = vmatpush.bf16.msra.mxu0 %v935
        %1086 = vmatpush.bf16.msra.mxu0 %v927
        %1087 = vmatmul.bf16.gmra.mxu0 %v962
        %v1088 = vpop.f32.mrf.mxu0
        %v1089 = vadd.f32 %v858, %v1088
        %v1090 = vpop.f32.mrf.mxu0
        %1091 = vdwg.mxu0
        %v1092 = vmax.f32 %v998, 0.0
        %v1093 = vmax.f32 %v1011, 0.0
        %v1094 = vmax.f32 %v1024, 0.0
        %v1095 = vmax.f32 %v1037, 0.0
        %v1096 = vmax.f32 %v1050, 0.0
        %v1097 = vmax.f32 %v1063, 0.0
        %v1098 = vmax.f32 %v1076, 0.0
        %v1099 = vmax.f32 %v1089, 0.0
        %v1100 = vpack.c.bf16 %v1093, %v1092
        %v1101 = vpack.c.bf16 %v1095, %v1094
        %v1102 = vpack.c.bf16 %v1097, %v1096
        %v1103 = vpack.c.bf16 %v1099, %v1098
        %1104 = vst [vmem:[#allocation3] sm:$0xff] %v1100
        %1105 = vst [vmem:[#allocation3 + $0x8] sm:$0xff] %v1101
        %1106 = vst [vmem:[#allocation3 + $0x10] sm:$0xff] %v1102
        %vm1107 = vcmask 1043456
        %vm1108 = vcmask 31748
        %vm1109 = vmor %vm1108, %vm1107
        %1110 = vst.msk [vmem:[#allocation3 + $0x18] sm:$0xff] %vm1109, %v1103
        %v1111 = vld [vmem:[#allocation3] sm:$0xff]
        %v1112 = vld [vmem:[#allocation3 + $0x8] sm:$0xff]
        %v1113 = vld [vmem:[#allocation3 + $0x10] sm:$0xff]
        %v1114 = vld [vmem:[#allocation3 + $0x18] sm:$0xf]
        %v1115 = vunpack.c.l.bf16 %v1111
        %v1116 = vunpack.c.h.bf16 %v1111
        %v1117 = vunpack.c.l.bf16 %v1112
        %v1118 = vunpack.c.h.bf16 %v1112
        %v1119 = vunpack.c.l.bf16 %v1113
        %v1120 = vunpack.c.h.bf16 %v1113
        %v1121 = vunpack.c.l.bf16 %v1114
        %1129 = vrot.lane.b32.xlu0 %v1115, 127
        %v1130 = vpop.permute.xlu0 %1129
        %1131 = vrot.lane.b32.xlu0 %v1116, 127
        %v1132 = vpop.permute.xlu0 %1131
        %1133 = vrot.lane.b32.xlu0 %v1117, 127
        %v1134 = vpop.permute.xlu0 %1133
        %1135 = vrot.lane.b32.xlu0 %v1118, 127
        %v1136 = vpop.permute.xlu0 %1135
        %1137 = vrot.lane.b32.xlu0 %v1119, 127
        %v1138 = vpop.permute.xlu0 %1137
        %1139 = vrot.lane.b32.xlu0 %v1120, 127
        %v1140 = vpop.permute.xlu0 %1139
        %1141 = vrot.lane.b32.xlu0 %v1121, 127
        %v1142 = vpop.permute.xlu0 %1141
        %vm1143 = vcmask 1039360
        %v1144 = vsel %vm1143, %v1130, %v1132
        %v1145 = vsel %vm1143, %v1132, %v1134
        %v1146 = vsel %vm1143, %v1134, %v1136
        %v1147 = vsel %vm1143, %v1136, %v1138
        %v1148 = vsel %vm1143, %v1138, %v1140
        %v1149 = vsel %vm1143, %v1140, %v1142
        %v1157 = vmax.f32 %v1115, %v1144
        %v1158 = vmax.f32 %v1116, %v1145
        %v1159 = vmax.f32 %v1117, %v1146
        %v1160 = vmax.f32 %v1118, %v1147
        %v1161 = vmax.f32 %v1119, %v1148
        %v1162 = vmax.f32 %v1120, %v1149
        %v1163 = vmax.f32 %v1121, %v1142
        %v1164 = vpack.c.bf16 %v1158, %v1157
        %v1165 = vpack.c.bf16 %v1160, %v1159
        %v1166 = vpack.c.bf16 %v1162, %v1161
        %v1167 = vpack.c.bf16 %v1163, %v1163
        %v1168 = vunpack.c.l.bf16 %v1164
        %v1169 = vunpack.c.h.bf16 %v1164
        %v1170 = vunpack.c.l.bf16 %v1165
        %v1171 = vunpack.c.h.bf16 %v1165
        %v1172 = vunpack.c.l.bf16 %v1166
        %v1173 = vunpack.c.h.bf16 %v1166
        %v1174 = vunpack.c.l.bf16 %v1167
        %1182 = vrot.lane.b32.xlu0 %v1168, 98
        %v1183 = vpop.permute.xlu0 %1182
        %1184 = vrot.lane.b32.xlu0 %v1169, 98
        %v1185 = vpop.permute.xlu0 %1184
        %1186 = vrot.lane.b32.xlu0 %v1170, 98
        %v1187 = vpop.permute.xlu0 %1186
        %1188 = vrot.lane.b32.xlu0 %v1171, 98
        %v1189 = vpop.permute.xlu0 %1188
        %1190 = vrot.lane.b32.xlu0 %v1172, 98
        %v1191 = vpop.permute.xlu0 %1190
        %1192 = vrot.lane.b32.xlu0 %v1173, 98
        %v1193 = vpop.permute.xlu0 %1192
        %1194 = vrot.lane.b32.xlu0 %v1174, 98
        %v1195 = vpop.permute.xlu0 %1194
        %vm1196 = vcmask 801792
        %v1197 = vsel %vm1196, %v1183, %v1185
        %v1198 = vsel %vm1196, %v1185, %v1187
        %v1199 = vsel %vm1196, %v1187, %v1189
        %v1200 = vsel %vm1196, %v1189, %v1191
        %v1201 = vsel %vm1196, %v1191, %v1193
        %v1202 = vsel %vm1196, %v1193, %v1195
        %v1210 = vmax.f32 %v1168, %v1197
        %v1211 = vmax.f32 %v1169, %v1198
        %v1212 = vmax.f32 %v1170, %v1199
        %v1213 = vmax.f32 %v1171, %v1200
        %v1214 = vmax.f32 %v1172, %v1201
        %v1215 = vmax.f32 %v1173, %v1202
        %v1216 = vmax.f32 %v1174, %v1195
        %v1217 = vpack.c.bf16 %v1210, %v1210
        %v1218 = vpack.c.bf16 %v1211, %v1211
        %v1219 = vpack.c.bf16 %v1212, %v1212
        %v1220 = vpack.c.bf16 %v1213, %v1213
        %v1221 = vpack.c.bf16 %v1214, %v1214
        %v1222 = vpack.c.bf16 %v1215, %v1215
        %v1223 = vpack.c.bf16 %v1216, %v1216
        %v1224 = vld [vmem:[#allocation9] sm:$0xff]
        %v1225 = vld [vmem:[#allocation9 + $0x8] sm:$0xff]
        %v1226 = vld [vmem:[#allocation9 + $0x10] sm:$0xff]
        %v1227 = vld [vmem:[#allocation9 + $0x18] sm:$0xff]
        %v1228 = vld [vmem:[#allocation9 + $0x20] sm:$0xff]
        %v1229 = vld [vmem:[#allocation9 + $0x28] sm:$0xff]
        %v1230 = vld [vmem:[#allocation9 + $0x30] sm:$0xff]
        %v1231 = vld [vmem:[#allocation9 + $0x38] sm:$0xff]
        %v1232 = vld [vmem:[#allocation9 + $0x40] sm:$0xff]
        %v1233 = vld [vmem:[#allocation9 + $0x48] sm:$0xff]
        %v1234 = vld [vmem:[#allocation9 + $0x50] sm:$0xff]
        %v1235 = vld [vmem:[#allocation9 + $0x58] sm:$0xff]
        %v1236 = vld [vmem:[#allocation9 + $0x60] sm:$0xff]
        %v1237 = vld [vmem:[#allocation9 + $0x68] sm:$0xff]
        %v1238 = vld [vmem:[#allocation9 + $0x70] sm:$0xff]
        %v1239 = vld [vmem:[#allocation9 + $0x78] sm:$0xff]
        %v1240 = vld [vmem:[#allocation9 + $0x80] sm:$0xff]
        %v1241 = vld [vmem:[#allocation9 + $0x88] sm:$0xff]
        %v1242 = vld [vmem:[#allocation9 + $0x90] sm:$0xff]
        %v1243 = vld [vmem:[#allocation9 + $0x98] sm:$0xff]
        %v1244 = vld [vmem:[#allocation9 + $0xa0] sm:$0xff]
        %v1245 = vld [vmem:[#allocation9 + $0xa8] sm:$0xff]
        %v1246 = vld [vmem:[#allocation9 + $0xb0] sm:$0xff]
        %v1247 = vld [vmem:[#allocation9 + $0xb8] sm:$0xff]
        %v1248 = vld [vmem:[#allocation9 + $0xc0] sm:$0xff]
        %v1249 = vld [vmem:[#allocation9 + $0xc8] sm:$0xff]
        %v1250 = vld [vmem:[#allocation9 + $0xd0] sm:$0xff]
        %v1251 = vld [vmem:[#allocation9 + $0xd8] sm:$0xff]
        %v1252 = vld [vmem:[#allocation9 + $0xe0] sm:$0xff]
        %v1253 = vld [vmem:[#allocation9 + $0xe8] sm:$0xff]
        %v1254 = vld [vmem:[#allocation9 + $0xf0] sm:$0xff]
        %v1255 = vld [vmem:[#allocation9 + $0xf8] sm:$0xff]
        %v1256 = vld [vmem:[#allocation9 + $0x100] sm:$0xff]
        %v1257 = vld [vmem:[#allocation9 + $0x108] sm:$0xff]
        %v1258 = vld [vmem:[#allocation9 + $0x110] sm:$0xff]
        %v1259 = vld [vmem:[#allocation9 + $0x118] sm:$0xff]
        %v1260 = vld [vmem:[#allocation9 + $0x120] sm:$0xff]
        %v1261 = vld [vmem:[#allocation9 + $0x128] sm:$0xff]
        %v1262 = vld [vmem:[#allocation9 + $0x130] sm:$0xff]
        %v1263 = vld [vmem:[#allocation9 + $0x138] sm:$0xff]
        %v1264 = vld [vmem:[#allocation9 + $0x140] sm:$0xff]
        %v1265 = vld [vmem:[#allocation9 + $0x148] sm:$0xff]
        %v1266 = vld [vmem:[#allocation9 + $0x150] sm:$0xff]
        %v1267 = vld [vmem:[#allocation9 + $0x158] sm:$0xff]
        %v1268 = vld [vmem:[#allocation9 + $0x160] sm:$0xff]
        %v1269 = vld [vmem:[#allocation9 + $0x168] sm:$0xff]
        %v1270 = vld [vmem:[#allocation9 + $0x170] sm:$0xff]
        %v1271 = vld [vmem:[#allocation9 + $0x178] sm:$0xff]
        %v1272 = vld [vmem:[#allocation9 + $0x180] sm:$0xff]
        %v1273 = vld [vmem:[#allocation9 + $0x188] sm:$0xff]
        %v1274 = vld [vmem:[#allocation9 + $0x190] sm:$0xff]
        %v1275 = vld [vmem:[#allocation9 + $0x198] sm:$0xff]
        %v1276 = vld [vmem:[#allocation9 + $0x1a0] sm:$0xff]
        %v1277 = vld [vmem:[#allocation9 + $0x1a8] sm:$0xff]
        %v1278 = vld [vmem:[#allocation9 + $0x1b0] sm:$0xff]
        %v1279 = vld [vmem:[#allocation9 + $0x1b8] sm:$0xff]
        %v1280 = vld [vmem:[#allocation9 + $0x1c0] sm:$0xff]
        %v1281 = vld [vmem:[#allocation9 + $0x1c8] sm:$0xff]
        %v1282 = vld [vmem:[#allocation9 + $0x1d0] sm:$0xff]
        %v1283 = vld [vmem:[#allocation9 + $0x1d8] sm:$0xff]
        %v1284 = vld [vmem:[#allocation9 + $0x1e0] sm:$0xff]
        %v1285 = vld [vmem:[#allocation9 + $0x1e8] sm:$0xff]
        %v1286 = vld [vmem:[#allocation9 + $0x1f0] sm:$0xff]
        %v1287 = vld [vmem:[#allocation9 + $0x1f8] sm:$0xff]
        %v1288 = vld [vmem:[#allocation9 + $0x200] sm:$0xff]
        %v1289 = vld [vmem:[#allocation9 + $0x208] sm:$0xff]
        %v1290 = vld [vmem:[#allocation9 + $0x210] sm:$0xff]
        %v1291 = vld [vmem:[#allocation9 + $0x218] sm:$0xff]
        %v1292 = vld [vmem:[#allocation9 + $0x220] sm:$0xff]
        %v1293 = vld [vmem:[#allocation9 + $0x228] sm:$0xff]
        %v1294 = vld [vmem:[#allocation9 + $0x230] sm:$0xff]
        %v1295 = vld [vmem:[#allocation9 + $0x238] sm:$0xff]
        %v1296 = vld [vmem:[#allocation9 + $0x240] sm:$0xff]
        %v1297 = vld [vmem:[#allocation9 + $0x248] sm:$0xff]
        %v1298 = vld [vmem:[#allocation9 + $0x250] sm:$0xff]
        %v1299 = vld [vmem:[#allocation9 + $0x258] sm:$0xff]
        %v1300 = vld [vmem:[#allocation9 + $0x260] sm:$0xff]
        %v1301 = vld [vmem:[#allocation9 + $0x268] sm:$0xff]
        %v1302 = vld [vmem:[#allocation9 + $0x270] sm:$0xff]
        %v1303 = vld [vmem:[#allocation9 + $0x278] sm:$0xff]
        %v1304 = vld [vmem:[#allocation9 + $0x280] sm:$0xff]
        %v1305 = vld [vmem:[#allocation9 + $0x288] sm:$0xff]
        %v1306 = vld [vmem:[#allocation9 + $0x290] sm:$0xff]
        %v1307 = vld [vmem:[#allocation9 + $0x298] sm:$0xff]
        %v1308 = vld [vmem:[#allocation9 + $0x2a0] sm:$0xff]
        %v1309 = vld [vmem:[#allocation9 + $0x2a8] sm:$0xff]
        %v1310 = vld [vmem:[#allocation9 + $0x2b0] sm:$0xff]
        %v1311 = vld [vmem:[#allocation9 + $0x2b8] sm:$0xff]
        %v1312 = vld [vmem:[#allocation9 + $0x2c0] sm:$0xff]
        %v1313 = vld [vmem:[#allocation9 + $0x2c8] sm:$0xff]
        %v1314 = vld [vmem:[#allocation9 + $0x2d0] sm:$0xff]
        %v1315 = vld [vmem:[#allocation9 + $0x2d8] sm:$0xff]
        %v1316 = vld [vmem:[#allocation9 + $0x2e0] sm:$0xff]
        %v1317 = vld [vmem:[#allocation9 + $0x2e8] sm:$0xff]
        %v1318 = vld [vmem:[#allocation9 + $0x2f0] sm:$0xff]
        %v1319 = vld [vmem:[#allocation9 + $0x2f8] sm:$0xff]
        %v1320 = vld [vmem:[#allocation9 + $0x300] sm:$0xff]
        %v1321 = vld [vmem:[#allocation9 + $0x308] sm:$0xff]
        %v1322 = vld [vmem:[#allocation9 + $0x310] sm:$0xff]
        %v1323 = vld [vmem:[#allocation9 + $0x318] sm:$0xff]
        %v1324 = vld [vmem:[#allocation9 + $0x320] sm:$0xff]
        %v1325 = vld [vmem:[#allocation9 + $0x328] sm:$0xff]
        %v1326 = vld [vmem:[#allocation9 + $0x330] sm:$0xff]
        %v1327 = vld [vmem:[#allocation9 + $0x338] sm:$0xff]
        %v1328 = vld [vmem:[#allocation9 + $0x340] sm:$0x77]
        %v1434 = vunpack.c.l.b16 %v1224
        %v1435 = vunpack.c.h.b16 %v1224
        %v1436 = vunpack.c.l.b16 %v1225
        %v1437 = vunpack.c.h.b16 %v1225
        %v1438 = vunpack.c.l.b16 %v1226
        %v1439 = vunpack.c.h.b16 %v1226
        %v1440 = vunpack.c.l.b16 %v1227
        %v1441 = vunpack.c.h.b16 %v1227
        %v1442 = vunpack.c.l.b16 %v1228
        %v1443 = vunpack.c.h.b16 %v1228
        %v1444 = vunpack.c.l.b16 %v1229
        %v1445 = vunpack.c.h.b16 %v1229
        %v1446 = vunpack.c.l.b16 %v1230
        %v1447 = vunpack.c.h.b16 %v1230
        %v1448 = vunpack.c.l.b16 %v1231
        %v1449 = vunpack.c.h.b16 %v1231
        %v1450 = vunpack.c.l.b16 %v1232
        %v1451 = vunpack.c.h.b16 %v1232
        %v1452 = vunpack.c.l.b16 %v1233
        %v1453 = vunpack.c.h.b16 %v1233
        %v1454 = vunpack.c.l.b16 %v1234
        %v1455 = vunpack.c.h.b16 %v1234
        %v1456 = vunpack.c.l.b16 %v1235
        %v1457 = vunpack.c.h.b16 %v1235
        %v1458 = vunpack.c.l.b16 %v1236
        %v1459 = vunpack.c.h.b16 %v1236
        %v1460 = vunpack.c.l.b16 %v1237
        %v1461 = vunpack.c.h.b16 %v1237
        %v1462 = vunpack.c.l.b16 %v1238
        %v1463 = vunpack.c.h.b16 %v1238
        %v1464 = vunpack.c.l.b16 %v1239
        %v1465 = vunpack.c.h.b16 %v1239
        %v1466 = vunpack.c.l.b16 %v1240
        %v1467 = vunpack.c.h.b16 %v1240
        %v1468 = vunpack.c.l.b16 %v1241
        %v1469 = vunpack.c.h.b16 %v1241
        %v1470 = vunpack.c.l.b16 %v1242
        %v1471 = vunpack.c.h.b16 %v1242
        %v1472 = vunpack.c.l.b16 %v1243
        %v1473 = vunpack.c.h.b16 %v1243
        %v1474 = vunpack.c.l.b16 %v1244
        %v1475 = vunpack.c.h.b16 %v1244
        %v1476 = vunpack.c.l.b16 %v1245
        %v1477 = vunpack.c.h.b16 %v1245
        %v1478 = vunpack.c.l.b16 %v1246
        %v1479 = vunpack.c.h.b16 %v1246
        %v1480 = vunpack.c.l.b16 %v1247
        %v1481 = vunpack.c.h.b16 %v1247
        %v1482 = vunpack.c.l.b16 %v1248
        %v1483 = vunpack.c.h.b16 %v1248
        %v1484 = vunpack.c.l.b16 %v1249
        %v1485 = vunpack.c.h.b16 %v1249
        %v1486 = vunpack.c.l.b16 %v1250
        %v1487 = vunpack.c.h.b16 %v1250
        %v1488 = vunpack.c.l.b16 %v1251
        %v1489 = vunpack.c.h.b16 %v1251
        %v1490 = vunpack.c.l.b16 %v1252
        %v1491 = vunpack.c.h.b16 %v1252
        %v1492 = vunpack.c.l.b16 %v1253
        %v1493 = vunpack.c.h.b16 %v1253
        %v1494 = vunpack.c.l.b16 %v1254
        %v1495 = vunpack.c.h.b16 %v1254
        %v1496 = vunpack.c.l.b16 %v1255
        %v1497 = vunpack.c.h.b16 %v1255
        %v1498 = vunpack.c.l.b16 %v1256
        %v1499 = vunpack.c.h.b16 %v1256
        %v1500 = vunpack.c.l.b16 %v1257
        %v1501 = vunpack.c.h.b16 %v1257
        %v1502 = vunpack.c.l.b16 %v1258
        %v1503 = vunpack.c.h.b16 %v1258
        %v1504 = vunpack.c.l.b16 %v1259
        %v1505 = vunpack.c.h.b16 %v1259
        %v1506 = vunpack.c.l.b16 %v1260
        %v1507 = vunpack.c.h.b16 %v1260
        %v1508 = vunpack.c.l.b16 %v1261
        %v1509 = vunpack.c.h.b16 %v1261
        %v1510 = vunpack.c.l.b16 %v1262
        %v1511 = vunpack.c.h.b16 %v1262
        %v1512 = vunpack.c.l.b16 %v1263
        %v1513 = vunpack.c.h.b16 %v1263
        %v1514 = vunpack.c.l.b16 %v1264
        %v1515 = vunpack.c.h.b16 %v1264
        %v1516 = vunpack.c.l.b16 %v1265
        %v1517 = vunpack.c.h.b16 %v1265
        %v1518 = vunpack.c.l.b16 %v1266
        %v1519 = vunpack.c.h.b16 %v1266
        %v1520 = vunpack.c.l.b16 %v1267
        %v1521 = vunpack.c.h.b16 %v1267
        %v1522 = vunpack.c.l.b16 %v1268
        %v1523 = vunpack.c.h.b16 %v1268
        %v1524 = vunpack.c.l.b16 %v1269
        %v1525 = vunpack.c.h.b16 %v1269
        %v1526 = vunpack.c.l.b16 %v1270
        %v1527 = vunpack.c.h.b16 %v1270
        %v1528 = vunpack.c.l.b16 %v1271
        %v1529 = vunpack.c.h.b16 %v1271
        %v1530 = vunpack.c.l.b16 %v1272
        %v1531 = vunpack.c.h.b16 %v1272
        %v1532 = vunpack.c.l.b16 %v1273
        %v1533 = vunpack.c.h.b16 %v1273
        %v1534 = vunpack.c.l.b16 %v1274
        %v1535 = vunpack.c.h.b16 %v1274
        %v1536 = vunpack.c.l.b16 %v1275
        %v1537 = vunpack.c.h.b16 %v1275
        %v1538 = vunpack.c.l.b16 %v1276
        %v1539 = vunpack.c.h.b16 %v1276
        %v1540 = vunpack.c.l.b16 %v1277
        %v1541 = vunpack.c.h.b16 %v1277
        %v1542 = vunpack.c.l.b16 %v1278
        %v1543 = vunpack.c.h.b16 %v1278
        %v1544 = vunpack.c.l.b16 %v1279
        %v1545 = vunpack.c.h.b16 %v1279
        %v1546 = vunpack.c.l.b16 %v1280
        %v1547 = vunpack.c.h.b16 %v1280
        %v1548 = vunpack.c.l.b16 %v1281
        %v1549 = vunpack.c.h.b16 %v1281
        %v1550 = vunpack.c.l.b16 %v1282
        %v1551 = vunpack.c.h.b16 %v1282
        %v1552 = vunpack.c.l.b16 %v1283
        %v1553 = vunpack.c.h.b16 %v1283
        %v1554 = vunpack.c.l.b16 %v1284
        %v1555 = vunpack.c.h.b16 %v1284
        %v1556 = vunpack.c.l.b16 %v1285
        %v1557 = vunpack.c.h.b16 %v1285
        %v1558 = vunpack.c.l.b16 %v1286
        %v1559 = vunpack.c.h.b16 %v1286
        %v1560 = vunpack.c.l.b16 %v1287
        %v1561 = vunpack.c.h.b16 %v1287
        %v1562 = vunpack.c.l.b16 %v1288
        %v1563 = vunpack.c.h.b16 %v1288
        %v1564 = vunpack.c.l.b16 %v1289
        %v1565 = vunpack.c.h.b16 %v1289
        %v1566 = vunpack.c.l.b16 %v1290
        %v1567 = vunpack.c.h.b16 %v1290
        %v1568 = vunpack.c.l.b16 %v1291
        %v1569 = vunpack.c.h.b16 %v1291
        %v1570 = vunpack.c.l.b16 %v1292
        %v1571 = vunpack.c.h.b16 %v1292
        %v1572 = vunpack.c.l.b16 %v1293
        %v1573 = vunpack.c.h.b16 %v1293
        %v1574 = vunpack.c.l.b16 %v1294
        %v1575 = vunpack.c.h.b16 %v1294
        %v1576 = vunpack.c.l.b16 %v1295
        %v1577 = vunpack.c.h.b16 %v1295
        %v1578 = vunpack.c.l.b16 %v1296
        %v1579 = vunpack.c.h.b16 %v1296
        %v1580 = vunpack.c.l.b16 %v1297
        %v1581 = vunpack.c.h.b16 %v1297
        %v1582 = vunpack.c.l.b16 %v1298
        %v1583 = vunpack.c.h.b16 %v1298
        %v1584 = vunpack.c.l.b16 %v1299
        %v1585 = vunpack.c.h.b16 %v1299
        %v1586 = vunpack.c.l.b16 %v1300
        %v1587 = vunpack.c.h.b16 %v1300
        %v1588 = vunpack.c.l.b16 %v1301
        %v1589 = vunpack.c.h.b16 %v1301
        %v1590 = vunpack.c.l.b16 %v1302
        %v1591 = vunpack.c.h.b16 %v1302
        %v1592 = vunpack.c.l.b16 %v1303
        %v1593 = vunpack.c.h.b16 %v1303
        %v1594 = vunpack.c.l.b16 %v1304
        %v1595 = vunpack.c.h.b16 %v1304
        %v1596 = vunpack.c.l.b16 %v1305
        %v1597 = vunpack.c.h.b16 %v1305
        %v1598 = vunpack.c.l.b16 %v1306
        %v1599 = vunpack.c.h.b16 %v1306
        %v1600 = vunpack.c.l.b16 %v1307
        %v1601 = vunpack.c.h.b16 %v1307
        %v1602 = vunpack.c.l.b16 %v1308
        %v1603 = vunpack.c.h.b16 %v1308
        %v1604 = vunpack.c.l.b16 %v1309
        %v1605 = vunpack.c.h.b16 %v1309
        %v1606 = vunpack.c.l.b16 %v1310
        %v1607 = vunpack.c.h.b16 %v1310
        %v1608 = vunpack.c.l.b16 %v1311
        %v1609 = vunpack.c.h.b16 %v1311
        %v1610 = vunpack.c.l.b16 %v1312
        %v1611 = vunpack.c.h.b16 %v1312
        %v1612 = vunpack.c.l.b16 %v1313
        %v1613 = vunpack.c.h.b16 %v1313
        %v1614 = vunpack.c.l.b16 %v1314
        %v1615 = vunpack.c.h.b16 %v1314
        %v1616 = vunpack.c.l.b16 %v1315
        %v1617 = vunpack.c.h.b16 %v1315
        %v1618 = vunpack.c.l.b16 %v1316
        %v1619 = vunpack.c.h.b16 %v1316
        %v1620 = vunpack.c.l.b16 %v1317
        %v1621 = vunpack.c.h.b16 %v1317
        %v1622 = vunpack.c.l.b16 %v1318
        %v1623 = vunpack.c.h.b16 %v1318
        %v1624 = vunpack.c.l.b16 %v1319
        %v1625 = vunpack.c.h.b16 %v1319
        %v1626 = vunpack.c.l.b16 %v1320
        %v1627 = vunpack.c.h.b16 %v1320
        %v1628 = vunpack.c.l.b16 %v1321
        %v1629 = vunpack.c.h.b16 %v1321
        %v1630 = vunpack.c.l.b16 %v1322
        %v1631 = vunpack.c.h.b16 %v1322
        %v1632 = vunpack.c.l.b16 %v1323
        %v1633 = vunpack.c.h.b16 %v1323
        %v1634 = vunpack.c.l.b16 %v1324
        %v1635 = vunpack.c.h.b16 %v1324
        %v1636 = vunpack.c.l.b16 %v1325
        %v1637 = vunpack.c.h.b16 %v1325
        %v1638 = vunpack.c.l.b16 %v1326
        %v1639 = vunpack.c.h.b16 %v1326
        %v1640 = vunpack.c.l.b16 %v1327
        %v1641 = vunpack.c.h.b16 %v1327
        %v1642 = vunpack.c.l.b16 %v1328
        %v1643 = vunpack.c.h.b16 %v1328
        %v1644 = vpack.c.b16 %v1436, %v1434
        %v1645 = vpack.c.b16 %v1437, %v1435
        %v1646 = vpack.c.b16 %v1440, %v1438
        %v1647 = vpack.c.b16 %v1441, %v1439
        %v1648 = vpack.c.b16 %v1444, %v1442
        %v1649 = vpack.c.b16 %v1445, %v1443
        %v1650 = vpack.c.b16 %v1448, %v1446
        %v1651 = vpack.c.b16 %v1449, %v1447
        %v1652 = vpack.c.b16 %v1452, %v1450
        %v1653 = vpack.c.b16 %v1453, %v1451
        %v1654 = vpack.c.b16 %v1456, %v1454
        %v1655 = vpack.c.b16 %v1457, %v1455
        %v1656 = vpack.c.b16 %v1460, %v1458
        %v1657 = vpack.c.b16 %v1461, %v1459
        %v1658 = vpack.c.b16 %v1464, %v1462
        %v1659 = vpack.c.b16 %v1465, %v1463
        %v1660 = vpack.c.b16 %v1468, %v1466
        %v1661 = vpack.c.b16 %v1469, %v1467
        %v1662 = vpack.c.b16 %v1472, %v1470
        %v1663 = vpack.c.b16 %v1473, %v1471
        %v1664 = vpack.c.b16 %v1476, %v1474
        %v1665 = vpack.c.b16 %v1477, %v1475
        %v1666 = vpack.c.b16 %v1480, %v1478
        %v1667 = vpack.c.b16 %v1481, %v1479
        %v1668 = vpack.c.b16 %v1484, %v1482
        %v1669 = vpack.c.b16 %v1485, %v1483
        %v1670 = vpack.c.b16 %v1488, %v1486
        %v1671 = vpack.c.b16 %v1489, %v1487
        %v1672 = vpack.c.b16 %v1492, %v1490
        %v1673 = vpack.c.b16 %v1493, %v1491
        %v1674 = vpack.c.b16 %v1496, %v1494
        %v1675 = vpack.c.b16 %v1497, %v1495
        %v1676 = vpack.c.b16 %v1500, %v1498
        %v1677 = vpack.c.b16 %v1501, %v1499
        %v1678 = vpack.c.b16 %v1504, %v1502
        %v1679 = vpack.c.b16 %v1505, %v1503
        %v1680 = vpack.c.b16 %v1508, %v1506
        %v1681 = vpack.c.b16 %v1509, %v1507
        %v1682 = vpack.c.b16 %v1512, %v1510
        %v1683 = vpack.c.b16 %v1513, %v1511
        %v1684 = vpack.c.b16 %v1516, %v1514
        %v1685 = vpack.c.b16 %v1517, %v1515
        %v1686 = vpack.c.b16 %v1520, %v1518
        %v1687 = vpack.c.b16 %v1521, %v1519
        %v1688 = vpack.c.b16 %v1524, %v1522
        %v1689 = vpack.c.b16 %v1525, %v1523
        %v1690 = vpack.c.b16 %v1528, %v1526
        %v1691 = vpack.c.b16 %v1529, %v1527
        %v1692 = vpack.c.b16 %v1532, %v1530
        %v1693 = vpack.c.b16 %v1533, %v1531
        %v1694 = vpack.c.b16 %v1536, %v1534
        %v1695 = vpack.c.b16 %v1537, %v1535
        %v1696 = vpack.c.b16 %v1540, %v1538
        %v1697 = vpack.c.b16 %v1541, %v1539
        %v1698 = vpack.c.b16 %v1544, %v1542
        %v1699 = vpack.c.b16 %v1545, %v1543
        %v1700 = vpack.c.b16 %v1548, %v1546
        %v1701 = vpack.c.b16 %v1549, %v1547
        %v1702 = vpack.c.b16 %v1552, %v1550
        %v1703 = vpack.c.b16 %v1553, %v1551
        %v1704 = vpack.c.b16 %v1556, %v1554
        %v1705 = vpack.c.b16 %v1557, %v1555
        %v1706 = vpack.c.b16 %v1560, %v1558
        %v1707 = vpack.c.b16 %v1561, %v1559
        %v1708 = vpack.c.b16 %v1564, %v1562
        %v1709 = vpack.c.b16 %v1565, %v1563
        %v1710 = vpack.c.b16 %v1568, %v1566
        %v1711 = vpack.c.b16 %v1569, %v1567
        %v1712 = vpack.c.b16 %v1572, %v1570
        %v1713 = vpack.c.b16 %v1573, %v1571
        %v1714 = vpack.c.b16 %v1576, %v1574
        %v1715 = vpack.c.b16 %v1577, %v1575
        %v1716 = vpack.c.b16 %v1580, %v1578
        %v1717 = vpack.c.b16 %v1581, %v1579
        %v1718 = vpack.c.b16 %v1584, %v1582
        %v1719 = vpack.c.b16 %v1585, %v1583
        %v1720 = vpack.c.b16 %v1588, %v1586
        %v1721 = vpack.c.b16 %v1589, %v1587
        %v1722 = vpack.c.b16 %v1592, %v1590
        %v1723 = vpack.c.b16 %v1593, %v1591
        %v1724 = vpack.c.b16 %v1596, %v1594
        %v1725 = vpack.c.b16 %v1597, %v1595
        %v1726 = vpack.c.b16 %v1600, %v1598
        %v1727 = vpack.c.b16 %v1601, %v1599
        %v1728 = vpack.c.b16 %v1604, %v1602
        %v1729 = vpack.c.b16 %v1605, %v1603
        %v1730 = vpack.c.b16 %v1608, %v1606
        %v1731 = vpack.c.b16 %v1609, %v1607
        %v1732 = vpack.c.b16 %v1612, %v1610
        %v1733 = vpack.c.b16 %v1613, %v1611
        %v1734 = vpack.c.b16 %v1616, %v1614
        %v1735 = vpack.c.b16 %v1617, %v1615
        %v1736 = vpack.c.b16 %v1620, %v1618
        %v1737 = vpack.c.b16 %v1621, %v1619
        %v1738 = vpack.c.b16 %v1624, %v1622
        %v1739 = vpack.c.b16 %v1625, %v1623
        %v1740 = vpack.c.b16 %v1628, %v1626
        %v1741 = vpack.c.b16 %v1629, %v1627
        %v1742 = vpack.c.b16 %v1632, %v1630
        %v1743 = vpack.c.b16 %v1633, %v1631
        %v1744 = vpack.c.b16 %v1636, %v1634
        %v1745 = vpack.c.b16 %v1637, %v1635
        %v1746 = vpack.c.b16 %v1640, %v1638
        %v1747 = vpack.c.b16 %v1641, %v1639
        %v1748 = vpack.c.b16 %v1642, %v1642
        %v1749 = vpack.c.b16 %v1643, %v1643
        %vm1854 = vcmask 572416
        %v1856 = vsel %vm1854, %v1223, 0
        %vm1858 = vcmask 1042432
        %v1860 = vsel %vm1858, %v1748, 0
        %v1863 = vsel %vm1858, %v1749, 0
        %1865 = vmatpush.bf16.msra.mxu0 %v1658
        %1866 = vmatpush.bf16.msra.mxu0 %v1656
        %1867 = vmatpush.bf16.msra.mxu0 %v1654
        %1868 = vmatpush.bf16.msra.mxu0 %v1652
        %1869 = vmatpush.bf16.msra.mxu0 %v1650
        %1870 = vmatpush.bf16.msra.mxu0 %v1648
        %1871 = vmatpush.bf16.msra.mxu0 %v1646
        %1872 = vmatpush.bf16.msra.mxu0 %v1644
        %1873 = vmatmul.bf16.gmra.mxu0 %v1217
        %v1874 = vpop.f32.mrf.mxu0
        %v1875 = vadd.f32 0.0, %v1874
        %v1876 = vpop.f32.mrf.mxu0
        %1877 = vdwg.mxu0
        %1878 = vmatpush.bf16.msra.mxu0 %v1674
        %1879 = vmatpush.bf16.msra.mxu0 %v1672
        %1880 = vmatpush.bf16.msra.mxu0 %v1670
        %1881 = vmatpush.bf16.msra.mxu0 %v1668
        %1882 = vmatpush.bf16.msra.mxu0 %v1666
        %1883 = vmatpush.bf16.msra.mxu0 %v1664
        %1884 = vmatpush.bf16.msra.mxu0 %v1662
        %1885 = vmatpush.bf16.msra.mxu0 %v1660
        %1886 = vmatmul.bf16.gmra.mxu0 %v1218
        %v1887 = vpop.f32.mrf.mxu0
        %v1888 = vadd.f32 %v1875, %v1887
        %v1889 = vpop.f32.mrf.mxu0
        %1890 = vdwg.mxu0
        %1891 = vmatpush.bf16.msra.mxu0 %v1690
        %1892 = vmatpush.bf16.msra.mxu0 %v1688
        %1893 = vmatpush.bf16.msra.mxu0 %v1686
        %1894 = vmatpush.bf16.msra.mxu0 %v1684
        %1895 = vmatpush.bf16.msra.mxu0 %v1682
        %1896 = vmatpush.bf16.msra.mxu0 %v1680
        %1897 = vmatpush.bf16.msra.mxu0 %v1678
        %1898 = vmatpush.bf16.msra.mxu0 %v1676
        %1899 = vmatmul.bf16.gmra.mxu0 %v1219
        %v1900 = vpop.f32.mrf.mxu0
        %v1901 = vadd.f32 %v1888, %v1900
        %v1902 = vpop.f32.mrf.mxu0
        %1903 = vdwg.mxu0
        %1904 = vmatpush.bf16.msra.mxu0 %v1706
        %1905 = vmatpush.bf16.msra.mxu0 %v1704
        %1906 = vmatpush.bf16.msra.mxu0 %v1702
        %1907 = vmatpush.bf16.msra.mxu0 %v1700
        %1908 = vmatpush.bf16.msra.mxu0 %v1698
        %1909 = vmatpush.bf16.msra.mxu0 %v1696
        %1910 = vmatpush.bf16.msra.mxu0 %v1694
        %1911 = vmatpush.bf16.msra.mxu0 %v1692
        %1912 = vmatmul.bf16.gmra.mxu0 %v1220
        %v1913 = vpop.f32.mrf.mxu0
        %v1914 = vadd.f32 %v1901, %v1913
        %v1915 = vpop.f32.mrf.mxu0
        %1916 = vdwg.mxu0
        %1917 = vmatpush.bf16.msra.mxu0 %v1722
        %1918 = vmatpush.bf16.msra.mxu0 %v1720
        %1919 = vmatpush.bf16.msra.mxu0 %v1718
        %1920 = vmatpush.bf16.msra.mxu0 %v1716
        %1921 = vmatpush.bf16.msra.mxu0 %v1714
        %1922 = vmatpush.bf16.msra.mxu0 %v1712
        %1923 = vmatpush.bf16.msra.mxu0 %v1710
        %1924 = vmatpush.bf16.msra.mxu0 %v1708
        %1925 = vmatmul.bf16.gmra.mxu0 %v1221
        %v1926 = vpop.f32.mrf.mxu0
        %v1927 = vadd.f32 %v1914, %v1926
        %v1928 = vpop.f32.mrf.mxu0
        %1929 = vdwg.mxu0
        %1930 = vmatpush.bf16.msra.mxu0 %v1738
        %1931 = vmatpush.bf16.msra.mxu0 %v1736
        %1932 = vmatpush.bf16.msra.mxu0 %v1734
        %1933 = vmatpush.bf16.msra.mxu0 %v1732
        %1934 = vmatpush.bf16.msra.mxu0 %v1730
        %1935 = vmatpush.bf16.msra.mxu0 %v1728
        %1936 = vmatpush.bf16.msra.mxu0 %v1726
        %1937 = vmatpush.bf16.msra.mxu0 %v1724
        %1938 = vmatmul.bf16.gmra.mxu0 %v1222
        %v1939 = vpop.f32.mrf.mxu0
        %v1940 = vadd.f32 %v1927, %v1939
        %v1941 = vpop.f32.mrf.mxu0
        %1942 = vdwg.mxu0
        %1943 = vmatpush.bf16.msra.mxu0 0
        %1944 = vmatpush.bf16.msra.mxu0 0
        %1945 = vmatpush.bf16.msra.mxu0 0
        %1946 = vmatpush.bf16.msra.mxu0 %v1860
        %1947 = vmatpush.bf16.msra.mxu0 %v1746
        %1948 = vmatpush.bf16.msra.mxu0 %v1744
        %1949 = vmatpush.bf16.msra.mxu0 %v1742
        %1950 = vmatpush.bf16.msra.mxu0 %v1740
        %1951 = vmatmul.bf16.gmra.mxu0 %v1856
        %v1952 = vpop.f32.mrf.mxu0
        %v1953 = vadd.f32 %v1940, %v1952
        %v1954 = vpop.f32.mrf.mxu0
        %1955 = vdwg.mxu0
        %1956 = vmatpush.bf16.msra.mxu0 %v1659
        %1957 = vmatpush.bf16.msra.mxu0 %v1657
        %1958 = vmatpush.bf16.msra.mxu0 %v1655
        %1959 = vmatpush.bf16.msra.mxu0 %v1653
        %1960 = vmatpush.bf16.msra.mxu0 %v1651
        %1961 = vmatpush.bf16.msra.mxu0 %v1649
        %1962 = vmatpush.bf16.msra.mxu0 %v1647
        %1963 = vmatpush.bf16.msra.mxu0 %v1645
        %1964 = vmatmul.bf16.gmra.mxu0 %v1217
        %v1965 = vpop.f32.mrf.mxu0
        %v1966 = vadd.f32 0.0, %v1965
        %v1967 = vpop.f32.mrf.mxu0
        %1968 = vdwg.mxu0
        %1969 = vmatpush.bf16.msra.mxu0 %v1675
        %1970 = vmatpush.bf16.msra.mxu0 %v1673
        %1971 = vmatpush.bf16.msra.mxu0 %v1671
        %1972 = vmatpush.bf16.msra.mxu0 %v1669
        %1973 = vmatpush.bf16.msra.mxu0 %v1667
        %1974 = vmatpush.bf16.msra.mxu0 %v1665
        %1975 = vmatpush.bf16.msra.mxu0 %v1663
        %1976 = vmatpush.bf16.msra.mxu0 %v1661
        %1977 = vmatmul.bf16.gmra.mxu0 %v1218
        %v1978 = vpop.f32.mrf.mxu0
        %v1979 = vadd.f32 %v1966, %v1978
        %v1980 = vpop.f32.mrf.mxu0
        %1981 = vdwg.mxu0
        %1982 = vmatpush.bf16.msra.mxu0 %v1691
        %1983 = vmatpush.bf16.msra.mxu0 %v1689
        %1984 = vmatpush.bf16.msra.mxu0 %v1687
        %1985 = vmatpush.bf16.msra.mxu0 %v1685
        %1986 = vmatpush.bf16.msra.mxu0 %v1683
        %1987 = vmatpush.bf16.msra.mxu0 %v1681
        %1988 = vmatpush.bf16.msra.mxu0 %v1679
        %1989 = vmatpush.bf16.msra.mxu0 %v1677
        %1990 = vmatmul.bf16.gmra.mxu0 %v1219
        %v1991 = vpop.f32.mrf.mxu0
        %v1992 = vadd.f32 %v1979, %v1991
        %v1993 = vpop.f32.mrf.mxu0
        %1994 = vdwg.mxu0
        %1995 = vmatpush.bf16.msra.mxu0 %v1707
        %1996 = vmatpush.bf16.msra.mxu0 %v1705
        %1997 = vmatpush.bf16.msra.mxu0 %v1703
        %1998 = vmatpush.bf16.msra.mxu0 %v1701
        %1999 = vmatpush.bf16.msra.mxu0 %v1699
        %2000 = vmatpush.bf16.msra.mxu0 %v1697
        %2001 = vmatpush.bf16.msra.mxu0 %v1695
        %2002 = vmatpush.bf16.msra.mxu0 %v1693
        %2003 = vmatmul.bf16.gmra.mxu0 %v1220
        %v2004 = vpop.f32.mrf.mxu0
        %v2005 = vadd.f32 %v1992, %v2004
        %v2006 = vpop.f32.mrf.mxu0
        %2007 = vdwg.mxu0
        %2008 = vmatpush.bf16.msra.mxu0 %v1723
        %2009 = vmatpush.bf16.msra.mxu0 %v1721
        %2010 = vmatpush.bf16.msra.mxu0 %v1719
        %2011 = vmatpush.bf16.msra.mxu0 %v1717
        %2012 = vmatpush.bf16.msra.mxu0 %v1715
        %2013 = vmatpush.bf16.msra.mxu0 %v1713
        %2014 = vmatpush.bf16.msra.mxu0 %v1711
        %2015 = vmatpush.bf16.msra.mxu0 %v1709
        %2016 = vmatmul.bf16.gmra.mxu0 %v1221
        %v2017 = vpop.f32.mrf.mxu0
        %v2018 = vadd.f32 %v2005, %v2017
        %v2019 = vpop.f32.mrf.mxu0
        %2020 = vdwg.mxu0
        %2021 = vmatpush.bf16.msra.mxu0 %v1739
        %2022 = vmatpush.bf16.msra.mxu0 %v1737
        %2023 = vmatpush.bf16.msra.mxu0 %v1735
        %2024 = vmatpush.bf16.msra.mxu0 %v1733
        %2025 = vmatpush.bf16.msra.mxu0 %v1731
        %2026 = vmatpush.bf16.msra.mxu0 %v1729
        %2027 = vmatpush.bf16.msra.mxu0 %v1727
        %2028 = vmatpush.bf16.msra.mxu0 %v1725
        %2029 = vmatmul.bf16.gmra.mxu0 %v1222
        %v2030 = vpop.f32.mrf.mxu0
        %v2031 = vadd.f32 %v2018, %v2030
        %v2032 = vpop.f32.mrf.mxu0
        %2033 = vdwg.mxu0
        %2034 = vmatpush.bf16.msra.mxu0 0
        %2035 = vmatpush.bf16.msra.mxu0 0
        %2036 = vmatpush.bf16.msra.mxu0 0
        %2037 = vmatpush.bf16.msra.mxu0 %v1863
        %2038 = vmatpush.bf16.msra.mxu0 %v1747
        %2039 = vmatpush.bf16.msra.mxu0 %v1745
        %2040 = vmatpush.bf16.msra.mxu0 %v1743
        %2041 = vmatpush.bf16.msra.mxu0 %v1741
        %2042 = vmatmul.bf16.gmra.mxu0 %v1856
        %v2043 = vpop.f32.mrf.mxu0
        %v2044 = vadd.f32 %v2031, %v2043
        %v2045 = vpop.f32.mrf.mxu0
        %2046 = vdwg.mxu0
        %v2047 = vpack.c.bf16 %v2044, %v1953
        %2049 = vrot.lane.b32.xlu0 %v2047, 17
        %v2050 = vpop.permute.xlu0 %2049
        %v2051 = vrot.slane %v2050, 4
        %vm2052 = vcmask 138240
        %v2053 = vsel %vm2052, %v2051, %v2050
        %vm2056 = vcmask 1043592
        %vm2057 = vcmask 1047556
        %vm2058 = vmor %vm2057, %vm2056
        %2059 = vst.msk [vmem:[#allocation4] sm:$0xff] %vm2058, %v2053
        %2060 = vst.msk [vmem:[#allocation4 + $0x8] sm:$0xf] %vm455, %v2051
        %v2061 = vld [vmem:[#allocation4] sm:$0xff]
        %2062 = vst [vmem:[#allocation5] sm:$0xff] %v2061
        %v2063 = vld [vmem:[#allocation4] sm:$0xff]
        %v2064 = vld [vmem:[#allocation4 + $0x8] sm:$0xf]
        %2067 = vrot.lane.b32.xlu0 %v2063, 127
        %v2068 = vpop.permute.xlu0 %2067
        %2069 = vrot.lane.b32.xlu0 %v2064, 127
        %v2070 = vpop.permute.xlu0 %2069
        %v2071 = vrot.slane %v2068, 4
        %v2072 = vrot.slane %v2070, 4
        %v2073 = vsel %vm509, %v2071, %v2072
        %v2074 = vsel %vm511, %v2068, %v2073
        %2076 = vst [vmem:[#allocation5 + $0x8] sm:$0xff] %v2074
        %v2077 = vld [vmem:[#allocation4] sm:$0xff]
        %v2078 = vld [vmem:[#allocation4 + $0x8] sm:$0xf]
        %2081 = vrot.lane.b32.xlu0 %v2077, 126
        %v2082 = vpop.permute.xlu0 %2081
        %2083 = vrot.lane.b32.xlu0 %v2078, 126
        %v2084 = vpop.permute.xlu0 %2083
        %v2085 = vrot.slane %v2082, 4
        %v2086 = vrot.slane %v2084, 4
        %v2087 = vsel %vm509, %v2085, %v2086
        %v2088 = vsel %vm557, %v2082, %v2087
        %2090 = vst [vmem:[#allocation5 + $0x10] sm:$0xff] %v2088
        %v2091 = vld [vmem:[#allocation4] sm:$0xff]
        %v2092 = vld [vmem:[#allocation4 + $0x8] sm:$0xf]
        %2095 = vrot.lane.b32.xlu0 %v2091, 112
        %v2096 = vpop.permute.xlu0 %2095
        %2097 = vrot.lane.b32.xlu0 %v2092, 112
        %v2098 = vpop.permute.xlu0 %2097
        %v2099 = vrot.slane %v2096, 4
        %v2100 = vrot.slane %v2098, 4
        %v2101 = vsel %vm509, %v2099, %v2100
        %vm2102 = vcmask 916480
        %v2103 = vsel %vm2102, %v2096, %v2101
        %2105 = vst [vmem:[#allocation5 + $0x18] sm:$0xff] %v2103
        %v2106 = vld [vmem:[#allocation4] sm:$0xff]
        %v2107 = vld [vmem:[#allocation4 + $0x8] sm:$0xf]
        %2110 = vrot.lane.b32.xlu0 %v2106, 111
        %v2111 = vpop.permute.xlu0 %2110
        %2112 = vrot.lane.b32.xlu0 %v2107, 111
        %v2113 = vpop.permute.xlu0 %2112
        %v2114 = vrot.slane %v2111, 4
        %v2115 = vrot.slane %v2113, 4
        %v2116 = vsel %vm509, %v2114, %v2115
        %vm2117 = vcmask 908288
        %v2118 = vsel %vm2117, %v2111, %v2116
        %2120 = vst [vmem:[#allocation5 + $0x20] sm:$0xff] %v2118
        %v2121 = vld [vmem:[#allocation4] sm:$0xff]
        %v2122 = vld [vmem:[#allocation4 + $0x8] sm:$0xf]
        %2125 = vrot.lane.b32.xlu0 %v2121, 110
        %v2126 = vpop.permute.xlu0 %2125
        %2127 = vrot.lane.b32.xlu0 %v2122, 110
        %v2128 = vpop.permute.xlu0 %2127
        %v2129 = vrot.slane %v2126, 4
        %v2130 = vrot.slane %v2128, 4
        %v2131 = vsel %vm509, %v2129, %v2130
        %vm2132 = vcmask 900096
        %v2133 = vsel %vm2132, %v2126, %v2131
        %2135 = vst [vmem:[#allocation5 + $0x28] sm:$0xff] %v2133
        %v2136 = vld [vmem:[#allocation4] sm:$0xff]
        %v2137 = vld [vmem:[#allocation4 + $0x8] sm:$0xf]
        %2140 = vrot.lane.b32.xlu0 %v2136, 96
        %v2141 = vpop.permute.xlu0 %2140
        %2142 = vrot.lane.b32.xlu0 %v2137, 96
        %v2143 = vpop.permute.xlu0 %2142
        %v2144 = vrot.slane %v2141, 4
        %v2145 = vrot.slane %v2143, 4
        %v2146 = vsel %vm509, %v2144, %v2145
        %v2147 = vsel %vm688, %v2141, %v2146
        %2149 = vst [vmem:[#allocation5 + $0x30] sm:$0xff] %v2147
        %v2150 = vld [vmem:[#allocation4] sm:$0xff]
        %v2151 = vld [vmem:[#allocation4 + $0x8] sm:$0xf]
        %2154 = vrot.lane.b32.xlu0 %v2150, 95
        %v2155 = vpop.permute.xlu0 %2154
        %2156 = vrot.lane.b32.xlu0 %v2151, 95
        %v2157 = vpop.permute.xlu0 %2156
        %v2158 = vrot.slane %v2155, 4
        %v2159 = vrot.slane %v2157, 4
        %v2160 = vsel %vm509, %v2158, %v2159
        %vm2161 = vcmask 777216
        %v2162 = vsel %vm2161, %v2155, %v2160
        %2164 = vst [vmem:[#allocation5 + $0x38] sm:$0xff] %v2162
        %v2165 = vld [vmem:[#allocation4] sm:$0xff]
        %v2166 = vld [vmem:[#allocation4 + $0x8] sm:$0xf]
        %2169 = vrot.lane.b32.xlu0 %v2165, 94
        %v2170 = vpop.permute.xlu0 %2169
        %2171 = vrot.lane.b32.xlu0 %v2166, 94
        %v2172 = vpop.permute.xlu0 %2171
        %v2173 = vrot.slane %v2170, 4
        %v2174 = vrot.slane %v2172, 4
        %v2175 = vsel %vm509, %v2173, %v2174
        %vm2176 = vcmask 769024
        %v2177 = vsel %vm2176, %v2170, %v2175
        %2179 = vst [vmem:[#allocation5 + $0x40] sm:$0xff] %v2177
        %v2180 = vld [vmem:[%s4] sm:$0xf]
        %v2181 = vld [vmem:[%s4 + $0x4] sm:$0xf]
        %v2182 = vld [vmem:[#allocation5] sm:$0xff]
        %v2183 = vld [vmem:[#allocation5 + $0x8] sm:$0xff]
        %v2184 = vld [vmem:[#allocation5 + $0x10] sm:$0xff]
        %v2185 = vld [vmem:[#allocation5 + $0x18] sm:$0xff]
        %v2186 = vld [vmem:[#allocation5 + $0x20] sm:$0xff]
        %v2187 = vld [vmem:[#allocation5 + $0x28] sm:$0xff]
        %v2188 = vld [vmem:[#allocation5 + $0x30] sm:$0xff]
        %v2189 = vld [vmem:[#allocation5 + $0x38] sm:$0xff]
        %v2190 = vld [vmem:[#allocation5 + $0x40] sm:$0xff]
        %v2191 = vld [vmem:[%s5] sm:$0xff]
        %v2192 = vld [vmem:[%s5 + $0x8] sm:$0xff]
        %2194 = vset.pattern.permute.xlu0 0
        %2195 = vperm.xlu0 %2194, %v2191
        %v2196 = vpop.permute.xlu0 %2195
        %2199 = vset.pattern.permute.xlu0 0
        %2200 = vperm.xlu0 %2199, %v2192
        %v2201 = vpop.permute.xlu0 %2200
        %v2205 = vunpack.c.l.b16 %v2180
        %v2206 = vunpack.c.l.b16 %v2181
        %v2207 = vpack.c.b16 %v2206, %v2205
        %v2217 = vunpack.c.l.b16 %v2182
        %v2218 = vunpack.c.h.b16 %v2182
        %v2219 = vunpack.c.l.b16 %v2183
        %v2220 = vunpack.c.h.b16 %v2183
        %v2221 = vunpack.c.l.b16 %v2184
        %v2222 = vunpack.c.h.b16 %v2184
        %v2223 = vunpack.c.l.b16 %v2185
        %v2224 = vunpack.c.h.b16 %v2185
        %v2225 = vunpack.c.l.b16 %v2186
        %v2226 = vunpack.c.h.b16 %v2186
        %v2227 = vunpack.c.l.b16 %v2187
        %v2228 = vunpack.c.h.b16 %v2187
        %v2229 = vunpack.c.l.b16 %v2188
        %v2230 = vunpack.c.h.b16 %v2188
        %v2231 = vunpack.c.l.b16 %v2189
        %v2232 = vunpack.c.h.b16 %v2189
        %v2233 = vunpack.c.l.b16 %v2190
        %v2234 = vunpack.c.h.b16 %v2190
        %v2235 = vpack.c.b16 %v2219, %v2217
        %v2236 = vpack.c.b16 %v2220, %v2218
        %v2237 = vpack.c.b16 %v2223, %v2221
        %v2238 = vpack.c.b16 %v2224, %v2222
        %v2239 = vpack.c.b16 %v2227, %v2225
        %v2240 = vpack.c.b16 %v2228, %v2226
        %v2241 = vpack.c.b16 %v2231, %v2229
        %v2242 = vpack.c.b16 %v2232, %v2230
        %v2243 = vpack.c.b16 %v2233, %v2233
        %v2244 = vpack.c.b16 %v2234, %v2234
        %vm2253 = vcmask 588800
        %v2255 = vsel %vm2253, %v2207, 0
        %v2258 = vsel %vm1107, %v2243, 0
        %v2261 = vsel %vm1107, %v2244, 0
        %2263 = vmatpush.bf16.msra.mxu0 0
        %2264 = vmatpush.bf16.msra.mxu0 0
        %2265 = vmatpush.bf16.msra.mxu0 0
        %2266 = vmatpush.bf16.msra.mxu0 %v2258
        %2267 = vmatpush.bf16.msra.mxu0 %v2241
        %2268 = vmatpush.bf16.msra.mxu0 %v2239
        %2269 = vmatpush.bf16.msra.mxu0 %v2237
        %2270 = vmatpush.bf16.msra.mxu0 %v2235
        %2271 = vmatmul.bf16.gmra.mxu0 %v2255
        %v2272 = vpop.f32.mrf.mxu0
        %v2273 = vadd.f32 %v2196, %v2272
        %v2274 = vpop.f32.mrf.mxu0
        %v2275 = vadd.f32 %v2201, %v2274
        %2276 = vdwg.mxu0
        %2277 = vmatpush.bf16.msra.mxu0 0
        %2278 = vmatpush.bf16.msra.mxu0 0
        %2279 = vmatpush.bf16.msra.mxu0 0
        %2280 = vmatpush.bf16.msra.mxu0 %v2261
        %2281 = vmatpush.bf16.msra.mxu0 %v2242
        %2282 = vmatpush.bf16.msra.mxu0 %v2240
        %2283 = vmatpush.bf16.msra.mxu0 %v2238
        %2284 = vmatpush.bf16.msra.mxu0 %v2236
        %2285 = vmatmul.bf16.gmra.mxu0 %v2255
        %v2286 = vpop.f32.mrf.mxu0
        %v2287 = vadd.f32 %v2196, %v2286
        %v2288 = vpop.f32.mrf.mxu0
        %v2289 = vadd.f32 %v2201, %v2288
        %2290 = vdwg.mxu0
        %v2291 = vmax.f32 %v2273, 0.0
        %v2292 = vmax.f32 %v2287, 0.0
        %v2293 = vmax.f32 %v2275, 0.0
        %v2294 = vmax.f32 %v2289, 0.0
        %v2295 = vpack.c.bf16 %v2292, %v2291
        %v2296 = vpack.c.bf16 %v2294, %v2293
        %2297 = vst [vmem:[#allocation6] sm:$0xff] %v2295
        %2298 = vst [vmem:[#allocation6 + $0x8] sm:$0xff] %v2296
        %v2299 = vld [vmem:[#allocation6] sm:$0xff]
        %v2300 = vld [vmem:[#allocation6 + $0x8] sm:$0xff]
        %v2301 = vunpack.c.l.bf16 %v2299
        %v2302 = vunpack.c.h.bf16 %v2299
        %v2303 = vunpack.c.l.bf16 %v2300
        %v2304 = vunpack.c.h.bf16 %v2300
        %2309 = vrot.lane.b32.xlu0 %v2301, 127
        %v2310 = vpop.permute.xlu0 %2309
        %2311 = vrot.lane.b32.xlu0 %v2302, 127
        %v2312 = vpop.permute.xlu0 %2311
        %2313 = vrot.lane.b32.xlu0 %v2303, 127
        %v2314 = vpop.permute.xlu0 %2313
        %2315 = vrot.lane.b32.xlu0 %v2304, 127
        %v2316 = vpop.permute.xlu0 %2315
        %v2317 = vsel %vm1143, %v2310, %v2312
        %v2318 = vsel %vm1143, %v2314, %v2316
        %v2323 = vmax.f32 %v2301, %v2317
        %v2324 = vmax.f32 %v2302, %v2312
        %v2325 = vmax.f32 %v2303, %v2318
        %v2326 = vmax.f32 %v2304, %v2316
        %v2327 = vpack.c.bf16 %v2324, %v2323
        %v2328 = vpack.c.bf16 %v2326, %v2325
        %v2329 = vunpack.c.l.bf16 %v2327
        %v2330 = vunpack.c.h.bf16 %v2327
        %v2331 = vunpack.c.l.bf16 %v2328
        %v2332 = vunpack.c.h.bf16 %v2328
        %2337 = vrot.lane.b32.xlu0 %v2329, 112
        %v2338 = vpop.permute.xlu0 %2337
        %2339 = vrot.lane.b32.xlu0 %v2330, 112
        %v2340 = vpop.permute.xlu0 %2339
        %2341 = vrot.lane.b32.xlu0 %v2331, 112
        %v2342 = vpop.permute.xlu0 %2341
        %2343 = vrot.lane.b32.xlu0 %v2332, 112
        %v2344 = vpop.permute.xlu0 %2343
        %vm2345 = vcmask 916480
        %v2346 = vsel %vm2345, %v2338, %v2340
        %v2347 = vsel %vm2345, %v2342, %v2344
        %v2352 = vmax.f32 %v2329, %v2346
        %v2353 = vmax.f32 %v2330, %v2340
        %v2354 = vmax.f32 %v2331, %v2347
        %v2355 = vmax.f32 %v2332, %v2344
        %v2356 = vpack.c.bf16 %v2354, %v2352
        %v2357 = vpack.c.bf16 %v2355, %v2353
        %v2358 = vld [vmem:[%s6] sm:$0xf]
        %v2359 = vld [vmem:[%s6 + $0x4] sm:$0xf]
        %v2360 = vld [vmem:[%s6 + $0x8] sm:$0xf]
        %v2361 = vld [vmem:[%s6 + $0xc] sm:$0xf]
        %v2362 = vld [vmem:[%s6 + $0x10] sm:$0xf]
        %v2363 = vld [vmem:[%s6 + $0x14] sm:$0xf]
        %v2364 = vld [vmem:[%s6 + $0x18] sm:$0xf]
        %v2365 = vld [vmem:[%s6 + $0x1c] sm:$0xf]
        %v2366 = vld [vmem:[%s6 + $0x20] sm:$0xf]
        %v2367 = vld [vmem:[%s6 + $0x24] sm:$0xf]
        %v2368 = vld [vmem:[%s6 + $0x28] sm:$0xf]
        %v2369 = vld [vmem:[%s6 + $0x2c] sm:$0xf]
        %v2370 = vld [vmem:[%s6 + $0x30] sm:$0xf]
        %v2371 = vld [vmem:[%s6 + $0x34] sm:$0xf]
        %v2372 = vld [vmem:[%s6 + $0x38] sm:$0xf]
        %v2373 = vld [vmem:[%s6 + $0x3c] sm:$0xf]
        %v2374 = vld [vmem:[%s6 + $0x40] sm:$0xf]
        %v2375 = vld [vmem:[%s6 + $0x44] sm:$0xf]
        %v2376 = vld [vmem:[%s6 + $0x48] sm:$0xf]
        %v2377 = vld [vmem:[%s6 + $0x4c] sm:$0xf]
        %v2378 = vld [vmem:[%s6 + $0x50] sm:$0xf]
        %v2379 = vld [vmem:[%s6 + $0x54] sm:$0xf]
        %v2380 = vld [vmem:[%s6 + $0x58] sm:$0xf]
        %v2381 = vld [vmem:[%s6 + $0x5c] sm:$0xf]
        %v2382 = vld [vmem:[%s6 + $0x60] sm:$0xf]
        %v2383 = vld [vmem:[%s6 + $0x64] sm:$0xf]
        %v2384 = vld [vmem:[%s6 + $0x68] sm:$0xf]
        %v2385 = vld [vmem:[%s6 + $0x6c] sm:$0x7]
        %v2414 = vunpack.c.l.b16 %v2358
        %v2415 = vunpack.c.l.b16 %v2359
        %v2416 = vunpack.c.l.b16 %v2360
        %v2417 = vunpack.c.l.b16 %v2361
        %v2418 = vunpack.c.l.b16 %v2362
        %v2419 = vunpack.c.l.b16 %v2363
        %v2420 = vunpack.c.l.b16 %v2364
        %v2421 = vunpack.c.l.b16 %v2365
        %v2422 = vunpack.c.l.b16 %v2366
        %v2423 = vunpack.c.l.b16 %v2367
        %v2424 = vunpack.c.l.b16 %v2368
        %v2425 = vunpack.c.l.b16 %v2369
        %v2426 = vunpack.c.l.b16 %v2370
        %v2427 = vunpack.c.l.b16 %v2371
        %v2428 = vunpack.c.l.b16 %v2372
        %v2429 = vunpack.c.l.b16 %v2373
        %v2430 = vunpack.c.l.b16 %v2374
        %v2431 = vunpack.c.l.b16 %v2375
        %v2432 = vunpack.c.l.b16 %v2376
        %v2433 = vunpack.c.l.b16 %v2377
        %v2434 = vunpack.c.l.b16 %v2378
        %v2435 = vunpack.c.l.b16 %v2379
        %v2436 = vunpack.c.l.b16 %v2380
        %v2437 = vunpack.c.l.b16 %v2381
        %v2438 = vunpack.c.l.b16 %v2382
        %v2439 = vunpack.c.l.b16 %v2383
        %v2440 = vunpack.c.l.b16 %v2384
        %v2441 = vunpack.c.l.b16 %v2385
        %v2442 = vpack.c.b16 %v2415, %v2414
        %v2443 = vpack.c.b16 %v2417, %v2416
        %v2444 = vpack.c.b16 %v2419, %v2418
        %v2445 = vpack.c.b16 %v2421, %v2420
        %v2446 = vpack.c.b16 %v2423, %v2422
        %v2447 = vpack.c.b16 %v2425, %v2424
        %v2448 = vpack.c.b16 %v2427, %v2426
        %v2449 = vpack.c.b16 %v2429, %v2428
        %v2450 = vpack.c.b16 %v2431, %v2430
        %v2451 = vpack.c.b16 %v2433, %v2432
        %v2452 = vpack.c.b16 %v2435, %v2434
        %v2453 = vpack.c.b16 %v2437, %v2436
        %v2454 = vpack.c.b16 %v2439, %v2438
        %v2455 = vpack.c.b16 %v2441, %v2440
        %vm2469 = vcmask 769024
        %v2471 = vsel %vm2469, %v2357, 0
        %vm2473 = vcmask 1046528
        %v2475 = vsel %vm2473, %v2455, 0
        %2477 = vmatpush.bf16.msra.mxu0 %v2449
        %2478 = vmatpush.bf16.msra.mxu0 %v2448
        %2479 = vmatpush.bf16.msra.mxu0 %v2447
        %2480 = vmatpush.bf16.msra.mxu0 %v2446
        %2481 = vmatpush.bf16.msra.mxu0 %v2445
        %2482 = vmatpush.bf16.msra.mxu0 %v2444
        %2483 = vmatpush.bf16.msra.mxu0 %v2443
        %2484 = vmatpush.bf16.msra.mxu0 %v2442
        %2485 = vmatmul.bf16.gmra.mxu0 %v2356
        %v2486 = vpop.f32.mrf.mxu0
        %v2487 = vadd.f32 0.0, %v2486
        %v2488 = vpop.f32.mrf.mxu0
        %v2489 = vadd.f32 0.0, %v2488
        %2490 = vdwg.mxu0
        %2491 = vmatpush.bf16.msra.mxu0 0
        %2492 = vmatpush.bf16.msra.mxu0 0
        %2493 = vmatpush.bf16.msra.mxu0 %v2475
        %2494 = vmatpush.bf16.msra.mxu0 %v2454
        %2495 = vmatpush.bf16.msra.mxu0 %v2453
        %2496 = vmatpush.bf16.msra.mxu0 %v2452
        %2497 = vmatpush.bf16.msra.mxu0 %v2451
        %2498 = vmatpush.bf16.msra.mxu0 %v2450
        %2499 = vmatmul.bf16.gmra.mxu0 %v2471
        %v2500 = vpop.f32.mrf.mxu0
        %v2501 = vadd.f32 %v2487, %v2500
        %v2502 = vpop.f32.mrf.mxu0
        %v2503 = vadd.f32 %v2489, %v2502
        %2504 = vdwg.mxu0
        %vm2505 = vcmask 400384
        %2506 = vst.msk [vmem:[#allocation7] sm:$0xff] %vm2505, %v2501
        %2507 = vst.msk [vmem:[#allocation7 + $0x8] sm:$0xff] %vm2505, %v2503
        %v2508 = vld [vmem:[#allocation7] sm:$0x1]
        %v2509 = vlaneseq
        %vm2510 = vcmp.ge.s32.totalorder %v2509, 0
        %vm2511 = vcmp.lt.s32.totalorder %v2509, 49
        %vm2512 = vmand %vm2510, %vm2511
        %2513 = vst.msk [vmem:[#allocation8] sm:$0x1] %vm2512, %v2508
        %v2514 = vld [vmem:[#allocation7 + $0x1] sm:$0x1]
        %2516 = vrot.lane.b32.xlu0 %v2514, 49
        %v2517 = vpop.permute.xlu0 %2516
        %vm2519 = vcmp.ge.s32.totalorder %v2509, 49
        %vm2520 = vcmp.lt.s32.totalorder %v2509, 98
        %vm2521 = vmand %vm2519, %vm2520
        %2522 = vst.msk [vmem:[#allocation8] sm:$0x1] %vm2521, %v2517
        %v2523 = vld [vmem:[#allocation7 + $0x2] sm:$0x1]
        %2525 = vrot.lane.b32.xlu0 %v2523, 98
        %v2526 = vpop.permute.xlu0 %2525
        %v2527 = vrot.slane %v2526, 7
        %v2528 = vsel %vm1196, %v2527, %v2526
        %vm2530 = vcmp.ge.s32.totalorder %v2509, 98
        %vm2531 = vcmp.lt.s32.totalorder %v2509, 147
        %vm2532 = vmand %vm2530, %vm2531
        %2533 = vst.msk [vmem:[#allocation8] sm:$0x3] %vm2532, %v2528
        %v2534 = vld [vmem:[#allocation7 + $0x3] sm:$0x1]
        %2536 = vrot.lane.b32.xlu0 %v2534, 19
        %v2537 = vpop.permute.xlu0 %2536
        %vm2539 = vcmp.ge.s32.totalorder %v2509, 19
        %vm2540 = vcmp.lt.s32.totalorder %v2509, 68
        %vm2541 = vmand %vm2539, %vm2540
        %2542 = vst.msk [vmem:[#allocation8 + $0x1] sm:$0x1] %vm2541, %v2537
        %v2543 = vld [vmem:[#allocation7 + $0x4] sm:$0x1]
        %2545 = vrot.lane.b32.xlu0 %v2543, 68
        %v2546 = vpop.permute.xlu0 %2545
        %vm2548 = vcmp.ge.s32.totalorder %v2509, 68
        %vm2549 = vcmp.lt.s32.totalorder %v2509, 117
        %vm2550 = vmand %vm2548, %vm2549
        %2551 = vst.msk [vmem:[#allocation8 + $0x1] sm:$0x1] %vm2550, %v2546
        %v2552 = vld [vmem:[#allocation7 + $0x5] sm:$0x1]
        %2554 = vrot.lane.b32.xlu0 %v2552, 117
        %v2555 = vpop.permute.xlu0 %2554
        %v2556 = vrot.slane %v2555, 7
        %vm2557 = vcmask 957440
        %v2558 = vsel %vm2557, %v2556, %v2555
        %vm2560 = vcmp.ge.s32.totalorder %v2509, 117
        %vm2561 = vcmp.lt.s32.totalorder %v2509, 166
        %vm2562 = vmand %vm2560, %vm2561
        %2563 = vst.msk [vmem:[#allocation8 + $0x1] sm:$0x3] %vm2562, %v2558
        %v2564 = vld [vmem:[#allocation7 + $0x6] sm:$0x1]
        %2566 = vrot.lane.b32.xlu0 %v2564, 38
        %v2567 = vpop.permute.xlu0 %2566
        %vm2569 = vcmp.ge.s32.totalorder %v2509, 38
        %vm2570 = vcmp.lt.s32.totalorder %v2509, 87
        %vm2571 = vmand %vm2569, %vm2570
        %2572 = vst.msk [vmem:[#allocation8 + $0x2] sm:$0x1] %vm2571, %v2567
        %v2573 = vld [vmem:[#allocation7 + $0x7] sm:$0x1]
        %2575 = vrot.lane.b32.xlu0 %v2573, 87
        %v2576 = vpop.permute.xlu0 %2575
        %v2577 = vrot.slane %v2576, 7
        %vm2578 = vcmask 711680
        %v2579 = vsel %vm2578, %v2577, %v2576
        %vm2581 = vcmp.ge.s32.totalorder %v2509, 87
        %vm2582 = vcmp.lt.s32.totalorder %v2509, 136
        %vm2583 = vmand %vm2581, %vm2582
        %2584 = vst.msk [vmem:[#allocation8 + $0x2] sm:$0x3] %vm2583, %v2579
        %v2585 = vld [vmem:[#allocation7 + $0x8] sm:$0x1]
        %2587 = vrot.lane.b32.xlu0 %v2585, 8
        %v2588 = vpop.permute.xlu0 %2587
        %vm2590 = vcmp.ge.s32.totalorder %v2509, 8
        %vm2591 = vcmp.lt.s32.totalorder %v2509, 57
        %vm2592 = vmand %vm2590, %vm2591
        %2593 = vst.msk [vmem:[#allocation8 + $0x3] sm:$0x1] %vm2592, %v2588
        %v2594 = vld [vmem:[#allocation7 + $0x9] sm:$0x1]
        %2596 = vrot.lane.b32.xlu0 %v2594, 57
        %v2597 = vpop.permute.xlu0 %2596
        %vm2599 = vcmp.ge.s32.totalorder %v2509, 57
        %vm2600 = vcmp.lt.s32.totalorder %v2509, 106
        %vm2601 = vmand %vm2599, %vm2600
        %2602 = vst.msk [vmem:[#allocation8 + $0x3] sm:$0x1] %vm2601, %v2597
        %v2603 = vld [vmem:[#allocation7 + $0xa] sm:$0x1]
        %2605 = vrot.lane.b32.xlu0 %v2603, 106
        %v2606 = vpop.permute.xlu0 %2605
        %v2607 = vrot.slane %v2606, 7
        %vm2608 = vcmask 867328
        %v2609 = vsel %vm2608, %v2607, %v2606
        %vm2611 = vcmp.ge.s32.totalorder %v2509, 106
        %vm2612 = vcmp.lt.s32.totalorder %v2509, 155
        %vm2613 = vmand %vm2611, %vm2612
        %2614 = vst.msk [vmem:[#allocation8 + $0x3] sm:$0x3] %vm2613, %v2609
        %v2615 = vld [vmem:[#allocation7 + $0xb] sm:$0x1]
        %2617 = vrot.lane.b32.xlu0 %v2615, 27
        %v2618 = vpop.permute.xlu0 %2617
        %vm2620 = vcmp.ge.s32.totalorder %v2509, 27
        %vm2621 = vcmp.lt.s32.totalorder %v2509, 76
        %vm2622 = vmand %vm2620, %vm2621
        %2623 = vst.msk [vmem:[#allocation8 + $0x4] sm:$0x1] %vm2622, %v2618
        %v2624 = vld [vmem:[#allocation7 + $0xc] sm:$0x1]
        %2626 = vrot.lane.b32.xlu0 %v2624, 76
        %v2627 = vpop.permute.xlu0 %2626
        %vm2629 = vcmp.ge.s32.totalorder %v2509, 76
        %vm2630 = vcmp.lt.s32.totalorder %v2509, 125
        %vm2631 = vmand %vm2629, %vm2630
        %2632 = vst.msk [vmem:[#allocation8 + $0x4] sm:$0x1] %vm2631, %v2627
        %v2633 = vld [vmem:[#allocation7 + $0xd] sm:$0x1]
        %2635 = vrot.lane.b32.xlu0 %v2633, 125
        %v2636 = vpop.permute.xlu0 %2635
        %v2637 = vrot.slane %v2636, 7
        %vm2638 = vcmask 1022976
        %v2639 = vsel %vm2638, %v2637, %v2636
        %vm2641 = vcmp.ge.s32.totalorder %v2509, 125
        %vm2642 = vcmp.lt.s32.totalorder %v2509, 174
        %vm2643 = vmand %vm2641, %vm2642
        %2644 = vst.msk [vmem:[#allocation8 + $0x4] sm:$0x3] %vm2643, %v2639
        %v2645 = vld [vmem:[#allocation7 + $0xe] sm:$0x1]
        %2647 = vrot.lane.b32.xlu0 %v2645, 46
        %v2648 = vpop.permute.xlu0 %2647
        %vm2650 = vcmp.ge.s32.totalorder %v2509, 46
        %vm2651 = vcmp.lt.s32.totalorder %v2509, 95
        %vm2652 = vmand %vm2650, %vm2651
        %2653 = vst.msk [vmem:[#allocation8 + $0x5] sm:$0x1] %vm2652, %v2648
        %v2654 = vld [vmem:[#allocation7 + $0xf] sm:$0x1]
        %2656 = vrot.lane.b32.xlu0 %v2654, 95
        %v2657 = vpop.permute.xlu0 %2656
        %v2658 = vrot.slane %v2657, 7
        %vm2659 = vcmask 777216
        %v2660 = vsel %vm2659, %v2658, %v2657
        %vm2662 = vcmp.ge.s32.totalorder %v2509, 95
        %vm2663 = vcmp.lt.s32.totalorder %v2509, 144
        %vm2664 = vmand %vm2662, %vm2663
        %2665 = vst.msk [vmem:[#allocation8 + $0x5] sm:$0x3] %vm2664, %v2660
        %v2666 = vld [vmem:[#allocation8] sm:$0x7f]
        %v2668 = vperm.slane %v2666, 0
        %v2669 = vperm.slane %v2666, 1
        %v2670 = vperm.slane %v2666, 2
        %v2671 = vperm.slane %v2666, 3
        %v2672 = vperm.slane %v2666, 4
        %v2673 = vperm.slane %v2666, 5
        %v2674 = vperm.slane %v2666, 6
        %v2682 = vpack.c.bf16 %v2668, %v2668
        %v2683 = vpack.c.bf16 %v2669, %v2669
        %v2684 = vpack.c.bf16 %v2670, %v2670
        %v2685 = vpack.c.bf16 %v2671, %v2671
        %v2686 = vpack.c.bf16 %v2672, %v2672
        %v2687 = vpack.c.bf16 %v2673, %v2673
        %v2688 = vpack.c.bf16 %v2674, %v2674
        %v2689 = vld [vmem:[%s7] sm:$0xf]
        %v2690 = vld [vmem:[%s7 + $0x4] sm:$0xf]
        %v2691 = vld [vmem:[%s7 + $0x8] sm:$0xf]
        %v2692 = vld [vmem:[%s7 + $0xc] sm:$0xf]
        %v2693 = vld [vmem:[%s7 + $0x10] sm:$0xf]
        %v2694 = vld [vmem:[%s7 + $0x14] sm:$0xf]
        %v2695 = vld [vmem:[%s7 + $0x18] sm:$0xf]
        %v2696 = vld [vmem:[%s7 + $0x1c] sm:$0xf]
        %v2697 = vld [vmem:[%s7 + $0x20] sm:$0xf]
        %v2698 = vld [vmem:[%s7 + $0x24] sm:$0xf]
        %v2699 = vld [vmem:[%s7 + $0x28] sm:$0xf]
        %v2700 = vld [vmem:[%s7 + $0x2c] sm:$0xf]
        %v2701 = vld [vmem:[%s7 + $0x30] sm:$0xf]
        %v2702 = vld [vmem:[%s7 + $0x34] sm:$0xf]
        %v2703 = vld [vmem:[%s7 + $0x38] sm:$0xf]
        %v2704 = vld [vmem:[%s7 + $0x3c] sm:$0xf]
        %v2705 = vld [vmem:[%s7 + $0x40] sm:$0xf]
        %v2706 = vld [vmem:[%s7 + $0x44] sm:$0xf]
        %v2707 = vld [vmem:[%s7 + $0x48] sm:$0xf]
        %v2708 = vld [vmem:[%s7 + $0x4c] sm:$0xf]
        %v2709 = vld [vmem:[%s7 + $0x50] sm:$0xf]
        %v2710 = vld [vmem:[%s7 + $0x54] sm:$0xf]
        %v2711 = vld [vmem:[%s7 + $0x58] sm:$0xf]
        %v2712 = vld [vmem:[%s7 + $0x5c] sm:$0xf]
        %v2713 = vld [vmem:[%s7 + $0x60] sm:$0xf]
        %v2714 = vld [vmem:[%s7 + $0x64] sm:$0xf]
        %v2715 = vld [vmem:[%s7 + $0x68] sm:$0xf]
        %v2716 = vld [vmem:[%s7 + $0x6c] sm:$0xf]
        %v2717 = vld [vmem:[%s7 + $0x70] sm:$0xf]
        %v2718 = vld [vmem:[%s7 + $0x74] sm:$0xf]
        %v2719 = vld [vmem:[%s7 + $0x78] sm:$0xf]
        %v2720 = vld [vmem:[%s7 + $0x7c] sm:$0xf]
        %v2721 = vld [vmem:[%s7 + $0x80] sm:$0xf]
        %v2722 = vld [vmem:[%s7 + $0x84] sm:$0xf]
        %v2723 = vld [vmem:[%s7 + $0x88] sm:$0xf]
        %v2724 = vld [vmem:[%s7 + $0x8c] sm:$0xf]
        %v2725 = vld [vmem:[%s7 + $0x90] sm:$0xf]
        %v2726 = vld [vmem:[%s7 + $0x94] sm:$0xf]
        %v2727 = vld [vmem:[%s7 + $0x98] sm:$0xf]
        %v2728 = vld [vmem:[%s7 + $0x9c] sm:$0xf]
        %v2729 = vld [vmem:[%s7 + $0xa0] sm:$0xf]
        %v2730 = vld [vmem:[%s7 + $0xa4] sm:$0xf]
        %v2731 = vld [vmem:[%s7 + $0xa8] sm:$0xf]
        %v2732 = vld [vmem:[%s7 + $0xac] sm:$0xf]
        %v2733 = vld [vmem:[%s7 + $0xb0] sm:$0xf]
        %v2734 = vld [vmem:[%s7 + $0xb4] sm:$0xf]
        %v2735 = vld [vmem:[%s7 + $0xb8] sm:$0xf]
        %v2736 = vld [vmem:[%s7 + $0xbc] sm:$0xf]
        %v2737 = vld [vmem:[%s7 + $0xc0] sm:$0xf]
        %v2738 = vld [vmem:[%s7 + $0xc4] sm:$0xf]
        %v2739 = vld [vmem:[%s7 + $0xc8] sm:$0xf]
        %v2740 = vld [vmem:[%s7 + $0xcc] sm:$0xf]
        %v2741 = vld [vmem:[%s7 + $0xd0] sm:$0xf]
        %v2742 = vld [vmem:[%s7 + $0xd4] sm:$0xf]
        %v2743 = vld [vmem:[%s7 + $0xd8] sm:$0xf]
        %v2744 = vld [vmem:[%s7 + $0xdc] sm:$0xf]
        %v2745 = vld [vmem:[%s7 + $0xe0] sm:$0xf]
        %v2746 = vld [vmem:[%s7 + $0xe4] sm:$0xf]
        %v2747 = vld [vmem:[%s7 + $0xe8] sm:$0xf]
        %v2748 = vld [vmem:[%s7 + $0xec] sm:$0xf]
        %v2749 = vld [vmem:[%s7 + $0xf0] sm:$0xf]
        %v2750 = vld [vmem:[%s7 + $0xf4] sm:$0xf]
        %v2751 = vld [vmem:[%s7 + $0xf8] sm:$0xf]
        %v2752 = vld [vmem:[%s7 + $0xfc] sm:$0xf]
        %v2753 = vld [vmem:[%s7 + $0x100] sm:$0xf]
        %v2754 = vld [vmem:[%s7 + $0x104] sm:$0xf]
        %v2755 = vld [vmem:[%s7 + $0x108] sm:$0xf]
        %v2756 = vld [vmem:[%s7 + $0x10c] sm:$0xf]
        %v2757 = vld [vmem:[%s7 + $0x110] sm:$0xf]
        %v2758 = vld [vmem:[%s7 + $0x114] sm:$0xf]
        %v2759 = vld [vmem:[%s7 + $0x118] sm:$0xf]
        %v2760 = vld [vmem:[%s7 + $0x11c] sm:$0xf]
        %v2761 = vld [vmem:[%s7 + $0x120] sm:$0xf]
        %v2762 = vld [vmem:[%s7 + $0x124] sm:$0xf]
        %v2763 = vld [vmem:[%s7 + $0x128] sm:$0xf]
        %v2764 = vld [vmem:[%s7 + $0x12c] sm:$0xf]
        %v2765 = vld [vmem:[%s7 + $0x130] sm:$0xf]
        %v2766 = vld [vmem:[%s7 + $0x134] sm:$0xf]
        %v2767 = vld [vmem:[%s7 + $0x138] sm:$0xf]
        %v2768 = vld [vmem:[%s7 + $0x13c] sm:$0xf]
        %v2769 = vld [vmem:[%s7 + $0x140] sm:$0xf]
        %v2770 = vld [vmem:[%s7 + $0x144] sm:$0xf]
        %v2771 = vld [vmem:[%s7 + $0x148] sm:$0xf]
        %v2772 = vld [vmem:[%s7 + $0x14c] sm:$0xf]
        %v2773 = vld [vmem:[%s7 + $0x150] sm:$0xf]
        %v2774 = vld [vmem:[%s7 + $0x154] sm:$0xf]
        %v2775 = vld [vmem:[%s7 + $0x158] sm:$0xf]
        %v2776 = vld [vmem:[%s7 + $0x15c] sm:$0xf]
        %v2777 = vld [vmem:[%s7 + $0x160] sm:$0xf]
        %v2778 = vld [vmem:[%s7 + $0x164] sm:$0xf]
        %v2779 = vld [vmem:[%s7 + $0x168] sm:$0xf]
        %v2780 = vld [vmem:[%s7 + $0x16c] sm:$0xf]
        %v2781 = vld [vmem:[%s7 + $0x170] sm:$0xf]
        %v2782 = vld [vmem:[%s7 + $0x174] sm:$0xf]
        %v2783 = vld [vmem:[%s7 + $0x178] sm:$0xf]
        %v2784 = vld [vmem:[%s7 + $0x17c] sm:$0xf]
        %v2785 = vld [vmem:[%s7 + $0x180] sm:$0xf]
        %v2786 = vld [vmem:[%s7 + $0x184] sm:$0xf]
        %v2787 = vld [vmem:[%s8] sm:$0x1]
        %v2886 = vunpack.c.l.b16 %v2689
        %v2887 = vunpack.c.l.b16 %v2690
        %v2888 = vunpack.c.l.b16 %v2691
        %v2889 = vunpack.c.l.b16 %v2692
        %v2890 = vunpack.c.l.b16 %v2693
        %v2891 = vunpack.c.l.b16 %v2694
        %v2892 = vunpack.c.l.b16 %v2695
        %v2893 = vunpack.c.l.b16 %v2696
        %v2894 = vunpack.c.l.b16 %v2697
        %v2895 = vunpack.c.l.b16 %v2698
        %v2896 = vunpack.c.l.b16 %v2699
        %v2897 = vunpack.c.l.b16 %v2700
        %v2898 = vunpack.c.l.b16 %v2701
        %v2899 = vunpack.c.l.b16 %v2702
        %v2900 = vunpack.c.l.b16 %v2703
        %v2901 = vunpack.c.l.b16 %v2704
        %v2902 = vunpack.c.l.b16 %v2705
        %v2903 = vunpack.c.l.b16 %v2706
        %v2904 = vunpack.c.l.b16 %v2707
        %v2905 = vunpack.c.l.b16 %v2708
        %v2906 = vunpack.c.l.b16 %v2709
        %v2907 = vunpack.c.l.b16 %v2710
        %v2908 = vunpack.c.l.b16 %v2711
        %v2909 = vunpack.c.l.b16 %v2712
        %v2910 = vunpack.c.l.b16 %v2713
        %v2911 = vunpack.c.l.b16 %v2714
        %v2912 = vunpack.c.l.b16 %v2715
        %v2913 = vunpack.c.l.b16 %v2716
        %v2914 = vunpack.c.l.b16 %v2717
        %v2915 = vunpack.c.l.b16 %v2718
        %v2916 = vunpack.c.l.b16 %v2719
        %v2917 = vunpack.c.l.b16 %v2720
        %v2918 = vunpack.c.l.b16 %v2721
        %v2919 = vunpack.c.l.b16 %v2722
        %v2920 = vunpack.c.l.b16 %v2723
        %v2921 = vunpack.c.l.b16 %v2724
        %v2922 = vunpack.c.l.b16 %v2725
        %v2923 = vunpack.c.l.b16 %v2726
        %v2924 = vunpack.c.l.b16 %v2727
        %v2925 = vunpack.c.l.b16 %v2728
        %v2926 = vunpack.c.l.b16 %v2729
        %v2927 = vunpack.c.l.b16 %v2730
        %v2928 = vunpack.c.l.b16 %v2731
        %v2929 = vunpack.c.l.b16 %v2732
        %v2930 = vunpack.c.l.b16 %v2733
        %v2931 = vunpack.c.l.b16 %v2734
        %v2932 = vunpack.c.l.b16 %v2735
        %v2933 = vunpack.c.l.b16 %v2736
        %v2934 = vunpack.c.l.b16 %v2737
        %v2935 = vunpack.c.l.b16 %v2738
        %v2936 = vunpack.c.l.b16 %v2739
        %v2937 = vunpack.c.l.b16 %v2740
        %v2938 = vunpack.c.l.b16 %v2741
        %v2939 = vunpack.c.l.b16 %v2742
        %v2940 = vunpack.c.l.b16 %v2743
        %v2941 = vunpack.c.l.b16 %v2744
        %v2942 = vunpack.c.l.b16 %v2745
        %v2943 = vunpack.c.l.b16 %v2746
        %v2944 = vunpack.c.l.b16 %v2747
        %v2945 = vunpack.c.l.b16 %v2748
        %v2946 = vunpack.c.l.b16 %v2749
        %v2947 = vunpack.c.l.b16 %v2750
        %v2948 = vunpack.c.l.b16 %v2751
        %v2949 = vunpack.c.l.b16 %v2752
        %v2950 = vunpack.c.l.b16 %v2753
        %v2951 = vunpack.c.l.b16 %v2754
        %v2952 = vunpack.c.l.b16 %v2755
        %v2953 = vunpack.c.l.b16 %v2756
        %v2954 = vunpack.c.l.b16 %v2757
        %v2955 = vunpack.c.l.b16 %v2758
        %v2956 = vunpack.c.l.b16 %v2759
        %v2957 = vunpack.c.l.b16 %v2760
        %v2958 = vunpack.c.l.b16 %v2761
        %v2959 = vunpack.c.l.b16 %v2762
        %v2960 = vunpack.c.l.b16 %v2763
        %v2961 = vunpack.c.l.b16 %v2764
        %v2962 = vunpack.c.l.b16 %v2765
        %v2963 = vunpack.c.l.b16 %v2766
        %v2964 = vunpack.c.l.b16 %v2767
        %v2965 = vunpack.c.l.b16 %v2768
        %v2966 = vunpack.c.l.b16 %v2769
        %v2967 = vunpack.c.l.b16 %v2770
        %v2968 = vunpack.c.l.b16 %v2771
        %v2969 = vunpack.c.l.b16 %v2772
        %v2970 = vunpack.c.l.b16 %v2773
        %v2971 = vunpack.c.l.b16 %v2774
        %v2972 = vunpack.c.l.b16 %v2775
        %v2973 = vunpack.c.l.b16 %v2776
        %v2974 = vunpack.c.l.b16 %v2777
        %v2975 = vunpack.c.l.b16 %v2778
        %v2976 = vunpack.c.l.b16 %v2779
        %v2977 = vunpack.c.l.b16 %v2780
        %v2978 = vunpack.c.l.b16 %v2781
        %v2979 = vunpack.c.l.b16 %v2782
        %v2980 = vunpack.c.l.b16 %v2783
        %v2981 = vunpack.c.l.b16 %v2784
        %v2982 = vunpack.c.l.b16 %v2785
        %v2983 = vunpack.c.l.b16 %v2786
        %v2984 = vpack.c.b16 %v2887, %v2886
        %v2985 = vpack.c.b16 %v2889, %v2888
        %v2986 = vpack.c.b16 %v2891, %v2890
        %v2987 = vpack.c.b16 %v2893, %v2892
        %v2988 = vpack.c.b16 %v2895, %v2894
        %v2989 = vpack.c.b16 %v2897, %v2896
        %v2990 = vpack.c.b16 %v2899, %v2898
        %v2991 = vpack.c.b16 %v2901, %v2900
        %v2992 = vpack.c.b16 %v2903, %v2902
        %v2993 = vpack.c.b16 %v2905, %v2904
        %v2994 = vpack.c.b16 %v2907, %v2906
        %v2995 = vpack.c.b16 %v2909, %v2908
        %v2996 = vpack.c.b16 %v2911, %v2910
        %v2997 = vpack.c.b16 %v2913, %v2912
        %v2998 = vpack.c.b16 %v2915, %v2914
        %v2999 = vpack.c.b16 %v2917, %v2916
        %v3000 = vpack.c.b16 %v2919, %v2918
        %v3001 = vpack.c.b16 %v2921, %v2920
        %v3002 = vpack.c.b16 %v2923, %v2922
        %v3003 = vpack.c.b16 %v2925, %v2924
        %v3004 = vpack.c.b16 %v2927, %v2926
        %v3005 = vpack.c.b16 %v2929, %v2928
        %v3006 = vpack.c.b16 %v2931, %v2930
        %v3007 = vpack.c.b16 %v2933, %v2932
        %v3008 = vpack.c.b16 %v2935, %v2934
        %v3009 = vpack.c.b16 %v2937, %v2936
        %v3010 = vpack.c.b16 %v2939, %v2938
        %v3011 = vpack.c.b16 %v2941, %v2940
        %v3012 = vpack.c.b16 %v2943, %v2942
        %v3013 = vpack.c.b16 %v2945, %v2944
        %v3014 = vpack.c.b16 %v2947, %v2946
        %v3015 = vpack.c.b16 %v2949, %v2948
        %v3016 = vpack.c.b16 %v2951, %v2950
        %v3017 = vpack.c.b16 %v2953, %v2952
        %v3018 = vpack.c.b16 %v2955, %v2954
        %v3019 = vpack.c.b16 %v2957, %v2956
        %v3020 = vpack.c.b16 %v2959, %v2958
        %v3021 = vpack.c.b16 %v2961, %v2960
        %v3022 = vpack.c.b16 %v2963, %v2962
        %v3023 = vpack.c.b16 %v2965, %v2964
        %v3024 = vpack.c.b16 %v2967, %v2966
        %v3025 = vpack.c.b16 %v2969, %v2968
        %v3026 = vpack.c.b16 %v2971, %v2970
        %v3027 = vpack.c.b16 %v2973, %v2972
        %v3028 = vpack.c.b16 %v2975, %v2974
        %v3029 = vpack.c.b16 %v2977, %v2976
        %v3030 = vpack.c.b16 %v2979, %v2978
        %v3031 = vpack.c.b16 %v2981, %v2980
        %v3032 = vpack.c.b16 %v2983, %v2982
        %vm3082 = vcmask 130048
        %v3084 = vsel %vm3082, %v2688, 0
        %3086 = vmatpush.bf16.msra.mxu0 %v2991
        %3087 = vmatpush.bf16.msra.mxu0 %v2990
        %3088 = vmatpush.bf16.msra.mxu0 %v2989
        %3089 = vmatpush.bf16.msra.mxu0 %v2988
        %3090 = vmatpush.bf16.msra.mxu0 %v2987
        %3091 = vmatpush.bf16.msra.mxu0 %v2986
        %3092 = vmatpush.bf16.msra.mxu0 %v2985
        %3093 = vmatpush.bf16.msra.mxu0 %v2984
        %3094 = vmatmul.bf16.gmra.mxu0 %v2682
        %v3095 = vpop.f32.mrf.mxu0
        %v3096 = vadd.f32 %v2787, %v3095
        %v3097 = vpop.f32.mrf.mxu0
        %3098 = vdwg.mxu0
        %3099 = vmatpush.bf16.msra.mxu0 %v2999
        %3100 = vmatpush.bf16.msra.mxu0 %v2998
        %3101 = vmatpush.bf16.msra.mxu0 %v2997
        %3102 = vmatpush.bf16.msra.mxu0 %v2996
        %3103 = vmatpush.bf16.msra.mxu0 %v2995
        %3104 = vmatpush.bf16.msra.mxu0 %v2994
        %3105 = vmatpush.bf16.msra.mxu0 %v2993
        %3106 = vmatpush.bf16.msra.mxu0 %v2992
        %3107 = vmatmul.bf16.gmra.mxu0 %v2683
        %v3108 = vpop.f32.mrf.mxu0
        %v3109 = vadd.f32 %v3096, %v3108
        %v3110 = vpop.f32.mrf.mxu0
        %3111 = vdwg.mxu0
        %3112 = vmatpush.bf16.msra.mxu0 %v3007
        %3113 = vmatpush.bf16.msra.mxu0 %v3006
        %3114 = vmatpush.bf16.msra.mxu0 %v3005
        %3115 = vmatpush.bf16.msra.mxu0 %v3004
        %3116 = vmatpush.bf16.msra.mxu0 %v3003
        %3117 = vmatpush.bf16.msra.mxu0 %v3002
        %3118 = vmatpush.bf16.msra.mxu0 %v3001
        %3119 = vmatpush.bf16.msra.mxu0 %v3000
        %3120 = vmatmul.bf16.gmra.mxu0 %v2684
        %v3121 = vpop.f32.mrf.mxu0
        %v3122 = vadd.f32 %v3109, %v3121
        %v3123 = vpop.f32.mrf.mxu0
        %3124 = vdwg.mxu0
        %3125 = vmatpush.bf16.msra.mxu0 %v3015
        %3126 = vmatpush.bf16.msra.mxu0 %v3014
        %3127 = vmatpush.bf16.msra.mxu0 %v3013
        %3128 = vmatpush.bf16.msra.mxu0 %v3012
        %3129 = vmatpush.bf16.msra.mxu0 %v3011
        %3130 = vmatpush.bf16.msra.mxu0 %v3010
        %3131 = vmatpush.bf16.msra.mxu0 %v3009
        %3132 = vmatpush.bf16.msra.mxu0 %v3008
        %3133 = vmatmul.bf16.gmra.mxu0 %v2685
        %v3134 = vpop.f32.mrf.mxu0
        %v3135 = vadd.f32 %v3122, %v3134
        %v3136 = vpop.f32.mrf.mxu0
        %3137 = vdwg.mxu0
        %3138 = vmatpush.bf16.msra.mxu0 %v3023
        %3139 = vmatpush.bf16.msra.mxu0 %v3022
        %3140 = vmatpush.bf16.msra.mxu0 %v3021
        %3141 = vmatpush.bf16.msra.mxu0 %v3020
        %3142 = vmatpush.bf16.msra.mxu0 %v3019
        %3143 = vmatpush.bf16.msra.mxu0 %v3018
        %3144 = vmatpush.bf16.msra.mxu0 %v3017
        %3145 = vmatpush.bf16.msra.mxu0 %v3016
        %3146 = vmatmul.bf16.gmra.mxu0 %v2686
        %v3147 = vpop.f32.mrf.mxu0
        %v3148 = vadd.f32 %v3135, %v3147
        %v3149 = vpop.f32.mrf.mxu0
        %3150 = vdwg.mxu0
        %3151 = vmatpush.bf16.msra.mxu0 %v3031
        %3152 = vmatpush.bf16.msra.mxu0 %v3030
        %3153 = vmatpush.bf16.msra.mxu0 %v3029
        %3154 = vmatpush.bf16.msra.mxu0 %v3028
        %3155 = vmatpush.bf16.msra.mxu0 %v3027
        %3156 = vmatpush.bf16.msra.mxu0 %v3026
        %3157 = vmatpush.bf16.msra.mxu0 %v3025
        %3158 = vmatpush.bf16.msra.mxu0 %v3024
        %3159 = vmatmul.bf16.gmra.mxu0 %v2687
        %v3160 = vpop.f32.mrf.mxu0
        %v3161 = vadd.f32 %v3148, %v3160
        %v3162 = vpop.f32.mrf.mxu0
        %3163 = vdwg.mxu0
        %3164 = vmatpush.bf16.msra.mxu0 0
        %3165 = vmatpush.bf16.msra.mxu0 0
        %3166 = vmatpush.bf16.msra.mxu0 0
        %3167 = vmatpush.bf16.msra.mxu0 0
        %3168 = vmatpush.bf16.msra.mxu0 0
        %3169 = vmatpush.bf16.msra.mxu0 0
        %3170 = vmatpush.bf16.msra.mxu0 0
        %3171 = vmatpush.bf16.msra.mxu0 %v3032
        %3172 = vmatmul.bf16.gmra.mxu0 %v3084
        %v3173 = vpop.f32.mrf.mxu0
        %v3174 = vadd.f32 %v3161, %v3173
        %v3175 = vpop.f32.mrf.mxu0
        %3176 = vdwg.mxu0
        %v3177 = vmax.f32 %v3174, 0.0
        %v3178 = vpack.c.bf16 %v3177, %v3177
        %v3179 = vld [vmem:[%s9] sm:$0xf]
        %v3180 = vld [vmem:[%s9 + $0x4] sm:$0xf]
        %v3181 = vld [vmem:[%s9 + $0x8] sm:$0xf]
        %v3182 = vld [vmem:[%s9 + $0xc] sm:$0xf]
        %v3183 = vld [vmem:[%s9 + $0x10] sm:$0xf]
        %v3184 = vld [vmem:[%s9 + $0x14] sm:$0xf]
        %v3185 = vld [vmem:[%s9 + $0x18] sm:$0xf]
        %v3186 = vld [vmem:[%s9 + $0x1c] sm:$0xf]
        %v3187 = vld [vmem:[%s10] sm:$0x1]
        %v3196 = vunpack.c.l.b16 %v3179
        %v3197 = vunpack.c.l.b16 %v3180
        %v3198 = vunpack.c.l.b16 %v3181
        %v3199 = vunpack.c.l.b16 %v3182
        %v3200 = vunpack.c.l.b16 %v3183
        %v3201 = vunpack.c.l.b16 %v3184
        %v3202 = vunpack.c.l.b16 %v3185
        %v3203 = vunpack.c.l.b16 %v3186
        %v3204 = vpack.c.b16 %v3197, %v3196
        %v3205 = vpack.c.b16 %v3199, %v3198
        %v3206 = vpack.c.b16 %v3201, %v3200
        %v3207 = vpack.c.b16 %v3203, %v3202
        %vm3212 = vcmask 523264
        %v3214 = vsel %vm3212, %v3178, 0
        %3216 = vmatpush.bf16.msra.mxu0 0
        %3217 = vmatpush.bf16.msra.mxu0 0
        %3218 = vmatpush.bf16.msra.mxu0 0
        %3219 = vmatpush.bf16.msra.mxu0 0
        %3220 = vmatpush.bf16.msra.mxu0 %v3207
        %3221 = vmatpush.bf16.msra.mxu0 %v3206
        %3222 = vmatpush.bf16.msra.mxu0 %v3205
        %3223 = vmatpush.bf16.msra.mxu0 %v3204
        %3224 = vmatmul.bf16.gmra.mxu0 %v3214
        %v3225 = vpop.f32.mrf.mxu0
        %v3226 = vadd.f32 %v3187, %v3225
        %v3227 = vpop.f32.mrf.mxu0
        %3228 = vdwg.mxu0
        %v3229 = vmax.f32 %v3226, 0.0
        %v3230 = vpack.c.bf16 %v3229, %v3229
        %v3231 = vld [vmem:[%s11] sm:$0xf]
        %v3232 = vld [vmem:[%s11 + $0x4] sm:$0xf]
        %v3233 = vld [vmem:[%s11 + $0x8] sm:$0xf]
        %v3234 = vld [vmem:[%s11 + $0xc] sm:$0xf]
        %v3235 = vld [vmem:[%s11 + $0x10] sm:$0xf]
        %v3236 = vld [vmem:[%s11 + $0x14] sm:$0xf]
        %v3237 = vld [vmem:[%s11 + $0x18] sm:$0xf]
        %v3238 = vld [vmem:[%s11 + $0x1c] sm:$0xf]
        %v3239 = vld [vmem:[%s12] sm:$0x1]
        %v3248 = vunpack.c.l.b16 %v3231
        %v3249 = vunpack.c.l.b16 %v3232
        %v3250 = vunpack.c.l.b16 %v3233
        %v3251 = vunpack.c.l.b16 %v3234
        %v3252 = vunpack.c.l.b16 %v3235
        %v3253 = vunpack.c.l.b16 %v3236
        %v3254 = vunpack.c.l.b16 %v3237
        %v3255 = vunpack.c.l.b16 %v3238
        %v3256 = vpack.c.b16 %v3249, %v3248
        %v3257 = vpack.c.b16 %v3251, %v3250
        %v3258 = vpack.c.b16 %v3253, %v3252
        %v3259 = vpack.c.b16 %v3255, %v3254
        %v3265 = vsel %vm3212, %v3230, 0
        %3267 = vmatpush.bf16.msra.mxu0 0
        %3268 = vmatpush.bf16.msra.mxu0 0
        %3269 = vmatpush.bf16.msra.mxu0 0
        %3270 = vmatpush.bf16.msra.mxu0 0
        %3271 = vmatpush.bf16.msra.mxu0 %v3259
        %3272 = vmatpush.bf16.msra.mxu0 %v3258
        %3273 = vmatpush.bf16.msra.mxu0 %v3257
        %3274 = vmatpush.bf16.msra.mxu0 %v3256
        %3275 = vmatmul.bf16.gmra.mxu0 %v3265
        %v3276 = vpop.f32.mrf.mxu0
        %v3277 = vadd.f32 %v3239, %v3276
        %v3278 = vpop.f32.mrf.mxu0
        %3279 = vdwg.mxu0
        %v3280 = vpack.c.bf16 %v3277, %v3277
        %vm3281 = vcmask 1040384
        %vm3282 = vsmask.f32 256
        %vm3283 = vmand %vm3281, %vm3282
        %v3284 = vld [vmem:[%s453] sm:$0x1]
        %v3285 = vsel %vm3283, %v3280, %v3284
        %3286 = vst [vmem:[%s453] sm:$0x1] %v3285
        %p3287 = scmp.lt.s32.totalorder %s25, 1
        %s3288 = scalar_select %p3287, %s25, 1
        %s3289 = scalar_lea.vmem %s13, %s3288
        // Predicated region
        $region77: #{_lambda_.1} parent=71 // pred_check
          %p3290 = pneg %p321
        $region78: #{_lambda_.1} parent=71 // pred_check_branch
          %3292 = sbr.rel (%p3290) target = $region80
        $region79: #{_lambda_.1} parent=71 // pred_region
          _
        $region80: #{_lambda_.1} parent=71 // pred_fallthru
          _
      $region72: #{_lambda_.1} parent=5 // pred_fallthru
        _
      %p3293 = scmp.le.s32.totalorder 2, %s20
      // Predicated region
      $region81: #{_lambda_.1} parent=5 // pred_check
        %p3294 = pneg %p3293
      $region82: #{_lambda_.1} parent=5 // pred_check_branch
        %3296 = sbr.rel (%p3294) target = $region84
      $region83: #{_lambda_.1} parent=5 // pred_region
        %s3297 = ssub.s32 %s20, 2
        // Predicated region
        $region85: #{_lambda_.1} parent=83 // pred_check
          %p3298 = pneg %p327
        $region86: #{_lambda_.1} parent=83 // pred_check_branch
          %3300 = sbr.rel (%p3298) target = $region88
        $region87: #{_lambda_.1} parent=83 // pred_region
          %p3301 = scmp.lt.s32.totalorder %s26, 1
          %s3302 = scalar_select %p3301, %s26, 1
          %s3303 = scalar_lea.vmem %s13, %s3302
        $region88: #{_lambda_.1} parent=83 // pred_fallthru
          _
      $region84: #{_lambda_.1} parent=5 // pred_fallthru
        _
    $region6: #{_lambda_.1} parent=1 // loop_footer
      %s24 = sadd.s32 1, %s20
    $region7: #{_lambda_.1} parent=1 // loop_footer_branch
      %19 = sbr.rel target = $region3
    $region8: #{_lambda_.1} parent=1 // loop_exit
      _
    %3304 = vsyncpa [#allocation10], 1
    %s3305 = scalar_lea.sflag [#allocation10], 1
    %3306 = vsyncpa %s3305, 1

</llo_original>
